<compile_context>
chip_gen: v6e
topology: v6e:2x2x1
jax: 0.10.0
libtpu: 0.0.40
codegen_flags: <defaults>
</compile_context>

<pallas_src>
import jax
import jax.numpy as jnp
from jax import lax
from jax.experimental import pallas as pl
from jax.experimental.pallas import tpu as pltpu

LN_EPS = 1e-5

# dot_general dimension_numbers for A @ B^T (contract lhs axis 1 with rhs axis 1)
# -- feeds the MXU without an XLU transpose.
_DN_NT = (((1,), (1,)), ((), ()))


def _layer_norm(x, gamma, beta):
    """PyTorch nn.LayerNorm over the last dim (biased variance, eps=1e-5), f32."""
    mu = jnp.mean(x, axis=-1, keepdims=True)
    xc = x - mu
    var = jnp.mean(xc * xc, axis=-1, keepdims=True)
    return xc * lax.rsqrt(var + LN_EPS) * gamma + beta


def _make_decoder_kernel(nhead, has_mask):
    f32 = jnp.float32
    bf16 = jnp.bfloat16

    def kernel(*refs):
        q_ref, k_ref = refs[0], refs[1]
        idx = 2
        if has_mask:
            mask_ref = refs[idx]
            idx += 1
        else:
            mask_ref = None
        (sa_wq, sa_wk, sa_wv, sa_bq, sa_bk, sa_bv, sa_ow, sa_ob, ln1g, ln1b,
         ca_wq, ca_wkT, ca_wvT, ca_bq, ca_bkc, ca_bvc, ca_ow, ca_ob, ln2g, ln2b,
         w1, b1, w2, b2, ln3g, ln3b) = refs[idx:idx + 26]
        out_ref = refs[idx + 26]
        x_sc, q_sc, m_sc, l_sc, acc_sc = refs[idx + 27:]

        E = q_ref.shape[-1]
        Dh = E // nhead
        scaling = float(Dh) ** -0.5

        kt = pl.program_id(1)
        n_kt = pl.num_programs(1)

        # -------- prologue (once per batch element, at kt == 0) --------
        # self-attention + residual + LayerNorm1, cross-attn Q projection
        # (hoisted out of the Pk-tile loop), online-softmax state init.
        @pl.when(kt == 0)
        def _prologue():
            xq = q_ref[0]                                          # (Pq, E) f32
            xq_b = xq.astype(bf16)
            q = (jnp.dot(xq_b, sa_wq[...], preferred_element_type=f32)
                 + sa_bq[...]) * scaling
            k = jnp.dot(xq_b, sa_wk[...], preferred_element_type=f32) + sa_bk[...]
            v = jnp.dot(xq_b, sa_wv[...], preferred_element_type=f32) + sa_bv[...]
            heads = []
            for h in range(nhead):
                lo, hi = h * Dh, (h + 1) * Dh
                s = lax.dot_general(q[:, lo:hi].astype(bf16),
                                    k[:, lo:hi].astype(bf16), _DN_NT,
                                    preferred_element_type=f32)     # (Pq, Pq)
                s = s - jnp.max(s, axis=-1, keepdims=True)
                p = jnp.exp(s)
                p = p * pl.reciprocal(jnp.sum(p, axis=-1, keepdims=True),
                                      approx=True)
                heads.append(jnp.dot(p.astype(bf16), v[:, lo:hi].astype(bf16),
                                     preferred_element_type=f32))   # (Pq, Dh)
            o = jnp.concatenate(heads, axis=-1)                      # (Pq, E)
            sa = jnp.dot(o.astype(bf16), sa_ow[...],
                         preferred_element_type=f32) + sa_ob[...]
            x = _layer_norm(xq + sa, ln1g[...], ln1b[...])           # (Pq, E) f32
            x_sc[...] = x
            q_sc[...] = (jnp.dot(x.astype(bf16), ca_wq[...],
                                 preferred_element_type=f32)
                         + ca_bq[...]) * scaling
            m_sc[...] = jnp.full(m_sc.shape, -jnp.inf, f32)
            l_sc[...] = jnp.zeros(l_sc.shape, f32)
            acc_sc[...] = jnp.zeros(acc_sc.shape, f32)

        # -------- cross-attention over the current key tile (every kt) --------
        # K^T / V^T come straight from the channel-major (E, tk) key tile via
        # pre-transposed (out,in) weights: no in-kernel key transpose.
        k_chan = k_ref[0]                                            # (E, tk) bf16
        kT = jnp.dot(ca_wkT[...], k_chan, preferred_element_type=f32) + ca_bkc[...]
        vT = jnp.dot(ca_wvT[...], k_chan, preferred_element_type=f32) + ca_bvc[...]
        q2 = q_sc[...]                                               # (Pq, E) f32
        mask = mask_ref[...] if has_mask else None                   # (Pq, tk)

        for h in range(nhead):
            lo, hi = h * Dh, (h + 1) * Dh
            s = jnp.dot(q2[:, lo:hi].astype(bf16), kT[lo:hi, :].astype(bf16),
                        preferred_element_type=f32)                  # (Pq, tk)
            if has_mask:
                s = s + mask
            m_prev = m_sc[h]                                         # (Pq, 1)
            m_new = jnp.maximum(m_prev, jnp.max(s, axis=-1, keepdims=True))
            alpha = jnp.exp(m_prev - m_new)
            p = jnp.exp(s - m_new)
            l_sc[h] = alpha * l_sc[h] + jnp.sum(p, axis=-1, keepdims=True)
            acc_sc[h] = alpha * acc_sc[h] + lax.dot_general(
                p.astype(bf16), vT[lo:hi, :].astype(bf16), _DN_NT,
                preferred_element_type=f32)                          # (Pq, Dh)
            m_sc[h] = m_new

        # -------- epilogue (last key tile): out-proj + LN2 + FFN + LN3 --------
        @pl.when(kt == n_kt - 1)
        def _epilogue():
            heads = []
            for h in range(nhead):
                inv_l = pl.reciprocal(l_sc[h], approx=True)          # (Pq, 1) EUP
                heads.append(acc_sc[h] * inv_l)
            o = jnp.concatenate(heads, axis=-1)                       # (Pq, E)
            ca = jnp.dot(o.astype(bf16), ca_ow[...],
                         preferred_element_type=f32) + ca_ob[...]
            x = _layer_norm(x_sc[...] + ca, ln2g[...], ln2b[...])
            hid = jnp.maximum(jnp.dot(x.astype(bf16), w1[...],
                                      preferred_element_type=f32) + b1[...], 0.0)
            ff = jnp.dot(hid.astype(bf16), w2[...],
                         preferred_element_type=f32) + b2[...]
            x = _layer_norm(x + ff, ln3g[...], ln3b[...])
            out_ref[0] = x.astype(out_ref.dtype)                      # (Pq, E)

    return kernel


def transformer_decoder_layer(query, key, params, *, nhead,
                              attn_mask=None, query_pos=None, key_pos=None):
    """query: (B, E, Pq) f32; key: (B, E, Pk) f32.  Returns (B, E, Pq) f32."""
    # TODO(synk): self_posembed / cross_posembed default to None in the module,
    # so query_pos / key_pos are accepted but unused.
    del query_pos, key_pos
    B, E, Pq = query.shape
    Pk = key.shape[2]
    Dh = E // nhead
    assert Dh * nhead == E, "d_model must be divisible by nhead"
    has_mask = attn_mask is not None
    f32, bf16 = jnp.float32, jnp.bfloat16

    # Layout plumbing only: token-major query (E lane-dense in kernel), bf16 key.
    q_tok = jnp.transpose(query, (0, 2, 1)).astype(f32)              # (B, Pq, E)
    key_bf = key.astype(bf16)                                        # (B, E, Pk)

    # Pk tile for the online-softmax axis: lane-dense multiples of 128 when the
    # key map is large, otherwise a single whole-Pk tile.
    if Pk <= 2048:
        tk = Pk
    else:
        tk = next((t for t in (2048, 1024, 512, 256, 128) if Pk % t == 0), Pk)
    n_kt = Pk // tk

    p = params

    def col(b):  # (1, E) bias -> (E, 1) column for the channel-major K/V tiles
        return jnp.reshape(b.astype(f32), (-1, 1))

    param_list = [
        p["sa_wq"].astype(bf16), p["sa_wk"].astype(bf16), p["sa_wv"].astype(bf16),
        p["sa_bq"].astype(f32), p["sa_bk"].astype(f32), p["sa_bv"].astype(f32),
        p["sa_out_w"].astype(bf16), p["sa_out_b"].astype(f32),
        p["ln1_g"].astype(f32), p["ln1_b"].astype(f32),
        p["ca_wq"].astype(bf16),
        jnp.transpose(p["ca_wk"]).astype(bf16),    # (out,in): K^T = W @ X^T
        jnp.transpose(p["ca_wv"]).astype(bf16),    # (out,in): V^T = W @ X^T
        p["ca_bq"].astype(f32), col(p["ca_bk"]), col(p["ca_bv"]),
        p["ca_out_w"].astype(bf16), p["ca_out_b"].astype(f32),
        p["ln2_g"].astype(f32), p["ln2_b"].astype(f32),
        p["w1"].astype(bf16), p["b1"].astype(f32),
        p["w2"].astype(bf16), p["b2"].astype(f32),
        p["ln3_g"].astype(f32), p["ln3_b"].astype(f32),
    ]

    inputs = [q_tok, key_bf]
    in_specs = [
        pl.BlockSpec((1, Pq, E), lambda b, kt: (b, 0, 0)),           # query
        pl.BlockSpec((1, E, tk), lambda b, kt: (b, 0, kt)),          # key tile
    ]
    if has_mask:
        inputs.append(attn_mask.astype(f32))
        in_specs.append(pl.BlockSpec((Pq, tk), lambda b, kt: (0, kt)))
    inputs += param_list
    # Parameters: constant block index -> DMA'd once, resident across the grid.
    in_specs += [pl.BlockSpec(w.shape, lambda b, kt: (0, 0)) for w in param_list]

    # VMEM limit: generous on 128-MiB parts (v5e/v6e), capped for v7x's 64 MiB.
    vmem_cap = 128 * 1024 * 1024
    try:
        vmem_cap = int(getattr(pltpu.get_tpu_info(), "vmem_capacity_bytes",
                               vmem_cap))
    except Exception:
        pass
    vmem_limit = int(min(max(vmem_cap // 2, 32 * 1024 * 1024), 100 * 1024 * 1024))

    out_tok = pl.pallas_call(
        _make_decoder_kernel(nhead, has_mask),
        out_shape=jax.ShapeDtypeStruct((B, Pq, E), jnp.float32),     # token-major
        grid=(B, n_kt),
        in_specs=in_specs,
        out_specs=pl.BlockSpec((1, Pq, E), lambda b, kt: (b, 0, 0)),
        scratch_shapes=[
            pltpu.VMEM((Pq, E), jnp.float32),          # x after self-attn + LN1
            pltpu.VMEM((Pq, E), jnp.float32),          # cross-attn Q projection
            pltpu.VMEM((nhead, Pq, 1), jnp.float32),   # running max   (per head)
            pltpu.VMEM((nhead, Pq, 1), jnp.float32),   # running denom (per head)
            pltpu.VMEM((nhead, Pq, Dh), jnp.float32),  # per-head output accum
        ],
        compiler_params=pltpu.CompilerParams(
            dimension_semantics=("parallel", "arbitrary"),
            vmem_limit_bytes=vmem_limit,
        ),
    )(*inputs)

    # Back to the PyTorch (B, C, Pq) contract with a single XLA transpose.
    return jnp.transpose(out_tok, (0, 2, 1))


def init_params(key, d_model, nhead, dim_feedforward):
    """Deterministic synthetic params.  Attention / linear weights are stored in
    (in, out) matmul form (transpose of the PyTorch nn.Linear layout)."""
    E, F = d_model, dim_feedforward
    ks = jax.random.split(key, 20)

    def w(k, shape, scale=0.1):
        return jax.random.normal(k, shape, jnp.float32) * scale

    ones = jnp.ones((1, E), jnp.float32)
    zeros = jnp.zeros((1, E), jnp.float32)
    return {
        "sa_wq": w(ks[0], (E, E)), "sa_wk": w(ks[1], (E, E)), "sa_wv": w(ks[2], (E, E)),
        "sa_bq": w(ks[3], (1, E), 0.05), "sa_bk": w(ks[4], (1, E), 0.05),
        "sa_bv": w(ks[5], (1, E), 0.05),
        "sa_out_w": w(ks[6], (E, E)), "sa_out_b": w(ks[7], (1, E), 0.05),
        "ln1_g": ones, "ln1_b": zeros,
        "ca_wq": w(ks[8], (E, E)), "ca_wk": w(ks[9], (E, E)), "ca_wv": w(ks[10], (E, E)),
        "ca_bq": w(ks[11], (1, E), 0.05), "ca_bk": w(ks[12], (1, E), 0.05),
        "ca_bv": w(ks[13], (1, E), 0.05),
        "ca_out_w": w(ks[14], (E, E)), "ca_out_b": w(ks[15], (1, E), 0.05),
        "ln2_g": ones, "ln2_b": zeros,
        "w1": w(ks[16], (E, F)), "b1": w(ks[17], (1, F), 0.05),
        "w2": w(ks[18], (F, E)), "b2": w(ks[19], (1, E), 0.05),
        "ln3_g": ones, "ln3_b": zeros,
    }


def _reference(query, key, params, nhead, attn_mask=None):
    """Pure-JAX f32 reference of the PyTorch forward (eval-mode dropout)."""
    B, E, _ = query.shape
    Dh = E // nhead
    scaling = float(Dh) ** -0.5
    xq = jnp.transpose(query, (0, 2, 1))   # (B, Pq, E)
    xk = jnp.transpose(key, (0, 2, 1))     # (B, Pk, E)
    p = params

    def mha(x_q, x_kv, wq, bq, wk, bk, wv, bv, ow, ob, mask):
        q = (x_q @ wq + bq) * scaling
        k = x_kv @ wk + bk
        v = x_kv @ wv + bv
        q = q.reshape(B, -1, nhead, Dh)
        k = k.reshape(B, -1, nhead, Dh)
        v = v.reshape(B, -1, nhead, Dh)
        s = jnp.einsum("bqhd,bkhd->bhqk", q, k)
        if mask is not None:
            s = s + mask[None, None]
        pw = jax.nn.softmax(s, axis=-1)
        o = jnp.einsum("bhqk,bkhd->bqhd", pw, v).reshape(B, -1, E)
        return o @ ow + ob

    def ln(x, g, b):
        mu = x.mean(-1, keepdims=True)
        var = ((x - mu) ** 2).mean(-1, keepdims=True)
        return (x - mu) / jnp.sqrt(var + LN_EPS) * g + b

    x = xq
    x = ln(x + mha(x, x, p["sa_wq"], p["sa_bq"], p["sa_wk"], p["sa_bk"],
                   p["sa_wv"], p["sa_bv"], p["sa_out_w"], p["sa_out_b"], None),
           p["ln1_g"], p["ln1_b"])
    x = ln(x + mha(x, xk, p["ca_wq"], p["ca_bq"], p["ca_wk"], p["ca_bk"],
                   p["ca_wv"], p["ca_bv"], p["ca_out_w"], p["ca_out_b"], attn_mask),
           p["ln2_g"], p["ln2_b"])
    hid = jnp.maximum(x @ p["w1"] + p["b1"], 0.0)
    x = ln(x + hid @ p["w2"] + p["b2"], p["ln3_g"], p["ln3_b"])
    return jnp.transpose(x, (0, 2, 1))


if __name__ == "__main__":
    # Small shapes consistent with the module: B=2, d_model=32, nhead=4,
    # Pq=8 query tokens, Pk=16 key tokens, dim_feedforward=64.
    B, d_model, nhead, Pq, Pk, dff = 2, 32, 4, 8, 16, 64

    key0 = jax.random.PRNGKey(0)
    kq, kk, km, kp = jax.random.split(key0, 4)
    query = jax.random.normal(kq, (B, d_model, Pq), jnp.float32)
    key_t = jax.random.normal(kk, (B, d_model, Pk), jnp.float32)
    attn_mask = 0.1 * jax.random.normal(km, (Pq, Pk), jnp.float32)
    params = init_params(kp, d_model, nhead, dff)

    # Tolerances account for bf16 MXU operands (f32 accumulation) vs f32 reference.
    ATOL = RTOL = 3e-2

    # Masked cross-attention path.
    out = transformer_decoder_layer(query, key_t, params, nhead=nhead,
                                    attn_mask=attn_mask)
    out = jax.block_until_ready(out)
    ref = _reference(query, key_t, params, nhead, attn_mask=attn_mask)
    assert out.shape == (B, d_model, Pq), out.shape
    err = float(jnp.max(jnp.abs(out - ref)))
    assert jnp.allclose(out, ref, atol=ATOL, rtol=RTOL), f"masked mismatch: {err}"

    # Specialized no-mask kernel variant.
    out_nm = transformer_decoder_layer(query, key_t, params, nhead=nhead,
                                       attn_mask=None)
    out_nm = jax.block_until_ready(out_nm)
    ref_nm = _reference(query, key_t, params, nhead, attn_mask=None)
    err_nm = float(jnp.max(jnp.abs(out_nm - ref_nm)))
    assert jnp.allclose(out_nm, ref_nm, atol=ATOL, rtol=RTOL), \
        f"no-mask mismatch: {err_nm}"

    print("KERNEL_OK")
</pallas_src>

<mosaic_0001>
module attributes {stable_mosaic.version = 11 : i64} {
  func.func @kernel(%arg0: i32, %arg1: i32, %arg2: memref<1x8x32xf32, #tpu.memory_space<vmem>>, %arg3: memref<1x32x16xbf16, #tpu.memory_space<vmem>>, %arg4: memref<8x16xf32, #tpu.memory_space<vmem>>, %arg5: memref<32x32xbf16, #tpu.memory_space<vmem>>, %arg6: memref<32x32xbf16, #tpu.memory_space<vmem>>, %arg7: memref<32x32xbf16, #tpu.memory_space<vmem>>, %arg8: memref<1x32xf32, #tpu.memory_space<vmem>>, %arg9: memref<1x32xf32, #tpu.memory_space<vmem>>, %arg10: memref<1x32xf32, #tpu.memory_space<vmem>>, %arg11: memref<32x32xbf16, #tpu.memory_space<vmem>>, %arg12: memref<1x32xf32, #tpu.memory_space<vmem>>, %arg13: memref<1x32xf32, #tpu.memory_space<vmem>>, %arg14: memref<1x32xf32, #tpu.memory_space<vmem>>, %arg15: memref<32x32xbf16, #tpu.memory_space<vmem>>, %arg16: memref<32x32xbf16, #tpu.memory_space<vmem>>, %arg17: memref<32x32xbf16, #tpu.memory_space<vmem>>, %arg18: memref<1x32xf32, #tpu.memory_space<vmem>>, %arg19: memref<32x1xf32, #tpu.memory_space<vmem>>, %arg20: memref<32x1xf32, #tpu.memory_space<vmem>>, %arg21: memref<32x32xbf16, #tpu.memory_space<vmem>>, %arg22: memref<1x32xf32, #tpu.memory_space<vmem>>, %arg23: memref<1x32xf32, #tpu.memory_space<vmem>>, %arg24: memref<1x32xf32, #tpu.memory_space<vmem>>, %arg25: memref<32x64xbf16, #tpu.memory_space<vmem>>, %arg26: memref<1x64xf32, #tpu.memory_space<vmem>>, %arg27: memref<64x32xbf16, #tpu.memory_space<vmem>>, %arg28: memref<1x32xf32, #tpu.memory_space<vmem>>, %arg29: memref<1x32xf32, #tpu.memory_space<vmem>>, %arg30: memref<1x32xf32, #tpu.memory_space<vmem>>, %arg31: memref<1x8x32xf32, #tpu.memory_space<vmem>>, %arg32: memref<8x32xf32, #tpu.memory_space<vmem>>, %arg33: memref<8x32xf32, #tpu.memory_space<vmem>>, %arg34: memref<4x8x1xf32, #tpu.memory_space<vmem>>, %arg35: memref<4x8x1xf32, #tpu.memory_space<vmem>>, %arg36: memref<4x8x8xf32, #tpu.memory_space<vmem>>) attributes {dimension_semantics = [#tpu.dimension_semantics<parallel>, #tpu.dimension_semantics<arbitrary>], iteration_bounds = array<i64: 2, 1>, scalar_prefetch = 0 : i64, scratch_operands = 5 : i64, tpu.core_type = #tpu.core_type<tc>, window_params = [{transform_indices = @transform_0, window_bounds = array<i64: 1, 8, 32>}, {transform_indices = @transform_1, window_bounds = array<i64: 1, 32, 16>}, {transform_indices = @transform_2, window_bounds = array<i64: 8, 16>}, {pipeline_mode = #tpu.pipeline_mode<synchronous>, transform_indices = @transform_3, window_bounds = array<i64: 32, 32>}, {pipeline_mode = #tpu.pipeline_mode<synchronous>, transform_indices = @transform_4, window_bounds = array<i64: 32, 32>}, {pipeline_mode = #tpu.pipeline_mode<synchronous>, transform_indices = @transform_5, window_bounds = array<i64: 32, 32>}, {pipeline_mode = #tpu.pipeline_mode<synchronous>, transform_indices = @transform_6, window_bounds = array<i64: 1, 32>}, {pipeline_mode = #tpu.pipeline_mode<synchronous>, transform_indices = @transform_7, window_bounds = array<i64: 1, 32>}, {pipeline_mode = #tpu.pipeline_mode<synchronous>, transform_indices = @transform_8, window_bounds = array<i64: 1, 32>}, {pipeline_mode = #tpu.pipeline_mode<synchronous>, transform_indices = @transform_9, window_bounds = array<i64: 32, 32>}, {pipeline_mode = #tpu.pipeline_mode<synchronous>, transform_indices = @transform_10, window_bounds = array<i64: 1, 32>}, {pipeline_mode = #tpu.pipeline_mode<synchronous>, transform_indices = @transform_11, window_bounds = array<i64: 1, 32>}, {pipeline_mode = #tpu.pipeline_mode<synchronous>, transform_indices = @transform_12, window_bounds = array<i64: 1, 32>}, {pipeline_mode = #tpu.pipeline_mode<synchronous>, transform_indices = @transform_13, window_bounds = array<i64: 32, 32>}, {pipeline_mode = #tpu.pipeline_mode<synchronous>, transform_indices = @transform_14, window_bounds = array<i64: 32, 32>}, {pipeline_mode = #tpu.pipeline_mode<synchronous>, transform_indices = @transform_15, window_bounds = array<i64: 32, 32>}, {pipeline_mode = #tpu.pipeline_mode<synchronous>, transform_indices = @transform_16, window_bounds = array<i64: 1, 32>}, {pipeline_mode = #tpu.pipeline_mode<synchronous>, transform_indices = @transform_17, window_bounds = array<i64: 32, 1>}, {pipeline_mode = #tpu.pipeline_mode<synchronous>, transform_indices = @transform_18, window_bounds = array<i64: 32, 1>}, {pipeline_mode = #tpu.pipeline_mode<synchronous>, transform_indices = @transform_19, window_bounds = array<i64: 32, 32>}, {pipeline_mode = #tpu.pipeline_mode<synchronous>, transform_indices = @transform_20, window_bounds = array<i64: 1, 32>}, {pipeline_mode = #tpu.pipeline_mode<synchronous>, transform_indices = @transform_21, window_bounds = array<i64: 1, 32>}, {pipeline_mode = #tpu.pipeline_mode<synchronous>, transform_indices = @transform_22, window_bounds = array<i64: 1, 32>}, {pipeline_mode = #tpu.pipeline_mode<synchronous>, transform_indices = @transform_23, window_bounds = array<i64: 32, 64>}, {pipeline_mode = #tpu.pipeline_mode<synchronous>, transform_indices = @transform_24, window_bounds = array<i64: 1, 64>}, {pipeline_mode = #tpu.pipeline_mode<synchronous>, transform_indices = @transform_25, window_bounds = array<i64: 64, 32>}, {pipeline_mode = #tpu.pipeline_mode<synchronous>, transform_indices = @transform_26, window_bounds = array<i64: 1, 32>}, {pipeline_mode = #tpu.pipeline_mode<synchronous>, transform_indices = @transform_27, window_bounds = array<i64: 1, 32>}, {pipeline_mode = #tpu.pipeline_mode<synchronous>, transform_indices = @transform_28, window_bounds = array<i64: 1, 32>}, {transform_indices = @transform_29, window_bounds = array<i64: 1, 8, 32>}]} {
    %c0_i32 = arith.constant 0 : i32
    %0 = arith.cmpi eq, %arg1, %c0_i32 : i32
    %1 = arith.extui %0 : i1 to i32
    %c0_i32_0 = arith.constant 0 : i32
    %2 = arith.cmpi ne, %1, %c0_i32_0 : i32
    scf.if %2 {
      %c0_103 = arith.constant 0 : index
      %c0_104 = arith.constant 0 : index
      %c0_105 = arith.constant 0 : index
      %180 = vector.load %arg2[%c0_103, %c0_104, %c0_105] : memref<1x8x32xf32, #tpu.memory_space<vmem>>, vector<1x8x32xf32>
      %181 = vector.shape_cast %180 : vector<1x8x32xf32> to vector<8x32xf32>
      %182 = arith.truncf %181 : vector<8x32xf32> to vector<8x32xbf16>
      %c0_106 = arith.constant 0 : index
      %c0_107 = arith.constant 0 : index
      %183 = vector.load %arg5[%c0_106, %c0_107] : memref<32x32xbf16, #tpu.memory_space<vmem>>, vector<32x32xbf16>
      %cst_108 = arith.constant dense<0.000000e+00> : vector<8x32xf32>
      %184 = tpu.matmul %182, %183, %cst_108 {dimension_numbers = #tpu.dot_dimension_numbers<[1], [0], [0], [1], [0, 0, 1, 1], [], []>} : vector<8x32xbf16>, vector<32x32xbf16>, vector<8x32xf32> -> vector<8x32xf32>
      %c0_109 = arith.constant 0 : index
      %c0_110 = arith.constant 0 : index
      %185 = vector.load %arg8[%c0_109, %c0_110] : memref<1x32xf32, #tpu.memory_space<vmem>>, vector<1x32xf32>
      %186 = vector.broadcast %185 : vector<1x32xf32> to vector<8x32xf32>
      %187 = arith.addf %184, %186 : vector<8x32xf32>
      %cst_111 = arith.constant 0.353553385 : f32
      %188 = vector.broadcast %cst_111 : f32 to vector<8x32xf32>
      %189 = arith.mulf %187, %188 : vector<8x32xf32>
      %c0_112 = arith.constant 0 : index
      %c0_113 = arith.constant 0 : index
      %190 = vector.load %arg6[%c0_112, %c0_113] : memref<32x32xbf16, #tpu.memory_space<vmem>>, vector<32x32xbf16>
      %cst_114 = arith.constant dense<0.000000e+00> : vector<8x32xf32>
      %191 = tpu.matmul %182, %190, %cst_114 {dimension_numbers = #tpu.dot_dimension_numbers<[1], [0], [0], [1], [0, 0, 1, 1], [], []>} : vector<8x32xbf16>, vector<32x32xbf16>, vector<8x32xf32> -> vector<8x32xf32>
      %c0_115 = arith.constant 0 : index
      %c0_116 = arith.constant 0 : index
      %192 = vector.load %arg9[%c0_115, %c0_116] : memref<1x32xf32, #tpu.memory_space<vmem>>, vector<1x32xf32>
      %193 = vector.broadcast %192 : vector<1x32xf32> to vector<8x32xf32>
      %194 = arith.addf %191, %193 : vector<8x32xf32>
      %c0_117 = arith.constant 0 : index
      %c0_118 = arith.constant 0 : index
      %195 = vector.load %arg7[%c0_117, %c0_118] : memref<32x32xbf16, #tpu.memory_space<vmem>>, vector<32x32xbf16>
      %cst_119 = arith.constant dense<0.000000e+00> : vector<8x32xf32>
      %196 = tpu.matmul %182, %195, %cst_119 {dimension_numbers = #tpu.dot_dimension_numbers<[1], [0], [0], [1], [0, 0, 1, 1], [], []>} : vector<8x32xbf16>, vector<32x32xbf16>, vector<8x32xf32> -> vector<8x32xf32>
      %c0_120 = arith.constant 0 : index
      %c0_121 = arith.constant 0 : index
      %197 = vector.load %arg10[%c0_120, %c0_121] : memref<1x32xf32, #tpu.memory_space<vmem>>, vector<1x32xf32>
      %198 = vector.broadcast %197 : vector<1x32xf32> to vector<8x32xf32>
      %199 = arith.addf %196, %198 : vector<8x32xf32>
      %200 = vector.extract_strided_slice %189 {offsets = [0, 0], sizes = [8, 8], strides = [1, 1]} : vector<8x32xf32> to vector<8x8xf32>
      %201 = arith.truncf %200 : vector<8x8xf32> to vector<8x8xbf16>
      %202 = vector.extract_strided_slice %194 {offsets = [0, 0], sizes = [8, 8], strides = [1, 1]} : vector<8x32xf32> to vector<8x8xf32>
      %203 = arith.truncf %202 : vector<8x8xf32> to vector<8x8xbf16>
      %cst_122 = arith.constant dense<0.000000e+00> : vector<8x8xf32>
      %204 = tpu.matmul %201, %203, %cst_122 {dimension_numbers = #tpu.dot_dimension_numbers<[1], [1], [0], [0], [0, 0, 1, 0], [], []>} : vector<8x8xbf16>, vector<8x8xbf16>, vector<8x8xf32> -> vector<8x8xf32>
      %cst_123 = arith.constant dense<0xFF800000> : vector<8xf32>
      %205 = vector.multi_reduction <maximumf>, %204, %cst_123 [1] : vector<8x8xf32> to vector<8xf32>
      %206 = vector.shape_cast %205 : vector<8xf32> to vector<8x1xf32>
      %207 = vector.broadcast %206 : vector<8x1xf32> to vector<8x8xf32>
      %208 = arith.subf %204, %207 : vector<8x8xf32>
      %209 = math.exp %208 : vector<8x8xf32>
      %cst_124 = arith.constant dense<0.000000e+00> : vector<8xf32>
      %210 = vector.multi_reduction <add>, %209, %cst_124 [1] : vector<8x8xf32> to vector<8xf32>
      %211 = vector.shape_cast %210 : vector<8xf32> to vector<8x1xf32>
      %212 = tpu.reciprocal %211 {approx = true} : vector<8x1xf32> -> vector<8x1xf32>
      %213 = vector.broadcast %212 : vector<8x1xf32> to vector<8x8xf32>
      %214 = arith.mulf %209, %213 : vector<8x8xf32>
      %215 = arith.truncf %214 : vector<8x8xf32> to vector<8x8xbf16>
      %216 = vector.extract_strided_slice %199 {offsets = [0, 0], sizes = [8, 8], strides = [1, 1]} : vector<8x32xf32> to vector<8x8xf32>
      %217 = arith.truncf %216 : vector<8x8xf32> to vector<8x8xbf16>
      %cst_125 = arith.constant dense<0.000000e+00> : vector<8x8xf32>
      %218 = tpu.matmul %215, %217, %cst_125 {dimension_numbers = #tpu.dot_dimension_numbers<[1], [0], [0], [1], [0, 0, 1, 1], [], []>} : vector<8x8xbf16>, vector<8x8xbf16>, vector<8x8xf32> -> vector<8x8xf32>
      %219 = vector.extract_strided_slice %189 {offsets = [0, 8], sizes = [8, 8], strides = [1, 1]} : vector<8x32xf32> to vector<8x8xf32>
      %220 = arith.truncf %219 : vector<8x8xf32> to vector<8x8xbf16>
      %221 = vector.extract_strided_slice %194 {offsets = [0, 8], sizes = [8, 8], strides = [1, 1]} : vector<8x32xf32> to vector<8x8xf32>
      %222 = arith.truncf %221 : vector<8x8xf32> to vector<8x8xbf16>
      %cst_126 = arith.constant dense<0.000000e+00> : vector<8x8xf32>
      %223 = tpu.matmul %220, %222, %cst_126 {dimension_numbers = #tpu.dot_dimension_numbers<[1], [1], [0], [0], [0, 0, 1, 0], [], []>} : vector<8x8xbf16>, vector<8x8xbf16>, vector<8x8xf32> -> vector<8x8xf32>
      %cst_127 = arith.constant dense<0xFF800000> : vector<8xf32>
      %224 = vector.multi_reduction <maximumf>, %223, %cst_127 [1] : vector<8x8xf32> to vector<8xf32>
      %225 = vector.shape_cast %224 : vector<8xf32> to vector<8x1xf32>
      %226 = vector.broadcast %225 : vector<8x1xf32> to vector<8x8xf32>
      %227 = arith.subf %223, %226 : vector<8x8xf32>
      %228 = math.exp %227 : vector<8x8xf32>
      %cst_128 = arith.constant dense<0.000000e+00> : vector<8xf32>
      %229 = vector.multi_reduction <add>, %228, %cst_128 [1] : vector<8x8xf32> to vector<8xf32>
      %230 = vector.shape_cast %229 : vector<8xf32> to vector<8x1xf32>
      %231 = tpu.reciprocal %230 {approx = true} : vector<8x1xf32> -> vector<8x1xf32>
      %232 = vector.broadcast %231 : vector<8x1xf32> to vector<8x8xf32>
      %233 = arith.mulf %228, %232 : vector<8x8xf32>
      %234 = arith.truncf %233 : vector<8x8xf32> to vector<8x8xbf16>
      %235 = vector.extract_strided_slice %199 {offsets = [0, 8], sizes = [8, 8], strides = [1, 1]} : vector<8x32xf32> to vector<8x8xf32>
      %236 = arith.truncf %235 : vector<8x8xf32> to vector<8x8xbf16>
      %cst_129 = arith.constant dense<0.000000e+00> : vector<8x8xf32>
      %237 = tpu.matmul %234, %236, %cst_129 {dimension_numbers = #tpu.dot_dimension_numbers<[1], [0], [0], [1], [0, 0, 1, 1], [], []>} : vector<8x8xbf16>, vector<8x8xbf16>, vector<8x8xf32> -> vector<8x8xf32>
      %238 = vector.extract_strided_slice %189 {offsets = [0, 16], sizes = [8, 8], strides = [1, 1]} : vector<8x32xf32> to vector<8x8xf32>
      %239 = arith.truncf %238 : vector<8x8xf32> to vector<8x8xbf16>
      %240 = vector.extract_strided_slice %194 {offsets = [0, 16], sizes = [8, 8], strides = [1, 1]} : vector<8x32xf32> to vector<8x8xf32>
      %241 = arith.truncf %240 : vector<8x8xf32> to vector<8x8xbf16>
      %cst_130 = arith.constant dense<0.000000e+00> : vector<8x8xf32>
      %242 = tpu.matmul %239, %241, %cst_130 {dimension_numbers = #tpu.dot_dimension_numbers<[1], [1], [0], [0], [0, 0, 1, 0], [], []>} : vector<8x8xbf16>, vector<8x8xbf16>, vector<8x8xf32> -> vector<8x8xf32>
      %cst_131 = arith.constant dense<0xFF800000> : vector<8xf32>
      %243 = vector.multi_reduction <maximumf>, %242, %cst_131 [1] : vector<8x8xf32> to vector<8xf32>
      %244 = vector.shape_cast %243 : vector<8xf32> to vector<8x1xf32>
      %245 = vector.broadcast %244 : vector<8x1xf32> to vector<8x8xf32>
      %246 = arith.subf %242, %245 : vector<8x8xf32>
      %247 = math.exp %246 : vector<8x8xf32>
      %cst_132 = arith.constant dense<0.000000e+00> : vector<8xf32>
      %248 = vector.multi_reduction <add>, %247, %cst_132 [1] : vector<8x8xf32> to vector<8xf32>
      %249 = vector.shape_cast %248 : vector<8xf32> to vector<8x1xf32>
      %250 = tpu.reciprocal %249 {approx = true} : vector<8x1xf32> -> vector<8x1xf32>
      %251 = vector.broadcast %250 : vector<8x1xf32> to vector<8x8xf32>
      %252 = arith.mulf %247, %251 : vector<8x8xf32>
      %253 = arith.truncf %252 : vector<8x8xf32> to vector<8x8xbf16>
      %254 = vector.extract_strided_slice %199 {offsets = [0, 16], sizes = [8, 8], strides = [1, 1]} : vector<8x32xf32> to vector<8x8xf32>
      %255 = arith.truncf %254 : vector<8x8xf32> to vector<8x8xbf16>
      %cst_133 = arith.constant dense<0.000000e+00> : vector<8x8xf32>
      %256 = tpu.matmul %253, %255, %cst_133 {dimension_numbers = #tpu.dot_dimension_numbers<[1], [0], [0], [1], [0, 0, 1, 1], [], []>} : vector<8x8xbf16>, vector<8x8xbf16>, vector<8x8xf32> -> vector<8x8xf32>
      %257 = vector.extract_strided_slice %189 {offsets = [0, 24], sizes = [8, 8], strides = [1, 1]} : vector<8x32xf32> to vector<8x8xf32>
      %258 = arith.truncf %257 : vector<8x8xf32> to vector<8x8xbf16>
      %259 = vector.extract_strided_slice %194 {offsets = [0, 24], sizes = [8, 8], strides = [1, 1]} : vector<8x32xf32> to vector<8x8xf32>
      %260 = arith.truncf %259 : vector<8x8xf32> to vector<8x8xbf16>
      %cst_134 = arith.constant dense<0.000000e+00> : vector<8x8xf32>
      %261 = tpu.matmul %258, %260, %cst_134 {dimension_numbers = #tpu.dot_dimension_numbers<[1], [1], [0], [0], [0, 0, 1, 0], [], []>} : vector<8x8xbf16>, vector<8x8xbf16>, vector<8x8xf32> -> vector<8x8xf32>
      %cst_135 = arith.constant dense<0xFF800000> : vector<8xf32>
      %262 = vector.multi_reduction <maximumf>, %261, %cst_135 [1] : vector<8x8xf32> to vector<8xf32>
      %263 = vector.shape_cast %262 : vector<8xf32> to vector<8x1xf32>
      %264 = vector.broadcast %263 : vector<8x1xf32> to vector<8x8xf32>
      %265 = arith.subf %261, %264 : vector<8x8xf32>
      %266 = math.exp %265 : vector<8x8xf32>
      %cst_136 = arith.constant dense<0.000000e+00> : vector<8xf32>
      %267 = vector.multi_reduction <add>, %266, %cst_136 [1] : vector<8x8xf32> to vector<8xf32>
      %268 = vector.shape_cast %267 : vector<8xf32> to vector<8x1xf32>
      %269 = tpu.reciprocal %268 {approx = true} : vector<8x1xf32> -> vector<8x1xf32>
      %270 = vector.broadcast %269 : vector<8x1xf32> to vector<8x8xf32>
      %271 = arith.mulf %266, %270 : vector<8x8xf32>
      %272 = arith.truncf %271 : vector<8x8xf32> to vector<8x8xbf16>
      %273 = vector.extract_strided_slice %199 {offsets = [0, 24], sizes = [8, 8], strides = [1, 1]} : vector<8x32xf32> to vector<8x8xf32>
      %274 = arith.truncf %273 : vector<8x8xf32> to vector<8x8xbf16>
      %cst_137 = arith.constant dense<0.000000e+00> : vector<8x8xf32>
      %275 = tpu.matmul %272, %274, %cst_137 {dimension_numbers = #tpu.dot_dimension_numbers<[1], [0], [0], [1], [0, 0, 1, 1], [], []>} : vector<8x8xbf16>, vector<8x8xbf16>, vector<8x8xf32> -> vector<8x8xf32>
      %276 = tpu.concatenate %218, %237, %256, %275 in 1 : vector<8x8xf32>, vector<8x8xf32>, vector<8x8xf32>, vector<8x8xf32> -> vector<8x32xf32>
      %277 = arith.truncf %276 : vector<8x32xf32> to vector<8x32xbf16>
      %c0_138 = arith.constant 0 : index
      %c0_139 = arith.constant 0 : index
      %278 = vector.load %arg11[%c0_138, %c0_139] : memref<32x32xbf16, #tpu.memory_space<vmem>>, vector<32x32xbf16>
      %cst_140 = arith.constant dense<0.000000e+00> : vector<8x32xf32>
      %279 = tpu.matmul %277, %278, %cst_140 {dimension_numbers = #tpu.dot_dimension_numbers<[1], [0], [0], [1], [0, 0, 1, 1], [], []>} : vector<8x32xbf16>, vector<32x32xbf16>, vector<8x32xf32> -> vector<8x32xf32>
      %c0_141 = arith.constant 0 : index
      %c0_142 = arith.constant 0 : index
      %280 = vector.load %arg12[%c0_141, %c0_142] : memref<1x32xf32, #tpu.memory_space<vmem>>, vector<1x32xf32>
      %281 = vector.broadcast %280 : vector<1x32xf32> to vector<8x32xf32>
      %282 = arith.addf %279, %281 : vector<8x32xf32>
      %283 = arith.addf %181, %282 : vector<8x32xf32>
      %c0_143 = arith.constant 0 : index
      %c0_144 = arith.constant 0 : index
      %284 = vector.load %arg13[%c0_143, %c0_144] : memref<1x32xf32, #tpu.memory_space<vmem>>, vector<1x32xf32>
      %c0_145 = arith.constant 0 : index
      %c0_146 = arith.constant 0 : index
      %285 = vector.load %arg14[%c0_145, %c0_146] : memref<1x32xf32, #tpu.memory_space<vmem>>, vector<1x32xf32>
      %cst_147 = arith.constant dense<0.000000e+00> : vector<8xf32>
      %286 = vector.multi_reduction <add>, %283, %cst_147 [1] : vector<8x32xf32> to vector<8xf32>
      %287 = vector.shape_cast %286 : vector<8xf32> to vector<8x1xf32>
      %cst_148 = arith.constant 3.200000e+01 : f32
      %288 = vector.broadcast %cst_148 : f32 to vector<8x1xf32>
      %289 = arith.divf %287, %288 : vector<8x1xf32>
      %290 = vector.broadcast %289 : vector<8x1xf32> to vector<8x32xf32>
      %291 = arith.subf %283, %290 : vector<8x32xf32>
      %292 = arith.mulf %291, %291 : vector<8x32xf32>
      %cst_149 = arith.constant dense<0.000000e+00> : vector<8xf32>
      %293 = vector.multi_reduction <add>, %292, %cst_149 [1] : vector<8x32xf32> to vector<8xf32>
      %294 = vector.shape_cast %293 : vector<8xf32> to vector<8x1xf32>
      %cst_150 = arith.constant 3.200000e+01 : f32
      %295 = vector.broadcast %cst_150 : f32 to vector<8x1xf32>
      %296 = arith.divf %294, %295 : vector<8x1xf32>
      %cst_151 = arith.constant 9.99999974E-6 : f32
      %297 = vector.broadcast %cst_151 : f32 to vector<8x1xf32>
      %298 = arith.addf %296, %297 : vector<8x1xf32>
      %299 = math.rsqrt %298 : vector<8x1xf32>
      %300 = vector.broadcast %299 : vector<8x1xf32> to vector<8x32xf32>
      %301 = arith.mulf %291, %300 : vector<8x32xf32>
      %302 = vector.broadcast %284 : vector<1x32xf32> to vector<8x32xf32>
      %303 = arith.mulf %301, %302 : vector<8x32xf32>
      %304 = vector.broadcast %285 : vector<1x32xf32> to vector<8x32xf32>
      %305 = arith.addf %303, %304 : vector<8x32xf32>
      %c0_152 = arith.constant 0 : index
      %c0_153 = arith.constant 0 : index
      %306 = vector.load %arg32[%c0_152, %c0_153] : memref<8x32xf32, #tpu.memory_space<vmem>>, vector<8x32xf32>
      tpu.vector_store %arg32[%c0_152, %c0_153], %305 {strides = array<i32>} : memref<8x32xf32, #tpu.memory_space<vmem>>, vector<8x32xf32>,
      %307 = arith.truncf %305 : vector<8x32xf32> to vector<8x32xbf16>
      %c0_154 = arith.constant 0 : index
      %c0_155 = arith.constant 0 : index
      %308 = vector.load %arg15[%c0_154, %c0_155] : memref<32x32xbf16, #tpu.memory_space<vmem>>, vector<32x32xbf16>
      %cst_156 = arith.constant dense<0.000000e+00> : vector<8x32xf32>
      %309 = tpu.matmul %307, %308, %cst_156 {dimension_numbers = #tpu.dot_dimension_numbers<[1], [0], [0], [1], [0, 0, 1, 1], [], []>} : vector<8x32xbf16>, vector<32x32xbf16>, vector<8x32xf32> -> vector<8x32xf32>
      %c0_157 = arith.constant 0 : index
      %c0_158 = arith.constant 0 : index
      %310 = vector.load %arg18[%c0_157, %c0_158] : memref<1x32xf32, #tpu.memory_space<vmem>>, vector<1x32xf32>
      %311 = vector.broadcast %310 : vector<1x32xf32> to vector<8x32xf32>
      %312 = arith.addf %309, %311 : vector<8x32xf32>
      %cst_159 = arith.constant 0.353553385 : f32
      %313 = vector.broadcast %cst_159 : f32 to vector<8x32xf32>
      %314 = arith.mulf %312, %313 : vector<8x32xf32>
      %c0_160 = arith.constant 0 : index
      %c0_161 = arith.constant 0 : index
      %315 = vector.load %arg33[%c0_160, %c0_161] : memref<8x32xf32, #tpu.memory_space<vmem>>, vector<8x32xf32>
      tpu.vector_store %arg33[%c0_160, %c0_161], %314 {strides = array<i32>} : memref<8x32xf32, #tpu.memory_space<vmem>>, vector<8x32xf32>,
      %cst_162 = arith.constant 0xFF800000 : f32
      %316 = vector.broadcast %cst_162 : f32 to vector<4x8x1xf32>
      %c0_163 = arith.constant 0 : index
      %c0_164 = arith.constant 0 : index
      %c0_165 = arith.constant 0 : index
      %317 = vector.load %arg34[%c0_163, %c0_164, %c0_165] : memref<4x8x1xf32, #tpu.memory_space<vmem>>, vector<4x8x1xf32>
      tpu.vector_store %arg34[%c0_163, %c0_164, %c0_165], %316 {strides = array<i32>} : memref<4x8x1xf32, #tpu.memory_space<vmem>>, vector<4x8x1xf32>,
      %cst_166 = arith.constant 0.000000e+00 : f32
      %318 = vector.broadcast %cst_166 : f32 to vector<4x8x1xf32>
      %c0_167 = arith.constant 0 : index
      %c0_168 = arith.constant 0 : index
      %c0_169 = arith.constant 0 : index
      %319 = vector.load %arg35[%c0_167, %c0_168, %c0_169] : memref<4x8x1xf32, #tpu.memory_space<vmem>>, vector<4x8x1xf32>
      tpu.vector_store %arg35[%c0_167, %c0_168, %c0_169], %318 {strides = array<i32>} : memref<4x8x1xf32, #tpu.memory_space<vmem>>, vector<4x8x1xf32>,
      %cst_170 = arith.constant 0.000000e+00 : f32
      %320 = vector.broadcast %cst_170 : f32 to vector<4x8x8xf32>
      %c0_171 = arith.constant 0 : index
      %c0_172 = arith.constant 0 : index
      %c0_173 = arith.constant 0 : index
      %321 = vector.load %arg36[%c0_171, %c0_172, %c0_173] : memref<4x8x8xf32, #tpu.memory_space<vmem>>, vector<4x8x8xf32>
      tpu.vector_store %arg36[%c0_171, %c0_172, %c0_173], %320 {strides = array<i32>} : memref<4x8x8xf32, #tpu.memory_space<vmem>>, vector<4x8x8xf32>,
    } else {
    }
    %c0 = arith.constant 0 : index
    %c0_1 = arith.constant 0 : index
    %c0_2 = arith.constant 0 : index
    %3 = vector.load %arg3[%c0, %c0_1, %c0_2] : memref<1x32x16xbf16, #tpu.memory_space<vmem>>, vector<1x32x16xbf16>
    %4 = vector.shape_cast %3 : vector<1x32x16xbf16> to vector<32x16xbf16>
    %c0_3 = arith.constant 0 : index
    %c0_4 = arith.constant 0 : index
    %5 = vector.load %arg16[%c0_3, %c0_4] : memref<32x32xbf16, #tpu.memory_space<vmem>>, vector<32x32xbf16>
    %cst = arith.constant dense<0.000000e+00> : vector<32x16xf32>
    %6 = tpu.matmul %5, %4, %cst {dimension_numbers = #tpu.dot_dimension_numbers<[1], [0], [0], [1], [0, 0, 1, 1], [], []>} : vector<32x32xbf16>, vector<32x16xbf16>, vector<32x16xf32> -> vector<32x16xf32>
    %c0_5 = arith.constant 0 : index
    %c0_6 = arith.constant 0 : index
    %7 = vector.load %arg19[%c0_5, %c0_6] : memref<32x1xf32, #tpu.memory_space<vmem>>, vector<32x1xf32>
    %8 = vector.broadcast %7 : vector<32x1xf32> to vector<32x16xf32>
    %9 = arith.addf %6, %8 : vector<32x16xf32>
    %c0_7 = arith.constant 0 : index
    %c0_8 = arith.constant 0 : index
    %10 = vector.load %arg17[%c0_7, %c0_8] : memref<32x32xbf16, #tpu.memory_space<vmem>>, vector<32x32xbf16>
    %cst_9 = arith.constant dense<0.000000e+00> : vector<32x16xf32>
    %11 = tpu.matmul %10, %4, %cst_9 {dimension_numbers = #tpu.dot_dimension_numbers<[1], [0], [0], [1], [0, 0, 1, 1], [], []>} : vector<32x32xbf16>, vector<32x16xbf16>, vector<32x16xf32> -> vector<32x16xf32>
    %c0_10 = arith.constant 0 : index
    %c0_11 = arith.constant 0 : index
    %12 = vector.load %arg20[%c0_10, %c0_11] : memref<32x1xf32, #tpu.memory_space<vmem>>, vector<32x1xf32>
    %13 = vector.broadcast %12 : vector<32x1xf32> to vector<32x16xf32>
    %14 = arith.addf %11, %13 : vector<32x16xf32>
    %c0_12 = arith.constant 0 : index
    %c0_13 = arith.constant 0 : index
    %15 = vector.load %arg33[%c0_12, %c0_13] : memref<8x32xf32, #tpu.memory_space<vmem>>, vector<8x32xf32>
    %c0_14 = arith.constant 0 : index
    %c0_15 = arith.constant 0 : index
    %16 = vector.load %arg4[%c0_14, %c0_15] : memref<8x16xf32, #tpu.memory_space<vmem>>, vector<8x16xf32>
    %17 = vector.extract_strided_slice %15 {offsets = [0, 0], sizes = [8, 8], strides = [1, 1]} : vector<8x32xf32> to vector<8x8xf32>
    %18 = arith.truncf %17 : vector<8x8xf32> to vector<8x8xbf16>
    %19 = vector.extract_strided_slice %9 {offsets = [0, 0], sizes = [8, 16], strides = [1, 1]} : vector<32x16xf32> to vector<8x16xf32>
    %20 = arith.truncf %19 : vector<8x16xf32> to vector<8x16xbf16>
    %cst_16 = arith.constant dense<0.000000e+00> : vector<8x16xf32>
    %21 = tpu.matmul %18, %20, %cst_16 {dimension_numbers = #tpu.dot_dimension_numbers<[1], [0], [0], [1], [0, 0, 1, 1], [], []>} : vector<8x8xbf16>, vector<8x16xbf16>, vector<8x16xf32> -> vector<8x16xf32>
    %22 = arith.addf %21, %16 : vector<8x16xf32>
    %c0_17 = arith.constant 0 : index
    %c0_18 = arith.constant 0 : index
    %c0_19 = arith.constant 0 : index
    %23 = vector.load %arg34[%c0_17, %c0_18, %c0_19] : memref<4x8x1xf32, #tpu.memory_space<vmem>>, vector<1x8x1xf32>
    %24 = vector.shape_cast %23 : vector<1x8x1xf32> to vector<8x1xf32>
    %cst_20 = arith.constant dense<0xFF800000> : vector<8xf32>
    %25 = vector.multi_reduction <maximumf>, %22, %cst_20 [1] : vector<8x16xf32> to vector<8xf32>
    %26 = vector.shape_cast %25 : vector<8xf32> to vector<8x1xf32>
    %27 = arith.maximumf %24, %26 : vector<8x1xf32>
    %28 = arith.subf %24, %27 : vector<8x1xf32>
    %29 = math.exp %28 : vector<8x1xf32>
    %30 = vector.broadcast %27 : vector<8x1xf32> to vector<8x16xf32>
    %31 = arith.subf %22, %30 : vector<8x16xf32>
    %32 = math.exp %31 : vector<8x16xf32>
    %c0_21 = arith.constant 0 : index
    %c0_22 = arith.constant 0 : index
    %c0_23 = arith.constant 0 : index
    %33 = vector.load %arg35[%c0_21, %c0_22, %c0_23] : memref<4x8x1xf32, #tpu.memory_space<vmem>>, vector<1x8x1xf32>
    %34 = vector.shape_cast %33 : vector<1x8x1xf32> to vector<8x1xf32>
    %35 = arith.mulf %29, %34 : vector<8x1xf32>
    %cst_24 = arith.constant dense<0.000000e+00> : vector<8xf32>
    %36 = vector.multi_reduction <add>, %32, %cst_24 [1] : vector<8x16xf32> to vector<8xf32>
    %37 = vector.shape_cast %36 : vector<8xf32> to vector<8x1xf32>
    %38 = arith.addf %35, %37 : vector<8x1xf32>
    %c0_25 = arith.constant 0 : index
    %c0_26 = arith.constant 0 : index
    %c0_27 = arith.constant 0 : index
    %39 = vector.load %arg35[%c0_25, %c0_26, %c0_27] : memref<4x8x1xf32, #tpu.memory_space<vmem>>, vector<1x8x1xf32>
    %40 = vector.shape_cast %39 : vector<1x8x1xf32> to vector<8x1xf32>
    %41 = vector.shape_cast %38 : vector<8x1xf32> to vector<1x8x1xf32>
    tpu.vector_store %arg35[%c0_25, %c0_26, %c0_27], %41 {strides = array<i32>} : memref<4x8x1xf32, #tpu.memory_space<vmem>>, vector<1x8x1xf32>,
    %c0_28 = arith.constant 0 : index
    %c0_29 = arith.constant 0 : index
    %c0_30 = arith.constant 0 : index
    %42 = vector.load %arg36[%c0_28, %c0_29, %c0_30] : memref<4x8x8xf32, #tpu.memory_space<vmem>>, vector<1x8x8xf32>
    %43 = vector.shape_cast %42 : vector<1x8x8xf32> to vector<8x8xf32>
    %44 = vector.broadcast %29 : vector<8x1xf32> to vector<8x8xf32>
    %45 = arith.mulf %44, %43 : vector<8x8xf32>
    %46 = arith.truncf %32 : vector<8x16xf32> to vector<8x16xbf16>
    %47 = vector.extract_strided_slice %14 {offsets = [0, 0], sizes = [8, 16], strides = [1, 1]} : vector<32x16xf32> to vector<8x16xf32>
    %48 = arith.truncf %47 : vector<8x16xf32> to vector<8x16xbf16>
    %cst_31 = arith.constant dense<0.000000e+00> : vector<8x8xf32>
    %49 = tpu.matmul %46, %48, %cst_31 {dimension_numbers = #tpu.dot_dimension_numbers<[1], [1], [0], [0], [0, 0, 1, 0], [], []>} : vector<8x16xbf16>, vector<8x16xbf16>, vector<8x8xf32> -> vector<8x8xf32>
    %50 = arith.addf %45, %49 : vector<8x8xf32>
    %c0_32 = arith.constant 0 : index
    %c0_33 = arith.constant 0 : index
    %c0_34 = arith.constant 0 : index
    %51 = vector.load %arg36[%c0_32, %c0_33, %c0_34] : memref<4x8x8xf32, #tpu.memory_space<vmem>>, vector<1x8x8xf32>
    %52 = vector.shape_cast %51 : vector<1x8x8xf32> to vector<8x8xf32>
    %53 = vector.shape_cast %50 : vector<8x8xf32> to vector<1x8x8xf32>
    tpu.vector_store %arg36[%c0_32, %c0_33, %c0_34], %53 {strides = array<i32>} : memref<4x8x8xf32, #tpu.memory_space<vmem>>, vector<1x8x8xf32>,
    %c0_35 = arith.constant 0 : index
    %c0_36 = arith.constant 0 : index
    %c0_37 = arith.constant 0 : index
    %54 = vector.load %arg34[%c0_35, %c0_36, %c0_37] : memref<4x8x1xf32, #tpu.memory_space<vmem>>, vector<1x8x1xf32>
    %55 = vector.shape_cast %54 : vector<1x8x1xf32> to vector<8x1xf32>
    %56 = vector.shape_cast %27 : vector<8x1xf32> to vector<1x8x1xf32>
    tpu.vector_store %arg34[%c0_35, %c0_36, %c0_37], %56 {strides = array<i32>} : memref<4x8x1xf32, #tpu.memory_space<vmem>>, vector<1x8x1xf32>,
    %57 = vector.extract_strided_slice %15 {offsets = [0, 8], sizes = [8, 8], strides = [1, 1]} : vector<8x32xf32> to vector<8x8xf32>
    %58 = arith.truncf %57 : vector<8x8xf32> to vector<8x8xbf16>
    %59 = vector.extract_strided_slice %9 {offsets = [8, 0], sizes = [8, 16], strides = [1, 1]} : vector<32x16xf32> to vector<8x16xf32>
    %60 = arith.truncf %59 : vector<8x16xf32> to vector<8x16xbf16>
    %cst_38 = arith.constant dense<0.000000e+00> : vector<8x16xf32>
    %61 = tpu.matmul %58, %60, %cst_38 {dimension_numbers = #tpu.dot_dimension_numbers<[1], [0], [0], [1], [0, 0, 1, 1], [], []>} : vector<8x8xbf16>, vector<8x16xbf16>, vector<8x16xf32> -> vector<8x16xf32>
    %62 = arith.addf %61, %16 : vector<8x16xf32>
    %c1 = arith.constant 1 : index
    %c0_39 = arith.constant 0 : index
    %c0_40 = arith.constant 0 : index
    %63 = vector.load %arg34[%c1, %c0_39, %c0_40] : memref<4x8x1xf32, #tpu.memory_space<vmem>>, vector<1x8x1xf32>
    %64 = vector.shape_cast %63 : vector<1x8x1xf32> to vector<8x1xf32>
    %cst_41 = arith.constant dense<0xFF800000> : vector<8xf32>
    %65 = vector.multi_reduction <maximumf>, %62, %cst_41 [1] : vector<8x16xf32> to vector<8xf32>
    %66 = vector.shape_cast %65 : vector<8xf32> to vector<8x1xf32>
    %67 = arith.maximumf %64, %66 : vector<8x1xf32>
    %68 = arith.subf %64, %67 : vector<8x1xf32>
    %69 = math.exp %68 : vector<8x1xf32>
    %70 = vector.broadcast %67 : vector<8x1xf32> to vector<8x16xf32>
    %71 = arith.subf %62, %70 : vector<8x16xf32>
    %72 = math.exp %71 : vector<8x16xf32>
    %c1_42 = arith.constant 1 : index
    %c0_43 = arith.constant 0 : index
    %c0_44 = arith.constant 0 : index
    %73 = vector.load %arg35[%c1_42, %c0_43, %c0_44] : memref<4x8x1xf32, #tpu.memory_space<vmem>>, vector<1x8x1xf32>
    %74 = vector.shape_cast %73 : vector<1x8x1xf32> to vector<8x1xf32>
    %75 = arith.mulf %69, %74 : vector<8x1xf32>
    %cst_45 = arith.constant dense<0.000000e+00> : vector<8xf32>
    %76 = vector.multi_reduction <add>, %72, %cst_45 [1] : vector<8x16xf32> to vector<8xf32>
    %77 = vector.shape_cast %76 : vector<8xf32> to vector<8x1xf32>
    %78 = arith.addf %75, %77 : vector<8x1xf32>
    %c1_46 = arith.constant 1 : index
    %c0_47 = arith.constant 0 : index
    %c0_48 = arith.constant 0 : index
    %79 = vector.load %arg35[%c1_46, %c0_47, %c0_48] : memref<4x8x1xf32, #tpu.memory_space<vmem>>, vector<1x8x1xf32>
    %80 = vector.shape_cast %79 : vector<1x8x1xf32> to vector<8x1xf32>
    %81 = vector.shape_cast %78 : vector<8x1xf32> to vector<1x8x1xf32>
    tpu.vector_store %arg35[%c1_46, %c0_47, %c0_48], %81 {strides = array<i32>} : memref<4x8x1xf32, #tpu.memory_space<vmem>>, vector<1x8x1xf32>,
    %c1_49 = arith.constant 1 : index
    %c0_50 = arith.constant 0 : index
    %c0_51 = arith.constant 0 : index
    %82 = vector.load %arg36[%c1_49, %c0_50, %c0_51] : memref<4x8x8xf32, #tpu.memory_space<vmem>>, vector<1x8x8xf32>
    %83 = vector.shape_cast %82 : vector<1x8x8xf32> to vector<8x8xf32>
    %84 = vector.broadcast %69 : vector<8x1xf32> to vector<8x8xf32>
    %85 = arith.mulf %84, %83 : vector<8x8xf32>
    %86 = arith.truncf %72 : vector<8x16xf32> to vector<8x16xbf16>
    %87 = vector.extract_strided_slice %14 {offsets = [8, 0], sizes = [8, 16], strides = [1, 1]} : vector<32x16xf32> to vector<8x16xf32>
    %88 = arith.truncf %87 : vector<8x16xf32> to vector<8x16xbf16>
    %cst_52 = arith.constant dense<0.000000e+00> : vector<8x8xf32>
    %89 = tpu.matmul %86, %88, %cst_52 {dimension_numbers = #tpu.dot_dimension_numbers<[1], [1], [0], [0], [0, 0, 1, 0], [], []>} : vector<8x16xbf16>, vector<8x16xbf16>, vector<8x8xf32> -> vector<8x8xf32>
    %90 = arith.addf %85, %89 : vector<8x8xf32>
    %c1_53 = arith.constant 1 : index
    %c0_54 = arith.constant 0 : index
    %c0_55 = arith.constant 0 : index
    %91 = vector.load %arg36[%c1_53, %c0_54, %c0_55] : memref<4x8x8xf32, #tpu.memory_space<vmem>>, vector<1x8x8xf32>
    %92 = vector.shape_cast %91 : vector<1x8x8xf32> to vector<8x8xf32>
    %93 = vector.shape_cast %90 : vector<8x8xf32> to vector<1x8x8xf32>
    tpu.vector_store %arg36[%c1_53, %c0_54, %c0_55], %93 {strides = array<i32>} : memref<4x8x8xf32, #tpu.memory_space<vmem>>, vector<1x8x8xf32>,
    %c1_56 = arith.constant 1 : index
    %c0_57 = arith.constant 0 : index
    %c0_58 = arith.constant 0 : index
    %94 = vector.load %arg34[%c1_56, %c0_57, %c0_58] : memref<4x8x1xf32, #tpu.memory_space<vmem>>, vector<1x8x1xf32>
    %95 = vector.shape_cast %94 : vector<1x8x1xf32> to vector<8x1xf32>
    %96 = vector.shape_cast %67 : vector<8x1xf32> to vector<1x8x1xf32>
    tpu.vector_store %arg34[%c1_56, %c0_57, %c0_58], %96 {strides = array<i32>} : memref<4x8x1xf32, #tpu.memory_space<vmem>>, vector<1x8x1xf32>,
    %97 = vector.extract_strided_slice %15 {offsets = [0, 16], sizes = [8, 8], strides = [1, 1]} : vector<8x32xf32> to vector<8x8xf32>
    %98 = arith.truncf %97 : vector<8x8xf32> to vector<8x8xbf16>
    %99 = vector.extract_strided_slice %9 {offsets = [16, 0], sizes = [8, 16], strides = [1, 1]} : vector<32x16xf32> to vector<8x16xf32>
    %100 = arith.truncf %99 : vector<8x16xf32> to vector<8x16xbf16>
    %cst_59 = arith.constant dense<0.000000e+00> : vector<8x16xf32>
    %101 = tpu.matmul %98, %100, %cst_59 {dimension_numbers = #tpu.dot_dimension_numbers<[1], [0], [0], [1], [0, 0, 1, 1], [], []>} : vector<8x8xbf16>, vector<8x16xbf16>, vector<8x16xf32> -> vector<8x16xf32>
    %102 = arith.addf %101, %16 : vector<8x16xf32>
    %c2 = arith.constant 2 : index
    %c0_60 = arith.constant 0 : index
    %c0_61 = arith.constant 0 : index
    %103 = vector.load %arg34[%c2, %c0_60, %c0_61] : memref<4x8x1xf32, #tpu.memory_space<vmem>>, vector<1x8x1xf32>
    %104 = vector.shape_cast %103 : vector<1x8x1xf32> to vector<8x1xf32>
    %cst_62 = arith.constant dense<0xFF800000> : vector<8xf32>
    %105 = vector.multi_reduction <maximumf>, %102, %cst_62 [1] : vector<8x16xf32> to vector<8xf32>
    %106 = vector.shape_cast %105 : vector<8xf32> to vector<8x1xf32>
    %107 = arith.maximumf %104, %106 : vector<8x1xf32>
    %108 = arith.subf %104, %107 : vector<8x1xf32>
    %109 = math.exp %108 : vector<8x1xf32>
    %110 = vector.broadcast %107 : vector<8x1xf32> to vector<8x16xf32>
    %111 = arith.subf %102, %110 : vector<8x16xf32>
    %112 = math.exp %111 : vector<8x16xf32>
    %c2_63 = arith.constant 2 : index
    %c0_64 = arith.constant 0 : index
    %c0_65 = arith.constant 0 : index
    %113 = vector.load %arg35[%c2_63, %c0_64, %c0_65] : memref<4x8x1xf32, #tpu.memory_space<vmem>>, vector<1x8x1xf32>
    %114 = vector.shape_cast %113 : vector<1x8x1xf32> to vector<8x1xf32>
    %115 = arith.mulf %109, %114 : vector<8x1xf32>
    %cst_66 = arith.constant dense<0.000000e+00> : vector<8xf32>
    %116 = vector.multi_reduction <add>, %112, %cst_66 [1] : vector<8x16xf32> to vector<8xf32>
    %117 = vector.shape_cast %116 : vector<8xf32> to vector<8x1xf32>
    %118 = arith.addf %115, %117 : vector<8x1xf32>
    %c2_67 = arith.constant 2 : index
    %c0_68 = arith.constant 0 : index
    %c0_69 = arith.constant 0 : index
    %119 = vector.load %arg35[%c2_67, %c0_68, %c0_69] : memref<4x8x1xf32, #tpu.memory_space<vmem>>, vector<1x8x1xf32>
    %120 = vector.shape_cast %119 : vector<1x8x1xf32> to vector<8x1xf32>
    %121 = vector.shape_cast %118 : vector<8x1xf32> to vector<1x8x1xf32>
    tpu.vector_store %arg35[%c2_67, %c0_68, %c0_69], %121 {strides = array<i32>} : memref<4x8x1xf32, #tpu.memory_space<vmem>>, vector<1x8x1xf32>,
    %c2_70 = arith.constant 2 : index
    %c0_71 = arith.constant 0 : index
    %c0_72 = arith.constant 0 : index
    %122 = vector.load %arg36[%c2_70, %c0_71, %c0_72] : memref<4x8x8xf32, #tpu.memory_space<vmem>>, vector<1x8x8xf32>
    %123 = vector.shape_cast %122 : vector<1x8x8xf32> to vector<8x8xf32>
    %124 = vector.broadcast %109 : vector<8x1xf32> to vector<8x8xf32>
    %125 = arith.mulf %124, %123 : vector<8x8xf32>
    %126 = arith.truncf %112 : vector<8x16xf32> to vector<8x16xbf16>
    %127 = vector.extract_strided_slice %14 {offsets = [16, 0], sizes = [8, 16], strides = [1, 1]} : vector<32x16xf32> to vector<8x16xf32>
    %128 = arith.truncf %127 : vector<8x16xf32> to vector<8x16xbf16>
    %cst_73 = arith.constant dense<0.000000e+00> : vector<8x8xf32>
    %129 = tpu.matmul %126, %128, %cst_73 {dimension_numbers = #tpu.dot_dimension_numbers<[1], [1], [0], [0], [0, 0, 1, 0], [], []>} : vector<8x16xbf16>, vector<8x16xbf16>, vector<8x8xf32> -> vector<8x8xf32>
    %130 = arith.addf %125, %129 : vector<8x8xf32>
    %c2_74 = arith.constant 2 : index
    %c0_75 = arith.constant 0 : index
    %c0_76 = arith.constant 0 : index
    %131 = vector.load %arg36[%c2_74, %c0_75, %c0_76] : memref<4x8x8xf32, #tpu.memory_space<vmem>>, vector<1x8x8xf32>
    %132 = vector.shape_cast %131 : vector<1x8x8xf32> to vector<8x8xf32>
    %133 = vector.shape_cast %130 : vector<8x8xf32> to vector<1x8x8xf32>
    tpu.vector_store %arg36[%c2_74, %c0_75, %c0_76], %133 {strides = array<i32>} : memref<4x8x8xf32, #tpu.memory_space<vmem>>, vector<1x8x8xf32>,
    %c2_77 = arith.constant 2 : index
    %c0_78 = arith.constant 0 : index
    %c0_79 = arith.constant 0 : index
    %134 = vector.load %arg34[%c2_77, %c0_78, %c0_79] : memref<4x8x1xf32, #tpu.memory_space<vmem>>, vector<1x8x1xf32>
    %135 = vector.shape_cast %134 : vector<1x8x1xf32> to vector<8x1xf32>
    %136 = vector.shape_cast %107 : vector<8x1xf32> to vector<1x8x1xf32>
    tpu.vector_store %arg34[%c2_77, %c0_78, %c0_79], %136 {strides = array<i32>} : memref<4x8x1xf32, #tpu.memory_space<vmem>>, vector<1x8x1xf32>,
    %137 = vector.extract_strided_slice %15 {offsets = [0, 24], sizes = [8, 8], strides = [1, 1]} : vector<8x32xf32> to vector<8x8xf32>
    %138 = arith.truncf %137 : vector<8x8xf32> to vector<8x8xbf16>
    %139 = vector.extract_strided_slice %9 {offsets = [24, 0], sizes = [8, 16], strides = [1, 1]} : vector<32x16xf32> to vector<8x16xf32>
    %140 = arith.truncf %139 : vector<8x16xf32> to vector<8x16xbf16>
    %cst_80 = arith.constant dense<0.000000e+00> : vector<8x16xf32>
    %141 = tpu.matmul %138, %140, %cst_80 {dimension_numbers = #tpu.dot_dimension_numbers<[1], [0], [0], [1], [0, 0, 1, 1], [], []>} : vector<8x8xbf16>, vector<8x16xbf16>, vector<8x16xf32> -> vector<8x16xf32>
    %142 = arith.addf %141, %16 : vector<8x16xf32>
    %c3 = arith.constant 3 : index
    %c0_81 = arith.constant 0 : index
    %c0_82 = arith.constant 0 : index
    %143 = vector.load %arg34[%c3, %c0_81, %c0_82] : memref<4x8x1xf32, #tpu.memory_space<vmem>>, vector<1x8x1xf32>
    %144 = vector.shape_cast %143 : vector<1x8x1xf32> to vector<8x1xf32>
    %cst_83 = arith.constant dense<0xFF800000> : vector<8xf32>
    %145 = vector.multi_reduction <maximumf>, %142, %cst_83 [1] : vector<8x16xf32> to vector<8xf32>
    %146 = vector.shape_cast %145 : vector<8xf32> to vector<8x1xf32>
    %147 = arith.maximumf %144, %146 : vector<8x1xf32>
    %148 = arith.subf %144, %147 : vector<8x1xf32>
    %149 = math.exp %148 : vector<8x1xf32>
    %150 = vector.broadcast %147 : vector<8x1xf32> to vector<8x16xf32>
    %151 = arith.subf %142, %150 : vector<8x16xf32>
    %152 = math.exp %151 : vector<8x16xf32>
    %c3_84 = arith.constant 3 : index
    %c0_85 = arith.constant 0 : index
    %c0_86 = arith.constant 0 : index
    %153 = vector.load %arg35[%c3_84, %c0_85, %c0_86] : memref<4x8x1xf32, #tpu.memory_space<vmem>>, vector<1x8x1xf32>
    %154 = vector.shape_cast %153 : vector<1x8x1xf32> to vector<8x1xf32>
    %155 = arith.mulf %149, %154 : vector<8x1xf32>
    %cst_87 = arith.constant dense<0.000000e+00> : vector<8xf32>
    %156 = vector.multi_reduction <add>, %152, %cst_87 [1] : vector<8x16xf32> to vector<8xf32>
    %157 = vector.shape_cast %156 : vector<8xf32> to vector<8x1xf32>
    %158 = arith.addf %155, %157 : vector<8x1xf32>
    %c3_88 = arith.constant 3 : index
    %c0_89 = arith.constant 0 : index
    %c0_90 = arith.constant 0 : index
    %159 = vector.load %arg35[%c3_88, %c0_89, %c0_90] : memref<4x8x1xf32, #tpu.memory_space<vmem>>, vector<1x8x1xf32>
    %160 = vector.shape_cast %159 : vector<1x8x1xf32> to vector<8x1xf32>
    %161 = vector.shape_cast %158 : vector<8x1xf32> to vector<1x8x1xf32>
    tpu.vector_store %arg35[%c3_88, %c0_89, %c0_90], %161 {strides = array<i32>} : memref<4x8x1xf32, #tpu.memory_space<vmem>>, vector<1x8x1xf32>,
    %c3_91 = arith.constant 3 : index
    %c0_92 = arith.constant 0 : index
    %c0_93 = arith.constant 0 : index
    %162 = vector.load %arg36[%c3_91, %c0_92, %c0_93] : memref<4x8x8xf32, #tpu.memory_space<vmem>>, vector<1x8x8xf32>
    %163 = vector.shape_cast %162 : vector<1x8x8xf32> to vector<8x8xf32>
    %164 = vector.broadcast %149 : vector<8x1xf32> to vector<8x8xf32>
    %165 = arith.mulf %164, %163 : vector<8x8xf32>
    %166 = arith.truncf %152 : vector<8x16xf32> to vector<8x16xbf16>
    %167 = vector.extract_strided_slice %14 {offsets = [24, 0], sizes = [8, 16], strides = [1, 1]} : vector<32x16xf32> to vector<8x16xf32>
    %168 = arith.truncf %167 : vector<8x16xf32> to vector<8x16xbf16>
    %cst_94 = arith.constant dense<0.000000e+00> : vector<8x8xf32>
    %169 = tpu.matmul %166, %168, %cst_94 {dimension_numbers = #tpu.dot_dimension_numbers<[1], [1], [0], [0], [0, 0, 1, 0], [], []>} : vector<8x16xbf16>, vector<8x16xbf16>, vector<8x8xf32> -> vector<8x8xf32>
    %170 = arith.addf %165, %169 : vector<8x8xf32>
    %c3_95 = arith.constant 3 : index
    %c0_96 = arith.constant 0 : index
    %c0_97 = arith.constant 0 : index
    %171 = vector.load %arg36[%c3_95, %c0_96, %c0_97] : memref<4x8x8xf32, #tpu.memory_space<vmem>>, vector<1x8x8xf32>
    %172 = vector.shape_cast %171 : vector<1x8x8xf32> to vector<8x8xf32>
    %173 = vector.shape_cast %170 : vector<8x8xf32> to vector<1x8x8xf32>
    tpu.vector_store %arg36[%c3_95, %c0_96, %c0_97], %173 {strides = array<i32>} : memref<4x8x8xf32, #tpu.memory_space<vmem>>, vector<1x8x8xf32>,
    %c3_98 = arith.constant 3 : index
    %c0_99 = arith.constant 0 : index
    %c0_100 = arith.constant 0 : index
    %174 = vector.load %arg34[%c3_98, %c0_99, %c0_100] : memref<4x8x1xf32, #tpu.memory_space<vmem>>, vector<1x8x1xf32>
    %175 = vector.shape_cast %174 : vector<1x8x1xf32> to vector<8x1xf32>
    %176 = vector.shape_cast %147 : vector<8x1xf32> to vector<1x8x1xf32>
    tpu.vector_store %arg34[%c3_98, %c0_99, %c0_100], %176 {strides = array<i32>} : memref<4x8x1xf32, #tpu.memory_space<vmem>>, vector<1x8x1xf32>,
    %c0_i32_101 = arith.constant 0 : i32
    %177 = arith.cmpi eq, %arg1, %c0_i32_101 : i32
    %178 = arith.extui %177 : i1 to i32
    %c0_i32_102 = arith.constant 0 : i32
    %179 = arith.cmpi ne, %178, %c0_i32_102 : i32
    scf.if %179 {
      %c0_103 = arith.constant 0 : index
      %c0_104 = arith.constant 0 : index
      %c0_105 = arith.constant 0 : index
      %180 = vector.load %arg35[%c0_103, %c0_104, %c0_105] : memref<4x8x1xf32, #tpu.memory_space<vmem>>, vector<1x8x1xf32>
      %181 = vector.shape_cast %180 : vector<1x8x1xf32> to vector<8x1xf32>
      %182 = tpu.reciprocal %181 {approx = true} : vector<8x1xf32> -> vector<8x1xf32>
      %c0_106 = arith.constant 0 : index
      %c0_107 = arith.constant 0 : index
      %c0_108 = arith.constant 0 : index
      %183 = vector.load %arg36[%c0_106, %c0_107, %c0_108] : memref<4x8x8xf32, #tpu.memory_space<vmem>>, vector<1x8x8xf32>
      %184 = vector.shape_cast %183 : vector<1x8x8xf32> to vector<8x8xf32>
      %185 = vector.broadcast %182 : vector<8x1xf32> to vector<8x8xf32>
      %186 = arith.mulf %184, %185 : vector<8x8xf32>
      %c1_109 = arith.constant 1 : index
      %c0_110 = arith.constant 0 : index
      %c0_111 = arith.constant 0 : index
      %187 = vector.load %arg35[%c1_109, %c0_110, %c0_111] : memref<4x8x1xf32, #tpu.memory_space<vmem>>, vector<1x8x1xf32>
      %188 = vector.shape_cast %187 : vector<1x8x1xf32> to vector<8x1xf32>
      %189 = tpu.reciprocal %188 {approx = true} : vector<8x1xf32> -> vector<8x1xf32>
      %c1_112 = arith.constant 1 : index
      %c0_113 = arith.constant 0 : index
      %c0_114 = arith.constant 0 : index
      %190 = vector.load %arg36[%c1_112, %c0_113, %c0_114] : memref<4x8x8xf32, #tpu.memory_space<vmem>>, vector<1x8x8xf32>
      %191 = vector.shape_cast %190 : vector<1x8x8xf32> to vector<8x8xf32>
      %192 = vector.broadcast %189 : vector<8x1xf32> to vector<8x8xf32>
      %193 = arith.mulf %191, %192 : vector<8x8xf32>
      %c2_115 = arith.constant 2 : index
      %c0_116 = arith.constant 0 : index
      %c0_117 = arith.constant 0 : index
      %194 = vector.load %arg35[%c2_115, %c0_116, %c0_117] : memref<4x8x1xf32, #tpu.memory_space<vmem>>, vector<1x8x1xf32>
      %195 = vector.shape_cast %194 : vector<1x8x1xf32> to vector<8x1xf32>
      %196 = tpu.reciprocal %195 {approx = true} : vector<8x1xf32> -> vector<8x1xf32>
      %c2_118 = arith.constant 2 : index
      %c0_119 = arith.constant 0 : index
      %c0_120 = arith.constant 0 : index
      %197 = vector.load %arg36[%c2_118, %c0_119, %c0_120] : memref<4x8x8xf32, #tpu.memory_space<vmem>>, vector<1x8x8xf32>
      %198 = vector.shape_cast %197 : vector<1x8x8xf32> to vector<8x8xf32>
      %199 = vector.broadcast %196 : vector<8x1xf32> to vector<8x8xf32>
      %200 = arith.mulf %198, %199 : vector<8x8xf32>
      %c3_121 = arith.constant 3 : index
      %c0_122 = arith.constant 0 : index
      %c0_123 = arith.constant 0 : index
      %201 = vector.load %arg35[%c3_121, %c0_122, %c0_123] : memref<4x8x1xf32, #tpu.memory_space<vmem>>, vector<1x8x1xf32>
      %202 = vector.shape_cast %201 : vector<1x8x1xf32> to vector<8x1xf32>
      %203 = tpu.reciprocal %202 {approx = true} : vector<8x1xf32> -> vector<8x1xf32>
      %c3_124 = arith.constant 3 : index
      %c0_125 = arith.constant 0 : index
      %c0_126 = arith.constant 0 : index
      %204 = vector.load %arg36[%c3_124, %c0_125, %c0_126] : memref<4x8x8xf32, #tpu.memory_space<vmem>>, vector<1x8x8xf32>
      %205 = vector.shape_cast %204 : vector<1x8x8xf32> to vector<8x8xf32>
      %206 = vector.broadcast %203 : vector<8x1xf32> to vector<8x8xf32>
      %207 = arith.mulf %205, %206 : vector<8x8xf32>
      %208 = tpu.concatenate %186, %193, %200, %207 in 1 : vector<8x8xf32>, vector<8x8xf32>, vector<8x8xf32>, vector<8x8xf32> -> vector<8x32xf32>
      %209 = arith.truncf %208 : vector<8x32xf32> to vector<8x32xbf16>
      %c0_127 = arith.constant 0 : index
      %c0_128 = arith.constant 0 : index
      %210 = vector.load %arg21[%c0_127, %c0_128] : memref<32x32xbf16, #tpu.memory_space<vmem>>, vector<32x32xbf16>
      %cst_129 = arith.constant dense<0.000000e+00> : vector<8x32xf32>
      %211 = tpu.matmul %209, %210, %cst_129 {dimension_numbers = #tpu.dot_dimension_numbers<[1], [0], [0], [1], [0, 0, 1, 1], [], []>} : vector<8x32xbf16>, vector<32x32xbf16>, vector<8x32xf32> -> vector<8x32xf32>
      %c0_130 = arith.constant 0 : index
      %c0_131 = arith.constant 0 : index
      %212 = vector.load %arg22[%c0_130, %c0_131] : memref<1x32xf32, #tpu.memory_space<vmem>>, vector<1x32xf32>
      %213 = vector.broadcast %212 : vector<1x32xf32> to vector<8x32xf32>
      %214 = arith.addf %211, %213 : vector<8x32xf32>
      %c0_132 = arith.constant 0 : index
      %c0_133 = arith.constant 0 : index
      %215 = vector.load %arg32[%c0_132, %c0_133] : memref<8x32xf32, #tpu.memory_space<vmem>>, vector<8x32xf32>
      %216 = arith.addf %215, %214 : vector<8x32xf32>
      %c0_134 = arith.constant 0 : index
      %c0_135 = arith.constant 0 : index
      %217 = vector.load %arg23[%c0_134, %c0_135] : memref<1x32xf32, #tpu.memory_space<vmem>>, vector<1x32xf32>
      %c0_136 = arith.constant 0 : index
      %c0_137 = arith.constant 0 : index
      %218 = vector.load %arg24[%c0_136, %c0_137] : memref<1x32xf32, #tpu.memory_space<vmem>>, vector<1x32xf32>
      %cst_138 = arith.constant dense<0.000000e+00> : vector<8xf32>
      %219 = vector.multi_reduction <add>, %216, %cst_138 [1] : vector<8x32xf32> to vector<8xf32>
      %220 = vector.shape_cast %219 : vector<8xf32> to vector<8x1xf32>
      %cst_139 = arith.constant 3.200000e+01 : f32
      %221 = vector.broadcast %cst_139 : f32 to vector<8x1xf32>
      %222 = arith.divf %220, %221 : vector<8x1xf32>
      %223 = vector.broadcast %222 : vector<8x1xf32> to vector<8x32xf32>
      %224 = arith.subf %216, %223 : vector<8x32xf32>
      %225 = arith.mulf %224, %224 : vector<8x32xf32>
      %cst_140 = arith.constant dense<0.000000e+00> : vector<8xf32>
      %226 = vector.multi_reduction <add>, %225, %cst_140 [1] : vector<8x32xf32> to vector<8xf32>
      %227 = vector.shape_cast %226 : vector<8xf32> to vector<8x1xf32>
      %cst_141 = arith.constant 3.200000e+01 : f32
      %228 = vector.broadcast %cst_141 : f32 to vector<8x1xf32>
      %229 = arith.divf %227, %228 : vector<8x1xf32>
      %cst_142 = arith.constant 9.99999974E-6 : f32
      %230 = vector.broadcast %cst_142 : f32 to vector<8x1xf32>
      %231 = arith.addf %229, %230 : vector<8x1xf32>
      %232 = math.rsqrt %231 : vector<8x1xf32>
      %233 = vector.broadcast %232 : vector<8x1xf32> to vector<8x32xf32>
      %234 = arith.mulf %224, %233 : vector<8x32xf32>
      %235 = vector.broadcast %217 : vector<1x32xf32> to vector<8x32xf32>
      %236 = arith.mulf %234, %235 : vector<8x32xf32>
      %237 = vector.broadcast %218 : vector<1x32xf32> to vector<8x32xf32>
      %238 = arith.addf %236, %237 : vector<8x32xf32>
      %239 = arith.truncf %238 : vector<8x32xf32> to vector<8x32xbf16>
      %c0_143 = arith.constant 0 : index
      %c0_144 = arith.constant 0 : index
      %240 = vector.load %arg25[%c0_143, %c0_144] : memref<32x64xbf16, #tpu.memory_space<vmem>>, vector<32x64xbf16>
      %cst_145 = arith.constant dense<0.000000e+00> : vector<8x64xf32>
      %241 = tpu.matmul %239, %240, %cst_145 {dimension_numbers = #tpu.dot_dimension_numbers<[1], [0], [0], [1], [0, 0, 1, 1], [], []>} : vector<8x32xbf16>, vector<32x64xbf16>, vector<8x64xf32> -> vector<8x64xf32>
      %c0_146 = arith.constant 0 : index
      %c0_147 = arith.constant 0 : index
      %242 = vector.load %arg26[%c0_146, %c0_147] : memref<1x64xf32, #tpu.memory_space<vmem>>, vector<1x64xf32>
      %243 = vector.broadcast %242 : vector<1x64xf32> to vector<8x64xf32>
      %244 = arith.addf %241, %243 : vector<8x64xf32>
      %cst_148 = arith.constant 0.000000e+00 : f32
      %245 = vector.broadcast %cst_148 : f32 to vector<8x64xf32>
      %246 = arith.maximumf %244, %245 : vector<8x64xf32>
      %247 = arith.truncf %246 : vector<8x64xf32> to vector<8x64xbf16>
      %c0_149 = arith.constant 0 : index
      %c0_150 = arith.constant 0 : index
      %248 = vector.load %arg27[%c0_149, %c0_150] : memref<64x32xbf16, #tpu.memory_space<vmem>>, vector<64x32xbf16>
      %cst_151 = arith.constant dense<0.000000e+00> : vector<8x32xf32>
      %249 = tpu.matmul %247, %248, %cst_151 {dimension_numbers = #tpu.dot_dimension_numbers<[1], [0], [0], [1], [0, 0, 1, 1], [], []>} : vector<8x64xbf16>, vector<64x32xbf16>, vector<8x32xf32> -> vector<8x32xf32>
      %c0_152 = arith.constant 0 : index
      %c0_153 = arith.constant 0 : index
      %250 = vector.load %arg28[%c0_152, %c0_153] : memref<1x32xf32, #tpu.memory_space<vmem>>, vector<1x32xf32>
      %251 = vector.broadcast %250 : vector<1x32xf32> to vector<8x32xf32>
      %252 = arith.addf %249, %251 : vector<8x32xf32>
      %253 = arith.addf %238, %252 : vector<8x32xf32>
      %c0_154 = arith.constant 0 : index
      %c0_155 = arith.constant 0 : index
      %254 = vector.load %arg29[%c0_154, %c0_155] : memref<1x32xf32, #tpu.memory_space<vmem>>, vector<1x32xf32>
      %c0_156 = arith.constant 0 : index
      %c0_157 = arith.constant 0 : index
      %255 = vector.load %arg30[%c0_156, %c0_157] : memref<1x32xf32, #tpu.memory_space<vmem>>, vector<1x32xf32>
      %cst_158 = arith.constant dense<0.000000e+00> : vector<8xf32>
      %256 = vector.multi_reduction <add>, %253, %cst_158 [1] : vector<8x32xf32> to vector<8xf32>
      %257 = vector.shape_cast %256 : vector<8xf32> to vector<8x1xf32>
      %cst_159 = arith.constant 3.200000e+01 : f32
      %258 = vector.broadcast %cst_159 : f32 to vector<8x1xf32>
      %259 = arith.divf %257, %258 : vector<8x1xf32>
      %260 = vector.broadcast %259 : vector<8x1xf32> to vector<8x32xf32>
      %261 = arith.subf %253, %260 : vector<8x32xf32>
      %262 = arith.mulf %261, %261 : vector<8x32xf32>
      %cst_160 = arith.constant dense<0.000000e+00> : vector<8xf32>
      %263 = vector.multi_reduction <add>, %262, %cst_160 [1] : vector<8x32xf32> to vector<8xf32>
      %264 = vector.shape_cast %263 : vector<8xf32> to vector<8x1xf32>
      %cst_161 = arith.constant 3.200000e+01 : f32
      %265 = vector.broadcast %cst_161 : f32 to vector<8x1xf32>
      %266 = arith.divf %264, %265 : vector<8x1xf32>
      %cst_162 = arith.constant 9.99999974E-6 : f32
      %267 = vector.broadcast %cst_162 : f32 to vector<8x1xf32>
      %268 = arith.addf %266, %267 : vector<8x1xf32>
      %269 = math.rsqrt %268 : vector<8x1xf32>
      %270 = vector.broadcast %269 : vector<8x1xf32> to vector<8x32xf32>
      %271 = arith.mulf %261, %270 : vector<8x32xf32>
      %272 = vector.broadcast %254 : vector<1x32xf32> to vector<8x32xf32>
      %273 = arith.mulf %271, %272 : vector<8x32xf32>
      %274 = vector.broadcast %255 : vector<1x32xf32> to vector<8x32xf32>
      %275 = arith.addf %273, %274 : vector<8x32xf32>
      %c0_163 = arith.constant 0 : index
      %c0_164 = arith.constant 0 : index
      %c0_165 = arith.constant 0 : index
      %276 = vector.load %arg31[%c0_163, %c0_164, %c0_165] : memref<1x8x32xf32, #tpu.memory_space<vmem>>, vector<1x8x32xf32>
      %277 = vector.shape_cast %276 : vector<1x8x32xf32> to vector<8x32xf32>
      %278 = vector.shape_cast %275 : vector<8x32xf32> to vector<1x8x32xf32>
      tpu.vector_store %arg31[%c0_163, %c0_164, %c0_165], %278 {strides = array<i32>} : memref<1x8x32xf32, #tpu.memory_space<vmem>>, vector<1x8x32xf32>,
    } else {
    }
    return
  }
  func.func @transform_0(%arg0: i32, %arg1: i32) -> (i32, i32, i32) {
    %c0_i32 = arith.constant 0 : i32
    %c0_i32_0 = arith.constant 0 : i32
    %c0_i32_1 = arith.constant 0 : i32
    return %arg0, %c0_i32, %c0_i32_0 : i32, i32, i32
  }
  func.func @transform_1(%arg0: i32, %arg1: i32) -> (i32, i32, i32) {
    %c0_i32 = arith.constant 0 : i32
    %c0_i32_0 = arith.constant 0 : i32
    return %arg0, %c0_i32, %arg1 : i32, i32, i32
  }
  func.func @transform_2(%arg0: i32, %arg1: i32) -> (i32, i32) {
    %c0_i32 = arith.constant 0 : i32
    %c0_i32_0 = arith.constant 0 : i32
    return %c0_i32, %arg1 : i32, i32
  }
  func.func @transform_3(%arg0: i32, %arg1: i32) -> (i32, i32) {
    %c0_i32 = arith.constant 0 : i32
    %c0_i32_0 = arith.constant 0 : i32
    %c0_i32_1 = arith.constant 0 : i32
    return %c0_i32, %c0_i32_0 : i32, i32
  }
  func.func @transform_4(%arg0: i32, %arg1: i32) -> (i32, i32) {
    %c0_i32 = arith.constant 0 : i32
    %c0_i32_0 = arith.constant 0 : i32
    %c0_i32_1 = arith.constant 0 : i32
    return %c0_i32, %c0_i32_0 : i32, i32
  }
  func.func @transform_5(%arg0: i32, %arg1: i32) -> (i32, i32) {
    %c0_i32 = arith.constant 0 : i32
    %c0_i32_0 = arith.constant 0 : i32
    %c0_i32_1 = arith.constant 0 : i32
    return %c0_i32, %c0_i32_0 : i32, i32
  }
  func.func @transform_6(%arg0: i32, %arg1: i32) -> (i32, i32) {
    %c0_i32 = arith.constant 0 : i32
    %c0_i32_0 = arith.constant 0 : i32
    %c0_i32_1 = arith.constant 0 : i32
    return %c0_i32, %c0_i32_0 : i32, i32
  }
  func.func @transform_7(%arg0: i32, %arg1: i32) -> (i32, i32) {
    %c0_i32 = arith.constant 0 : i32
    %c0_i32_0 = arith.constant 0 : i32
    %c0_i32_1 = arith.constant 0 : i32
    return %c0_i32, %c0_i32_0 : i32, i32
  }
  func.func @transform_8(%arg0: i32, %arg1: i32) -> (i32, i32) {
    %c0_i32 = arith.constant 0 : i32
    %c0_i32_0 = arith.constant 0 : i32
    %c0_i32_1 = arith.constant 0 : i32
    return %c0_i32, %c0_i32_0 : i32, i32
  }
  func.func @transform_9(%arg0: i32, %arg1: i32) -> (i32, i32) {
    %c0_i32 = arith.constant 0 : i32
    %c0_i32_0 = arith.constant 0 : i32
    %c0_i32_1 = arith.constant 0 : i32
    return %c0_i32, %c0_i32_0 : i32, i32
  }
  func.func @transform_10(%arg0: i32, %arg1: i32) -> (i32, i32) {
    %c0_i32 = arith.constant 0 : i32
    %c0_i32_0 = arith.constant 0 : i32
    %c0_i32_1 = arith.constant 0 : i32
    return %c0_i32, %c0_i32_0 : i32, i32
  }
  func.func @transform_11(%arg0: i32, %arg1: i32) -> (i32, i32) {
    %c0_i32 = arith.constant 0 : i32
    %c0_i32_0 = arith.constant 0 : i32
    %c0_i32_1 = arith.constant 0 : i32
    return %c0_i32, %c0_i32_0 : i32, i32
  }
  func.func @transform_12(%arg0: i32, %arg1: i32) -> (i32, i32) {
    %c0_i32 = arith.constant 0 : i32
    %c0_i32_0 = arith.constant 0 : i32
    %c0_i32_1 = arith.constant 0 : i32
    return %c0_i32, %c0_i32_0 : i32, i32
  }
  func.func @transform_13(%arg0: i32, %arg1: i32) -> (i32, i32) {
    %c0_i32 = arith.constant 0 : i32
    %c0_i32_0 = arith.constant 0 : i32
    %c0_i32_1 = arith.constant 0 : i32
    return %c0_i32, %c0_i32_0 : i32, i32
  }
  func.func @transform_14(%arg0: i32, %arg1: i32) -> (i32, i32) {
    %c0_i32 = arith.constant 0 : i32
    %c0_i32_0 = arith.constant 0 : i32
    %c0_i32_1 = arith.constant 0 : i32
    return %c0_i32, %c0_i32_0 : i32, i32
  }
  func.func @transform_15(%arg0: i32, %arg1: i32) -> (i32, i32) {
    %c0_i32 = arith.constant 0 : i32
    %c0_i32_0 = arith.constant 0 : i32
    %c0_i32_1 = arith.constant 0 : i32
    return %c0_i32, %c0_i32_0 : i32, i32
  }
  func.func @transform_16(%arg0: i32, %arg1: i32) -> (i32, i32) {
    %c0_i32 = arith.constant 0 : i32
    %c0_i32_0 = arith.constant 0 : i32
    %c0_i32_1 = arith.constant 0 : i32
    return %c0_i32, %c0_i32_0 : i32, i32
  }
  func.func @transform_17(%arg0: i32, %arg1: i32) -> (i32, i32) {
    %c0_i32 = arith.constant 0 : i32
    %c0_i32_0 = arith.constant 0 : i32
    %c0_i32_1 = arith.constant 0 : i32
    return %c0_i32, %c0_i32_0 : i32, i32
  }
  func.func @transform_18(%arg0: i32, %arg1: i32) -> (i32, i32) {
    %c0_i32 = arith.constant 0 : i32
    %c0_i32_0 = arith.constant 0 : i32
    %c0_i32_1 = arith.constant 0 : i32
    return %c0_i32, %c0_i32_0 : i32, i32
  }
  func.func @transform_19(%arg0: i32, %arg1: i32) -> (i32, i32) {
    %c0_i32 = arith.constant 0 : i32
    %c0_i32_0 = arith.constant 0 : i32
    %c0_i32_1 = arith.constant 0 : i32
    return %c0_i32, %c0_i32_0 : i32, i32
  }
  func.func @transform_20(%arg0: i32, %arg1: i32) -> (i32, i32) {
    %c0_i32 = arith.constant 0 : i32
    %c0_i32_0 = arith.constant 0 : i32
    %c0_i32_1 = arith.constant 0 : i32
    return %c0_i32, %c0_i32_0 : i32, i32
  }
  func.func @transform_21(%arg0: i32, %arg1: i32) -> (i32, i32) {
    %c0_i32 = arith.constant 0 : i32
    %c0_i32_0 = arith.constant 0 : i32
    %c0_i32_1 = arith.constant 0 : i32
    return %c0_i32, %c0_i32_0 : i32, i32
  }
  func.func @transform_22(%arg0: i32, %arg1: i32) -> (i32, i32) {
    %c0_i32 = arith.constant 0 : i32
    %c0_i32_0 = arith.constant 0 : i32
    %c0_i32_1 = arith.constant 0 : i32
    return %c0_i32, %c0_i32_0 : i32, i32
  }
  func.func @transform_23(%arg0: i32, %arg1: i32) -> (i32, i32) {
    %c0_i32 = arith.constant 0 : i32
    %c0_i32_0 = arith.constant 0 : i32
    %c0_i32_1 = arith.constant 0 : i32
    return %c0_i32, %c0_i32_0 : i32, i32
  }
  func.func @transform_24(%arg0: i32, %arg1: i32) -> (i32, i32) {
    %c0_i32 = arith.constant 0 : i32
    %c0_i32_0 = arith.constant 0 : i32
    %c0_i32_1 = arith.constant 0 : i32
    return %c0_i32, %c0_i32_0 : i32, i32
  }
  func.func @transform_25(%arg0: i32, %arg1: i32) -> (i32, i32) {
    %c0_i32 = arith.constant 0 : i32
    %c0_i32_0 = arith.constant 0 : i32
    %c0_i32_1 = arith.constant 0 : i32
    return %c0_i32, %c0_i32_0 : i32, i32
  }
  func.func @transform_26(%arg0: i32, %arg1: i32) -> (i32, i32) {
    %c0_i32 = arith.constant 0 : i32
    %c0_i32_0 = arith.constant 0 : i32
    %c0_i32_1 = arith.constant 0 : i32
    return %c0_i32, %c0_i32_0 : i32, i32
  }
  func.func @transform_27(%arg0: i32, %arg1: i32) -> (i32, i32) {
    %c0_i32 = arith.constant 0 : i32
    %c0_i32_0 = arith.constant 0 : i32
    %c0_i32_1 = arith.constant 0 : i32
    return %c0_i32, %c0_i32_0 : i32, i32
  }
  func.func @transform_28(%arg0: i32, %arg1: i32) -> (i32, i32) {
    %c0_i32 = arith.constant 0 : i32
    %c0_i32_0 = arith.constant 0 : i32
    %c0_i32_1 = arith.constant 0 : i32
    return %c0_i32, %c0_i32_0 : i32, i32
  }
  func.func @transform_29(%arg0: i32, %arg1: i32) -> (i32, i32, i32) {
    %c0_i32 = arith.constant 0 : i32
    %c0_i32_0 = arith.constant 0 : i32
    %c0_i32_1 = arith.constant 0 : i32
    return %arg0, %c0_i32, %c0_i32_0 : i32, i32, i32
  }
}

</mosaic_0001>

<llo_original>
// kernel: tpu_custom_call.1
$region0: #{tpu_custom_call.1}
  #allocation0 [shape = 'u32[]', space=smem, size = 0x4, offset = 0x4, fixed_abs, tag = 'smem constant byte address 0x4 - core index']
  #allocation1 [shape = 'u32[144,128]{1,0:T(1,128)}', space=vmem, size = 0x12000, scoped, tag = 'internal scratch']
  #allocation2 [shape = 'f32[8,32]{1,0:T(8,128)}', space=vmem, size = 0x1000, scoped, tag = 'scratch operand']
  #allocation3 [shape = 'f32[8,32]{1,0:T(8,128)}', space=vmem, size = 0x1000, scoped, tag = 'scratch operand']
  #allocation4 [shape = 'f32[4,8,1]{2,1,0:T(8,128)}', space=vmem, size = 0x4000, scoped, tag = 'scratch operand']
  #allocation5 [shape = 'f32[4,8,1]{2,1,0:T(8,128)}', space=vmem, size = 0x4000, scoped, tag = 'scratch operand']
  #allocation6 [shape = 'f32[4,8,8]{2,1,0:T(8,128)}', space=vmem, size = 0x4000, scoped, tag = 'scratch operand']
  %s0 = inlined_call_operand.smem [shape: u32[30], index: -1, kind: input, shape index: {}]
  %s1 = sld [smem:[%s0]]
  %s2 = scalar_lea.smem %s0, 1
  %s3 = sld [smem:[%s2]]
  %s4 = scalar_lea.smem %s0, 2
  %s5 = sld [smem:[%s4]]
  %s6 = scalar_lea.smem %s0, 3
  %s7 = sld [smem:[%s6]]
  %s8 = scalar_lea.smem %s0, 4
  %s9 = sld [smem:[%s8]]
  %s10 = scalar_lea.smem %s0, 5
  %s11 = sld [smem:[%s10]]
  %s12 = scalar_lea.smem %s0, 6
  %s13 = sld [smem:[%s12]]
  %s14 = scalar_lea.smem %s0, 7
  %s15 = sld [smem:[%s14]]
  %s16 = scalar_lea.smem %s0, 8
  %s17 = sld [smem:[%s16]]
  %s18 = scalar_lea.smem %s0, 9
  %s19 = sld [smem:[%s18]]
  %s20 = scalar_lea.smem %s0, 10
  %s21 = sld [smem:[%s20]]
  %s22 = scalar_lea.smem %s0, 11
  %s23 = sld [smem:[%s22]]
  %s24 = scalar_lea.smem %s0, 12
  %s25 = sld [smem:[%s24]]
  %s26 = scalar_lea.smem %s0, 13
  %s27 = sld [smem:[%s26]]
  %s28 = scalar_lea.smem %s0, 14
  %s29 = sld [smem:[%s28]]
  %s30 = scalar_lea.smem %s0, 15
  %s31 = sld [smem:[%s30]]
  %s32 = scalar_lea.smem %s0, 16
  %s33 = sld [smem:[%s32]]
  %s34 = scalar_lea.smem %s0, 17
  %s35 = sld [smem:[%s34]]
  %s36 = scalar_lea.smem %s0, 18
  %s37 = sld [smem:[%s36]]
  %s38 = scalar_lea.smem %s0, 19
  %s39 = sld [smem:[%s38]]
  %s40 = scalar_lea.smem %s0, 20
  %s41 = sld [smem:[%s40]]
  %s42 = scalar_lea.smem %s0, 21
  %s43 = sld [smem:[%s42]]
  %s44 = scalar_lea.smem %s0, 22
  %s45 = sld [smem:[%s44]]
  %s46 = scalar_lea.smem %s0, 23
  %s47 = sld [smem:[%s46]]
  %s48 = scalar_lea.smem %s0, 24
  %s49 = sld [smem:[%s48]]
  %s50 = scalar_lea.smem %s0, 25
  %s51 = sld [smem:[%s50]]
  %s52 = scalar_lea.smem %s0, 26
  %s53 = sld [smem:[%s52]]
  %s54 = scalar_lea.smem %s0, 27
  %s55 = sld [smem:[%s54]]
  %s56 = scalar_lea.smem %s0, 28
  %s57 = sld [smem:[%s56]]
  %s58 = scalar_lea.smem %s0, 29
  %s59 = sld [smem:[%s58]]
  %s60 = sld [smem:[#allocation0]]
  $region173: #{tpu_custom_call.1} parent=0
    _
  %s62 = ssub.s32 1, %s60
  %s63 = scalar_select 0, %s62, %s60
  $region1: #{tpu_custom_call.1} parent=0
    #allocation7 [shape = 'u8[4096]{0}', space=vmem, size = 0x1000, scoped, tag = 'input window, operand 2, single buffered']
    #allocation8 [shape = 's32[2]{0}', space=sflag, size = 0x8, scoped, tag = 'scoped memory for tpu_custom_call.1']
    #allocation9 [shape = 's32[2]{0}', space=sflag, size = 0x8, scoped, tag = 'scoped memory for tpu_custom_call.1']
    #allocation10 [shape = 'u8[512]{0}', space=vmem, size = 0x400, scoped, tag = 'input window, operand 6, single buffered']
    #allocation11 [shape = 's32[1]{0}', space=sflag, size = 0x4, scoped, tag = 'scoped memory for tpu_custom_call.1']
    #allocation12 [shape = 'u8[512]{0}', space=vmem, size = 0x400, scoped, tag = 'input window, operand 7, single buffered']
    #allocation13 [shape = 'u8[512]{0}', space=vmem, size = 0x400, scoped, tag = 'input window, operand 8, single buffered']
    #allocation14 [shape = 's32[1]{0}', space=sflag, size = 0x4, scoped, tag = 'scoped memory for tpu_custom_call.1']
    #allocation15 [shape = 'u8[8192]{0}', space=vmem, size = 0x2000, scoped, tag = 'output window, operand 0']
    %64 = vsyncpa [#allocation8], 0
    %65 = vsyncpa [#allocation11], 0
    %66 = vsyncpa [#allocation14], 0
    %67 = vsyncpa [#allocation9], 0
    %s68 = scalar_lea.sflag [#allocation9], 1
    %69 = vsyncpa %s68, 0
    loop: start=0, step=1, limit=4
    $region2: #{tpu_custom_call.1} parent=1 // loop_pre_header
      _
    $region3: #{tpu_custom_call.1} parent=1 // loop_header
      %s71 = sphi 0, %s75
      %p72 = scmp.ge.s32.totalorder %s71, 4
      %s78 = sphi 0, %s90
      %s79 = sphi 0, %s86
      %s80 = sphi 0, %s78
      %s81 = sphi 0, %s79
      %s82 = sphi 0, %s80
      %s83 = sphi 0, %s81
      %s93 = sphi 0, %s95
      %s96 = sphi 0, %s93
      %s97 = sphi 0, %s96
      %s113 = sphi 0, %s97
      %s121 = sphi 0, %s123
      %s124 = sphi 0, %s121
      %s125 = sphi 0, %s124
      %s141 = sphi 0, %s125
      %s147 = sphi 0, %s149
      %s150 = sphi 0, %s147
      %s151 = sphi 0, %s150
      %s167 = sphi 0, %s151
      %s171 = sphi 0, %s171
      %s173 = sphi 0, %s171
      %s174 = sphi 0, %s173
      %s188 = sphi 0, %s174
      %s192 = sphi 0, %s192
      %s194 = sphi 0, %s192
      %s195 = sphi 0, %s194
      %s209 = sphi 0, %s195
      %s213 = sphi 0, %s213
      %s215 = sphi 0, %s213
      %s216 = sphi 0, %s215
      %s230 = sphi 0, %s216
      %s234 = sphi 0, %s234
      %s236 = sphi 0, %s234
      %s237 = sphi 0, %s236
      %s251 = sphi 0, %s237
      %s255 = sphi 0, %s255
      %s257 = sphi 0, %s255
      %s258 = sphi 0, %s257
      %s272 = sphi 0, %s258
      %s276 = sphi 0, %s276
      %s278 = sphi 0, %s276
      %s279 = sphi 0, %s278
      %s293 = sphi 0, %s279
      %s297 = sphi 0, %s297
      %s299 = sphi 0, %s297
      %s300 = sphi 0, %s299
      %s314 = sphi 0, %s300
      %s318 = sphi 0, %s318
      %s320 = sphi 0, %s318
      %s321 = sphi 0, %s320
      %s335 = sphi 0, %s321
      %s339 = sphi 0, %s339
      %s341 = sphi 0, %s339
      %s342 = sphi 0, %s341
      %s356 = sphi 0, %s342
      %s360 = sphi 0, %s360
      %s362 = sphi 0, %s360
      %s363 = sphi 0, %s362
      %s377 = sphi 0, %s363
      %s381 = sphi 0, %s381
      %s383 = sphi 0, %s381
      %s384 = sphi 0, %s383
      %s398 = sphi 0, %s384
      %s402 = sphi 0, %s402
      %s404 = sphi 0, %s402
      %s405 = sphi 0, %s404
      %s419 = sphi 0, %s405
      %s423 = sphi 0, %s423
      %s425 = sphi 0, %s423
      %s426 = sphi 0, %s425
      %s440 = sphi 0, %s426
      %s444 = sphi 0, %s444
      %s446 = sphi 0, %s444
      %s447 = sphi 0, %s446
      %s461 = sphi 0, %s447
      %s465 = sphi 0, %s465
      %s467 = sphi 0, %s465
      %s468 = sphi 0, %s467
      %s482 = sphi 0, %s468
      %s486 = sphi 0, %s486
      %s488 = sphi 0, %s486
      %s489 = sphi 0, %s488
      %s503 = sphi 0, %s489
      %s507 = sphi 0, %s507
      %s509 = sphi 0, %s507
      %s510 = sphi 0, %s509
      %s524 = sphi 0, %s510
      %s528 = sphi 0, %s528
      %s530 = sphi 0, %s528
      %s531 = sphi 0, %s530
      %s545 = sphi 0, %s531
      %s549 = sphi 0, %s549
      %s551 = sphi 0, %s549
      %s552 = sphi 0, %s551
      %s566 = sphi 0, %s552
      %s570 = sphi 0, %s570
      %s572 = sphi 0, %s570
      %s573 = sphi 0, %s572
      %s587 = sphi 0, %s573
      %s591 = sphi 0, %s591
      %s593 = sphi 0, %s591
      %s594 = sphi 0, %s593
      %s608 = sphi 0, %s594
      %s612 = sphi 0, %s612
      %s614 = sphi 0, %s612
      %s615 = sphi 0, %s614
      %s629 = sphi 0, %s615
      %s633 = sphi 0, %s633
      %s635 = sphi 0, %s633
      %s636 = sphi 0, %s635
      %s650 = sphi 0, %s636
      %s654 = sphi 0, %s654
      %s656 = sphi 0, %s654
      %s657 = sphi 0, %s656
      %s671 = sphi 0, %s657
      %s675 = sphi 0, %s675
      %s677 = sphi 0, %s675
      %s678 = sphi 0, %s677
      %s692 = sphi 0, %s678
      %s696 = sphi 0, %s696
      %s698 = sphi 0, %s696
      %s699 = sphi 0, %s698
      %s713 = sphi 0, %s699
      %s719 = sphi 0, %s721
      %s722 = sphi 0, %s719
      %s723 = sphi 0, %s722
      %s739 = sphi 0, %s723
    $region4: #{tpu_custom_call.1} parent=1 // loop_header_branch
      %74 = sbr.rel (%p72) target = $region8
    $region5: #{tpu_custom_call.1} parent=1 // loop_body
      %s76 = ssub.s32 %s71, 1
      %s77 = ssub.s32 %s71, 2
      %s84 = sadd.s32 1, %s79
      %p85 = scmp.ge.s32.totalorder %s84, 1
      %s86 = scalar_select %p85, 0, %s84
      %s87 = sadd.s32 1, %s78
      %s88 = scalar_select %p85, %s87, %s78
      %p89 = scmp.ge.s32.totalorder %s88, 2
      %s90 = scalar_select %p89, 0, %s88
      %s91 = ssub.s32 %s78, %s90
      %p92 = scmp.eq.s32.totalorder %s91, 0
      %s94 = sadd.s32 %s93, 1
      %s95 = scalar_select %p92, %s93, %s94
      %p98 = pneg %p92
      %p99 = scmp.eq.s32.totalorder %s71, 1
      %p100 = por %p98, %p99
      %p101 = scmp.ne.s32.totalorder %s93, %s96
      %p102 = scmp.eq.s32.totalorder %s71, 0
      %p103 = por %p101, %p102
      %p104 = scmp.ne.s32.totalorder %s93, %s96
      %p105 = scmp.eq.s32.totalorder %s76, 1
      %p106 = por %p104, %p105
      %p107 = scmp.ne.s32.totalorder %s96, %s97
      %p108 = scmp.eq.s32.totalorder %s76, 0
      %p109 = por %p107, %p108
      %p110 = scmp.ne.s32.totalorder %s96, %s97
      %p111 = scmp.eq.s32.totalorder %s77, 1
      %p112 = por %p110, %p111
      %p114 = scmp.ne.s32.totalorder %s97, %s113
      %p115 = scmp.eq.s32.totalorder %s77, 0
      %p116 = por %p114, %p115
      %s117 = ssub.s32 %s78, %s90
      %s118 = ssub.s32 %s79, %s86
      %s119 = sor.u32 %s117, %s118
      %p120 = scmp.eq.s32.totalorder %s119, 0
      %s122 = sadd.s32 %s121, 1
      %s123 = scalar_select %p120, %s121, %s122
      %p126 = pneg %p120
      %p127 = scmp.eq.s32.totalorder %s71, 1
      %p128 = por %p126, %p127
      %p129 = scmp.ne.s32.totalorder %s121, %s124
      %p130 = scmp.eq.s32.totalorder %s71, 0
      %p131 = por %p129, %p130
      %p132 = scmp.ne.s32.totalorder %s121, %s124
      %p133 = scmp.eq.s32.totalorder %s76, 1
      %p134 = por %p132, %p133
      %p135 = scmp.ne.s32.totalorder %s124, %s125
      %p136 = scmp.eq.s32.totalorder %s76, 0
      %p137 = por %p135, %p136
      %p138 = scmp.ne.s32.totalorder %s124, %s125
      %p139 = scmp.eq.s32.totalorder %s77, 1
      %p140 = por %p138, %p139
      %p142 = scmp.ne.s32.totalorder %s125, %s141
      %p143 = scmp.eq.s32.totalorder %s77, 0
      %p144 = por %p142, %p143
      %s145 = ssub.s32 %s79, %s86
      %p146 = scmp.eq.s32.totalorder %s145, 0
      %s148 = sadd.s32 %s147, 1
      %s149 = scalar_select %p146, %s147, %s148
      %p152 = pneg %p146
      %p153 = scmp.eq.s32.totalorder %s71, 1
      %p154 = por %p152, %p153
      %p155 = scmp.ne.s32.totalorder %s147, %s150
      %p156 = scmp.eq.s32.totalorder %s71, 0
      %p157 = por %p155, %p156
      %p158 = scmp.ne.s32.totalorder %s147, %s150
      %p159 = scmp.eq.s32.totalorder %s76, 1
      %p160 = por %p158, %p159
      %p161 = scmp.ne.s32.totalorder %s150, %s151
      %p162 = scmp.eq.s32.totalorder %s76, 0
      %p163 = por %p161, %p162
      %p164 = scmp.ne.s32.totalorder %s150, %s151
      %p165 = scmp.eq.s32.totalorder %s77, 1
      %p166 = por %p164, %p165
      %p168 = scmp.ne.s32.totalorder %s151, %s167
      %p169 = scmp.eq.s32.totalorder %s77, 0
      %p170 = por %p168, %p169
      %s172 = sadd.s32 %s171, 1
      %p175 = scmp.eq.s32.totalorder %s71, 1
      %p176 = scmp.ne.s32.totalorder %s171, %s173
      %p177 = scmp.eq.s32.totalorder %s71, 0
      %p178 = por %p176, %p177
      %p179 = scmp.ne.s32.totalorder %s171, %s173
      %p180 = scmp.eq.s32.totalorder %s76, 1
      %p181 = por %p179, %p180
      %p182 = scmp.ne.s32.totalorder %s173, %s174
      %p183 = scmp.eq.s32.totalorder %s76, 0
      %p184 = por %p182, %p183
      %p185 = scmp.ne.s32.totalorder %s173, %s174
      %p186 = scmp.eq.s32.totalorder %s77, 1
      %p187 = por %p185, %p186
      %p189 = scmp.ne.s32.totalorder %s174, %s188
      %p190 = scmp.eq.s32.totalorder %s77, 0
      %p191 = por %p189, %p190
      %s193 = sadd.s32 %s192, 1
      %p196 = scmp.eq.s32.totalorder %s71, 1
      %p197 = scmp.ne.s32.totalorder %s192, %s194
      %p198 = scmp.eq.s32.totalorder %s71, 0
      %p199 = por %p197, %p198
      %p200 = scmp.ne.s32.totalorder %s192, %s194
      %p201 = scmp.eq.s32.totalorder %s76, 1
      %p202 = por %p200, %p201
      %p203 = scmp.ne.s32.totalorder %s194, %s195
      %p204 = scmp.eq.s32.totalorder %s76, 0
      %p205 = por %p203, %p204
      %p206 = scmp.ne.s32.totalorder %s194, %s195
      %p207 = scmp.eq.s32.totalorder %s77, 1
      %p208 = por %p206, %p207
      %p210 = scmp.ne.s32.totalorder %s195, %s209
      %p211 = scmp.eq.s32.totalorder %s77, 0
      %p212 = por %p210, %p211
      %s214 = sadd.s32 %s213, 1
      %p217 = scmp.eq.s32.totalorder %s71, 1
      %p218 = scmp.ne.s32.totalorder %s213, %s215
      %p219 = scmp.eq.s32.totalorder %s71, 0
      %p220 = por %p218, %p219
      %p221 = scmp.ne.s32.totalorder %s213, %s215
      %p222 = scmp.eq.s32.totalorder %s76, 1
      %p223 = por %p221, %p222
      %p224 = scmp.ne.s32.totalorder %s215, %s216
      %p225 = scmp.eq.s32.totalorder %s76, 0
      %p226 = por %p224, %p225
      %p227 = scmp.ne.s32.totalorder %s215, %s216
      %p228 = scmp.eq.s32.totalorder %s77, 1
      %p229 = por %p227, %p228
      %p231 = scmp.ne.s32.totalorder %s216, %s230
      %p232 = scmp.eq.s32.totalorder %s77, 0
      %p233 = por %p231, %p232
      %s235 = sadd.s32 %s234, 1
      %p238 = scmp.eq.s32.totalorder %s71, 1
      %p239 = scmp.ne.s32.totalorder %s234, %s236
      %p240 = scmp.eq.s32.totalorder %s71, 0
      %p241 = por %p239, %p240
      %p242 = scmp.ne.s32.totalorder %s234, %s236
      %p243 = scmp.eq.s32.totalorder %s76, 1
      %p244 = por %p242, %p243
      %p245 = scmp.ne.s32.totalorder %s236, %s237
      %p246 = scmp.eq.s32.totalorder %s76, 0
      %p247 = por %p245, %p246
      %p248 = scmp.ne.s32.totalorder %s236, %s237
      %p249 = scmp.eq.s32.totalorder %s77, 1
      %p250 = por %p248, %p249
      %p252 = scmp.ne.s32.totalorder %s237, %s251
      %p253 = scmp.eq.s32.totalorder %s77, 0
      %p254 = por %p252, %p253
      %s256 = sadd.s32 %s255, 1
      %p259 = scmp.eq.s32.totalorder %s71, 1
      %p260 = scmp.ne.s32.totalorder %s255, %s257
      %p261 = scmp.eq.s32.totalorder %s71, 0
      %p262 = por %p260, %p261
      %p263 = scmp.ne.s32.totalorder %s255, %s257
      %p264 = scmp.eq.s32.totalorder %s76, 1
      %p265 = por %p263, %p264
      %p266 = scmp.ne.s32.totalorder %s257, %s258
      %p267 = scmp.eq.s32.totalorder %s76, 0
      %p268 = por %p266, %p267
      %p269 = scmp.ne.s32.totalorder %s257, %s258
      %p270 = scmp.eq.s32.totalorder %s77, 1
      %p271 = por %p269, %p270
      %p273 = scmp.ne.s32.totalorder %s258, %s272
      %p274 = scmp.eq.s32.totalorder %s77, 0
      %p275 = por %p273, %p274
      %s277 = sadd.s32 %s276, 1
      %p280 = scmp.eq.s32.totalorder %s71, 1
      %p281 = scmp.ne.s32.totalorder %s276, %s278
      %p282 = scmp.eq.s32.totalorder %s71, 0
      %p283 = por %p281, %p282
      %p284 = scmp.ne.s32.totalorder %s276, %s278
      %p285 = scmp.eq.s32.totalorder %s76, 1
      %p286 = por %p284, %p285
      %p287 = scmp.ne.s32.totalorder %s278, %s279
      %p288 = scmp.eq.s32.totalorder %s76, 0
      %p289 = por %p287, %p288
      %p290 = scmp.ne.s32.totalorder %s278, %s279
      %p291 = scmp.eq.s32.totalorder %s77, 1
      %p292 = por %p290, %p291
      %p294 = scmp.ne.s32.totalorder %s279, %s293
      %p295 = scmp.eq.s32.totalorder %s77, 0
      %p296 = por %p294, %p295
      %s298 = sadd.s32 %s297, 1
      %p301 = scmp.eq.s32.totalorder %s71, 1
      %p302 = scmp.ne.s32.totalorder %s297, %s299
      %p303 = scmp.eq.s32.totalorder %s71, 0
      %p304 = por %p302, %p303
      %p305 = scmp.ne.s32.totalorder %s297, %s299
      %p306 = scmp.eq.s32.totalorder %s76, 1
      %p307 = por %p305, %p306
      %p308 = scmp.ne.s32.totalorder %s299, %s300
      %p309 = scmp.eq.s32.totalorder %s76, 0
      %p310 = por %p308, %p309
      %p311 = scmp.ne.s32.totalorder %s299, %s300
      %p312 = scmp.eq.s32.totalorder %s77, 1
      %p313 = por %p311, %p312
      %p315 = scmp.ne.s32.totalorder %s300, %s314
      %p316 = scmp.eq.s32.totalorder %s77, 0
      %p317 = por %p315, %p316
      %s319 = sadd.s32 %s318, 1
      %p322 = scmp.eq.s32.totalorder %s71, 1
      %p323 = scmp.ne.s32.totalorder %s318, %s320
      %p324 = scmp.eq.s32.totalorder %s71, 0
      %p325 = por %p323, %p324
      %p326 = scmp.ne.s32.totalorder %s318, %s320
      %p327 = scmp.eq.s32.totalorder %s76, 1
      %p328 = por %p326, %p327
      %p329 = scmp.ne.s32.totalorder %s320, %s321
      %p330 = scmp.eq.s32.totalorder %s76, 0
      %p331 = por %p329, %p330
      %p332 = scmp.ne.s32.totalorder %s320, %s321
      %p333 = scmp.eq.s32.totalorder %s77, 1
      %p334 = por %p332, %p333
      %p336 = scmp.ne.s32.totalorder %s321, %s335
      %p337 = scmp.eq.s32.totalorder %s77, 0
      %p338 = por %p336, %p337
      %s340 = sadd.s32 %s339, 1
      %p343 = scmp.eq.s32.totalorder %s71, 1
      %p344 = scmp.ne.s32.totalorder %s339, %s341
      %p345 = scmp.eq.s32.totalorder %s71, 0
      %p346 = por %p344, %p345
      %p347 = scmp.ne.s32.totalorder %s339, %s341
      %p348 = scmp.eq.s32.totalorder %s76, 1
      %p349 = por %p347, %p348
      %p350 = scmp.ne.s32.totalorder %s341, %s342
      %p351 = scmp.eq.s32.totalorder %s76, 0
      %p352 = por %p350, %p351
      %p353 = scmp.ne.s32.totalorder %s341, %s342
      %p354 = scmp.eq.s32.totalorder %s77, 1
      %p355 = por %p353, %p354
      %p357 = scmp.ne.s32.totalorder %s342, %s356
      %p358 = scmp.eq.s32.totalorder %s77, 0
      %p359 = por %p357, %p358
      %s361 = sadd.s32 %s360, 1
      %p364 = scmp.eq.s32.totalorder %s71, 1
      %p365 = scmp.ne.s32.totalorder %s360, %s362
      %p366 = scmp.eq.s32.totalorder %s71, 0
      %p367 = por %p365, %p366
      %p368 = scmp.ne.s32.totalorder %s360, %s362
      %p369 = scmp.eq.s32.totalorder %s76, 1
      %p370 = por %p368, %p369
      %p371 = scmp.ne.s32.totalorder %s362, %s363
      %p372 = scmp.eq.s32.totalorder %s76, 0
      %p373 = por %p371, %p372
      %p374 = scmp.ne.s32.totalorder %s362, %s363
      %p375 = scmp.eq.s32.totalorder %s77, 1
      %p376 = por %p374, %p375
      %p378 = scmp.ne.s32.totalorder %s363, %s377
      %p379 = scmp.eq.s32.totalorder %s77, 0
      %p380 = por %p378, %p379
      %s382 = sadd.s32 %s381, 1
      %p385 = scmp.eq.s32.totalorder %s71, 1
      %p386 = scmp.ne.s32.totalorder %s381, %s383
      %p387 = scmp.eq.s32.totalorder %s71, 0
      %p388 = por %p386, %p387
      %p389 = scmp.ne.s32.totalorder %s381, %s383
      %p390 = scmp.eq.s32.totalorder %s76, 1
      %p391 = por %p389, %p390
      %p392 = scmp.ne.s32.totalorder %s383, %s384
      %p393 = scmp.eq.s32.totalorder %s76, 0
      %p394 = por %p392, %p393
      %p395 = scmp.ne.s32.totalorder %s383, %s384
      %p396 = scmp.eq.s32.totalorder %s77, 1
      %p397 = por %p395, %p396
      %p399 = scmp.ne.s32.totalorder %s384, %s398
      %p400 = scmp.eq.s32.totalorder %s77, 0
      %p401 = por %p399, %p400
      %s403 = sadd.s32 %s402, 1
      %p406 = scmp.eq.s32.totalorder %s71, 1
      %p407 = scmp.ne.s32.totalorder %s402, %s404
      %p408 = scmp.eq.s32.totalorder %s71, 0
      %p409 = por %p407, %p408
      %p410 = scmp.ne.s32.totalorder %s402, %s404
      %p411 = scmp.eq.s32.totalorder %s76, 1
      %p412 = por %p410, %p411
      %p413 = scmp.ne.s32.totalorder %s404, %s405
      %p414 = scmp.eq.s32.totalorder %s76, 0
      %p415 = por %p413, %p414
      %p416 = scmp.ne.s32.totalorder %s404, %s405
      %p417 = scmp.eq.s32.totalorder %s77, 1
      %p418 = por %p416, %p417
      %p420 = scmp.ne.s32.totalorder %s405, %s419
      %p421 = scmp.eq.s32.totalorder %s77, 0
      %p422 = por %p420, %p421
      %s424 = sadd.s32 %s423, 1
      %p427 = scmp.eq.s32.totalorder %s71, 1
      %p428 = scmp.ne.s32.totalorder %s423, %s425
      %p429 = scmp.eq.s32.totalorder %s71, 0
      %p430 = por %p428, %p429
      %p431 = scmp.ne.s32.totalorder %s423, %s425
      %p432 = scmp.eq.s32.totalorder %s76, 1
      %p433 = por %p431, %p432
      %p434 = scmp.ne.s32.totalorder %s425, %s426
      %p435 = scmp.eq.s32.totalorder %s76, 0
      %p436 = por %p434, %p435
      %p437 = scmp.ne.s32.totalorder %s425, %s426
      %p438 = scmp.eq.s32.totalorder %s77, 1
      %p439 = por %p437, %p438
      %p441 = scmp.ne.s32.totalorder %s426, %s440
      %p442 = scmp.eq.s32.totalorder %s77, 0
      %p443 = por %p441, %p442
      %s445 = sadd.s32 %s444, 1
      %p448 = scmp.eq.s32.totalorder %s71, 1
      %p449 = scmp.ne.s32.totalorder %s444, %s446
      %p450 = scmp.eq.s32.totalorder %s71, 0
      %p451 = por %p449, %p450
      %p452 = scmp.ne.s32.totalorder %s444, %s446
      %p453 = scmp.eq.s32.totalorder %s76, 1
      %p454 = por %p452, %p453
      %p455 = scmp.ne.s32.totalorder %s446, %s447
      %p456 = scmp.eq.s32.totalorder %s76, 0
      %p457 = por %p455, %p456
      %p458 = scmp.ne.s32.totalorder %s446, %s447
      %p459 = scmp.eq.s32.totalorder %s77, 1
      %p460 = por %p458, %p459
      %p462 = scmp.ne.s32.totalorder %s447, %s461
      %p463 = scmp.eq.s32.totalorder %s77, 0
      %p464 = por %p462, %p463
      %s466 = sadd.s32 %s465, 1
      %p469 = scmp.eq.s32.totalorder %s71, 1
      %p470 = scmp.ne.s32.totalorder %s465, %s467
      %p471 = scmp.eq.s32.totalorder %s71, 0
      %p472 = por %p470, %p471
      %p473 = scmp.ne.s32.totalorder %s465, %s467
      %p474 = scmp.eq.s32.totalorder %s76, 1
      %p475 = por %p473, %p474
      %p476 = scmp.ne.s32.totalorder %s467, %s468
      %p477 = scmp.eq.s32.totalorder %s76, 0
      %p478 = por %p476, %p477
      %p479 = scmp.ne.s32.totalorder %s467, %s468
      %p480 = scmp.eq.s32.totalorder %s77, 1
      %p481 = por %p479, %p480
      %p483 = scmp.ne.s32.totalorder %s468, %s482
      %p484 = scmp.eq.s32.totalorder %s77, 0
      %p485 = por %p483, %p484
      %s487 = sadd.s32 %s486, 1
      %p490 = scmp.eq.s32.totalorder %s71, 1
      %p491 = scmp.ne.s32.totalorder %s486, %s488
      %p492 = scmp.eq.s32.totalorder %s71, 0
      %p493 = por %p491, %p492
      %p494 = scmp.ne.s32.totalorder %s486, %s488
      %p495 = scmp.eq.s32.totalorder %s76, 1
      %p496 = por %p494, %p495
      %p497 = scmp.ne.s32.totalorder %s488, %s489
      %p498 = scmp.eq.s32.totalorder %s76, 0
      %p499 = por %p497, %p498
      %p500 = scmp.ne.s32.totalorder %s488, %s489
      %p501 = scmp.eq.s32.totalorder %s77, 1
      %p502 = por %p500, %p501
      %p504 = scmp.ne.s32.totalorder %s489, %s503
      %p505 = scmp.eq.s32.totalorder %s77, 0
      %p506 = por %p504, %p505
      %s508 = sadd.s32 %s507, 1
      %p511 = scmp.eq.s32.totalorder %s71, 1
      %p512 = scmp.ne.s32.totalorder %s507, %s509
      %p513 = scmp.eq.s32.totalorder %s71, 0
      %p514 = por %p512, %p513
      %p515 = scmp.ne.s32.totalorder %s507, %s509
      %p516 = scmp.eq.s32.totalorder %s76, 1
      %p517 = por %p515, %p516
      %p518 = scmp.ne.s32.totalorder %s509, %s510
      %p519 = scmp.eq.s32.totalorder %s76, 0
      %p520 = por %p518, %p519
      %p521 = scmp.ne.s32.totalorder %s509, %s510
      %p522 = scmp.eq.s32.totalorder %s77, 1
      %p523 = por %p521, %p522
      %p525 = scmp.ne.s32.totalorder %s510, %s524
      %p526 = scmp.eq.s32.totalorder %s77, 0
      %p527 = por %p525, %p526
      %s529 = sadd.s32 %s528, 1
      %p532 = scmp.eq.s32.totalorder %s71, 1
      %p533 = scmp.ne.s32.totalorder %s528, %s530
      %p534 = scmp.eq.s32.totalorder %s71, 0
      %p535 = por %p533, %p534
      %p536 = scmp.ne.s32.totalorder %s528, %s530
      %p537 = scmp.eq.s32.totalorder %s76, 1
      %p538 = por %p536, %p537
      %p539 = scmp.ne.s32.totalorder %s530, %s531
      %p540 = scmp.eq.s32.totalorder %s76, 0
      %p541 = por %p539, %p540
      %p542 = scmp.ne.s32.totalorder %s530, %s531
      %p543 = scmp.eq.s32.totalorder %s77, 1
      %p544 = por %p542, %p543
      %p546 = scmp.ne.s32.totalorder %s531, %s545
      %p547 = scmp.eq.s32.totalorder %s77, 0
      %p548 = por %p546, %p547
      %s550 = sadd.s32 %s549, 1
      %p553 = scmp.eq.s32.totalorder %s71, 1
      %p554 = scmp.ne.s32.totalorder %s549, %s551
      %p555 = scmp.eq.s32.totalorder %s71, 0
      %p556 = por %p554, %p555
      %p557 = scmp.ne.s32.totalorder %s549, %s551
      %p558 = scmp.eq.s32.totalorder %s76, 1
      %p559 = por %p557, %p558
      %p560 = scmp.ne.s32.totalorder %s551, %s552
      %p561 = scmp.eq.s32.totalorder %s76, 0
      %p562 = por %p560, %p561
      %p563 = scmp.ne.s32.totalorder %s551, %s552
      %p564 = scmp.eq.s32.totalorder %s77, 1
      %p565 = por %p563, %p564
      %p567 = scmp.ne.s32.totalorder %s552, %s566
      %p568 = scmp.eq.s32.totalorder %s77, 0
      %p569 = por %p567, %p568
      %s571 = sadd.s32 %s570, 1
      %p574 = scmp.eq.s32.totalorder %s71, 1
      %p575 = scmp.ne.s32.totalorder %s570, %s572
      %p576 = scmp.eq.s32.totalorder %s71, 0
      %p577 = por %p575, %p576
      %p578 = scmp.ne.s32.totalorder %s570, %s572
      %p579 = scmp.eq.s32.totalorder %s76, 1
      %p580 = por %p578, %p579
      %p581 = scmp.ne.s32.totalorder %s572, %s573
      %p582 = scmp.eq.s32.totalorder %s76, 0
      %p583 = por %p581, %p582
      %p584 = scmp.ne.s32.totalorder %s572, %s573
      %p585 = scmp.eq.s32.totalorder %s77, 1
      %p586 = por %p584, %p585
      %p588 = scmp.ne.s32.totalorder %s573, %s587
      %p589 = scmp.eq.s32.totalorder %s77, 0
      %p590 = por %p588, %p589
      %s592 = sadd.s32 %s591, 1
      %p595 = scmp.eq.s32.totalorder %s71, 1
      %p596 = scmp.ne.s32.totalorder %s591, %s593
      %p597 = scmp.eq.s32.totalorder %s71, 0
      %p598 = por %p596, %p597
      %p599 = scmp.ne.s32.totalorder %s591, %s593
      %p600 = scmp.eq.s32.totalorder %s76, 1
      %p601 = por %p599, %p600
      %p602 = scmp.ne.s32.totalorder %s593, %s594
      %p603 = scmp.eq.s32.totalorder %s76, 0
      %p604 = por %p602, %p603
      %p605 = scmp.ne.s32.totalorder %s593, %s594
      %p606 = scmp.eq.s32.totalorder %s77, 1
      %p607 = por %p605, %p606
      %p609 = scmp.ne.s32.totalorder %s594, %s608
      %p610 = scmp.eq.s32.totalorder %s77, 0
      %p611 = por %p609, %p610
      %s613 = sadd.s32 %s612, 1
      %p616 = scmp.eq.s32.totalorder %s71, 1
      %p617 = scmp.ne.s32.totalorder %s612, %s614
      %p618 = scmp.eq.s32.totalorder %s71, 0
      %p619 = por %p617, %p618
      %p620 = scmp.ne.s32.totalorder %s612, %s614
      %p621 = scmp.eq.s32.totalorder %s76, 1
      %p622 = por %p620, %p621
      %p623 = scmp.ne.s32.totalorder %s614, %s615
      %p624 = scmp.eq.s32.totalorder %s76, 0
      %p625 = por %p623, %p624
      %p626 = scmp.ne.s32.totalorder %s614, %s615
      %p627 = scmp.eq.s32.totalorder %s77, 1
      %p628 = por %p626, %p627
      %p630 = scmp.ne.s32.totalorder %s615, %s629
      %p631 = scmp.eq.s32.totalorder %s77, 0
      %p632 = por %p630, %p631
      %s634 = sadd.s32 %s633, 1
      %p637 = scmp.eq.s32.totalorder %s71, 1
      %p638 = scmp.ne.s32.totalorder %s633, %s635
      %p639 = scmp.eq.s32.totalorder %s71, 0
      %p640 = por %p638, %p639
      %p641 = scmp.ne.s32.totalorder %s633, %s635
      %p642 = scmp.eq.s32.totalorder %s76, 1
      %p643 = por %p641, %p642
      %p644 = scmp.ne.s32.totalorder %s635, %s636
      %p645 = scmp.eq.s32.totalorder %s76, 0
      %p646 = por %p644, %p645
      %p647 = scmp.ne.s32.totalorder %s635, %s636
      %p648 = scmp.eq.s32.totalorder %s77, 1
      %p649 = por %p647, %p648
      %p651 = scmp.ne.s32.totalorder %s636, %s650
      %p652 = scmp.eq.s32.totalorder %s77, 0
      %p653 = por %p651, %p652
      %s655 = sadd.s32 %s654, 1
      %p658 = scmp.eq.s32.totalorder %s71, 1
      %p659 = scmp.ne.s32.totalorder %s654, %s656
      %p660 = scmp.eq.s32.totalorder %s71, 0
      %p661 = por %p659, %p660
      %p662 = scmp.ne.s32.totalorder %s654, %s656
      %p663 = scmp.eq.s32.totalorder %s76, 1
      %p664 = por %p662, %p663
      %p665 = scmp.ne.s32.totalorder %s656, %s657
      %p666 = scmp.eq.s32.totalorder %s76, 0
      %p667 = por %p665, %p666
      %p668 = scmp.ne.s32.totalorder %s656, %s657
      %p669 = scmp.eq.s32.totalorder %s77, 1
      %p670 = por %p668, %p669
      %p672 = scmp.ne.s32.totalorder %s657, %s671
      %p673 = scmp.eq.s32.totalorder %s77, 0
      %p674 = por %p672, %p673
      %s676 = sadd.s32 %s675, 1
      %p679 = scmp.eq.s32.totalorder %s71, 1
      %p680 = scmp.ne.s32.totalorder %s675, %s677
      %p681 = scmp.eq.s32.totalorder %s71, 0
      %p682 = por %p680, %p681
      %p683 = scmp.ne.s32.totalorder %s675, %s677
      %p684 = scmp.eq.s32.totalorder %s76, 1
      %p685 = por %p683, %p684
      %p686 = scmp.ne.s32.totalorder %s677, %s678
      %p687 = scmp.eq.s32.totalorder %s76, 0
      %p688 = por %p686, %p687
      %p689 = scmp.ne.s32.totalorder %s677, %s678
      %p690 = scmp.eq.s32.totalorder %s77, 1
      %p691 = por %p689, %p690
      %p693 = scmp.ne.s32.totalorder %s678, %s692
      %p694 = scmp.eq.s32.totalorder %s77, 0
      %p695 = por %p693, %p694
      %s697 = sadd.s32 %s696, 1
      %p700 = scmp.eq.s32.totalorder %s71, 1
      %p701 = scmp.ne.s32.totalorder %s696, %s698
      %p702 = scmp.eq.s32.totalorder %s71, 0
      %p703 = por %p701, %p702
      %p704 = scmp.ne.s32.totalorder %s696, %s698
      %p705 = scmp.eq.s32.totalorder %s76, 1
      %p706 = por %p704, %p705
      %p707 = scmp.ne.s32.totalorder %s698, %s699
      %p708 = scmp.eq.s32.totalorder %s76, 0
      %p709 = por %p707, %p708
      %p710 = scmp.ne.s32.totalorder %s698, %s699
      %p711 = scmp.eq.s32.totalorder %s77, 1
      %p712 = por %p710, %p711
      %p714 = scmp.ne.s32.totalorder %s699, %s713
      %p715 = scmp.eq.s32.totalorder %s77, 0
      %p716 = por %p714, %p715
      %s717 = ssub.s32 %s78, %s90
      %p718 = scmp.eq.s32.totalorder %s717, 0
      %s720 = sadd.s32 %s719, 1
      %s721 = scalar_select %p718, %s719, %s720
      %p724 = pneg %p718
      %p725 = scmp.eq.s32.totalorder %s71, 1
      %p726 = por %p724, %p725
      %p727 = scmp.ne.s32.totalorder %s719, %s722
      %p728 = scmp.eq.s32.totalorder %s71, 0
      %p729 = por %p727, %p728
      %p730 = scmp.ne.s32.totalorder %s719, %s722
      %p731 = scmp.eq.s32.totalorder %s76, 1
      %p732 = por %p730, %p731
      %p733 = scmp.ne.s32.totalorder %s722, %s723
      %p734 = scmp.eq.s32.totalorder %s76, 0
      %p735 = por %p733, %p734
      %p736 = scmp.ne.s32.totalorder %s722, %s723
      %p737 = scmp.eq.s32.totalorder %s77, 1
      %p738 = por %p736, %p737
      %p740 = scmp.ne.s32.totalorder %s723, %s739
      %p741 = scmp.eq.s32.totalorder %s77, 0
      %p742 = por %p740, %p741
      %p743 = scmp.le.s32.totalorder 1, %s71
      %p744 = scmp.lt.s32.totalorder %s71, 3
      %p745 = pnand %p743, %p744
      %p746 = pneg %p745
      // Predicated region
      $region9: #{tpu_custom_call.1} parent=5 // pred_check
        _
      $region10: #{tpu_custom_call.1} parent=5 // pred_check_branch
        %748 = sbr.rel (%p745) target = $region12
      $region11: #{tpu_custom_call.1} parent=5 // pred_region
        %s749 = ssub.s32 %s71, 1
        // Predicated region
        $region13: #{tpu_custom_call.1} parent=11 // pred_check
          %p750 = pneg %p163
        $region14: #{tpu_custom_call.1} parent=11 // pred_check_branch
          %752 = sbr.rel (%p750) target = $region16
        $region15: #{tpu_custom_call.1} parent=11 // pred_region
          %s754 = ssub.s32 128, 128
          %755 = vsyncadd [#allocation8], %s754
          %s756 = smul.addr %s81, 128
          %s757 = scalar_lea.hbm %s5, %s756
          %s759 = sshll.u32 [#allocation7], 4
          %s760 = int_to_ptr.vmem [resolvable:$true] %s759
          %762 = dma.hbm_to_vmem [thread:$0]  %s757, 128, %s760, [#allocation8]
        $region16: #{tpu_custom_call.1} parent=11 // pred_fallthru
          _
        // Predicated region
        $region17: #{tpu_custom_call.1} parent=11 // pred_check
          %p763 = pneg %p184
        $region18: #{tpu_custom_call.1} parent=11 // pred_check_branch
          %765 = sbr.rel (%p763) target = $region20
        $region19: #{tpu_custom_call.1} parent=11 // pred_region
          _
        $region20: #{tpu_custom_call.1} parent=11 // pred_fallthru
          _
        // Predicated region
        $region21: #{tpu_custom_call.1} parent=11 // pred_check
          %p766 = pneg %p205
        $region22: #{tpu_custom_call.1} parent=11 // pred_check_branch
          %768 = sbr.rel (%p766) target = $region24
        $region23: #{tpu_custom_call.1} parent=11 // pred_region
          _
        $region24: #{tpu_custom_call.1} parent=11 // pred_fallthru
          _
        // Predicated region
        $region25: #{tpu_custom_call.1} parent=11 // pred_check
          %p769 = pneg %p226
        $region26: #{tpu_custom_call.1} parent=11 // pred_check_branch
          %771 = sbr.rel (%p769) target = $region28
        $region27: #{tpu_custom_call.1} parent=11 // pred_region
          _
        $region28: #{tpu_custom_call.1} parent=11 // pred_fallthru
          _
        // Predicated region
        $region29: #{tpu_custom_call.1} parent=11 // pred_check
          %p772 = pneg %p247
        $region30: #{tpu_custom_call.1} parent=11 // pred_check_branch
          %774 = sbr.rel (%p772) target = $region32
        $region31: #{tpu_custom_call.1} parent=11 // pred_region
          %s776 = ssub.s32 16, 16
          %777 = vsyncadd [#allocation11], %s776
          %s779 = sshll.u32 [#allocation10], 4
          %s780 = int_to_ptr.vmem [resolvable:$true] %s779
          %782 = dma.hbm_to_vmem [thread:$0]  %s13, 16, %s780, [#allocation11]
        $region32: #{tpu_custom_call.1} parent=11 // pred_fallthru
          _
        // Predicated region
        $region33: #{tpu_custom_call.1} parent=11 // pred_check
          %p783 = pneg %p268
        $region34: #{tpu_custom_call.1} parent=11 // pred_check_branch
          %785 = sbr.rel (%p783) target = $region36
        $region35: #{tpu_custom_call.1} parent=11 // pred_region
          %s787 = ssub.s32 16, 16
          %788 = vsyncadd [#allocation11], %s787
          %s790 = sshll.u32 [#allocation12], 4
          %s791 = int_to_ptr.vmem [resolvable:$true] %s790
          %793 = dma.hbm_to_vmem [thread:$0]  %s15, 16, %s791, [#allocation11]
        $region36: #{tpu_custom_call.1} parent=11 // pred_fallthru
          _
        // Predicated region
        $region37: #{tpu_custom_call.1} parent=11 // pred_check
          %p794 = pneg %p289
        $region38: #{tpu_custom_call.1} parent=11 // pred_check_branch
          %796 = sbr.rel (%p794) target = $region40
        $region39: #{tpu_custom_call.1} parent=11 // pred_region
          %s798 = ssub.s32 16, 16
          %799 = vsyncadd [#allocation14], %s798
          %s801 = sshll.u32 [#allocation13], 4
          %s802 = int_to_ptr.vmem [resolvable:$true] %s801
          %804 = dma.hbm_to_vmem [thread:$0]  %s17, 16, %s802, [#allocation14]
        $region40: #{tpu_custom_call.1} parent=11 // pred_fallthru
          _
        // Predicated region
        $region41: #{tpu_custom_call.1} parent=11 // pred_check
          %p805 = pneg %p310
        $region42: #{tpu_custom_call.1} parent=11 // pred_check_branch
          %807 = sbr.rel (%p805) target = $region44
        $region43: #{tpu_custom_call.1} parent=11 // pred_region
          _
        $region44: #{tpu_custom_call.1} parent=11 // pred_fallthru
          _
        // Predicated region
        $region45: #{tpu_custom_call.1} parent=11 // pred_check
          %p808 = pneg %p331
        $region46: #{tpu_custom_call.1} parent=11 // pred_check_branch
          %810 = sbr.rel (%p808) target = $region48
        $region47: #{tpu_custom_call.1} parent=11 // pred_region
          _
        $region48: #{tpu_custom_call.1} parent=11 // pred_fallthru
          _
        // Predicated region
        $region49: #{tpu_custom_call.1} parent=11 // pred_check
          %p811 = pneg %p352
        $region50: #{tpu_custom_call.1} parent=11 // pred_check_branch
          %813 = sbr.rel (%p811) target = $region52
        $region51: #{tpu_custom_call.1} parent=11 // pred_region
          _
        $region52: #{tpu_custom_call.1} parent=11 // pred_fallthru
          _
        // Predicated region
        $region53: #{tpu_custom_call.1} parent=11 // pred_check
          %p814 = pneg %p373
        $region54: #{tpu_custom_call.1} parent=11 // pred_check_branch
          %816 = sbr.rel (%p814) target = $region56
        $region55: #{tpu_custom_call.1} parent=11 // pred_region
          _
        $region56: #{tpu_custom_call.1} parent=11 // pred_fallthru
          _
        // Predicated region
        $region57: #{tpu_custom_call.1} parent=11 // pred_check
          %p817 = pneg %p394
        $region58: #{tpu_custom_call.1} parent=11 // pred_check_branch
          %819 = sbr.rel (%p817) target = $region60
        $region59: #{tpu_custom_call.1} parent=11 // pred_region
          _
        $region60: #{tpu_custom_call.1} parent=11 // pred_fallthru
          _
        // Predicated region
        $region61: #{tpu_custom_call.1} parent=11 // pred_check
          %p820 = pneg %p415
        $region62: #{tpu_custom_call.1} parent=11 // pred_check_branch
          %822 = sbr.rel (%p820) target = $region64
        $region63: #{tpu_custom_call.1} parent=11 // pred_region
          _
        $region64: #{tpu_custom_call.1} parent=11 // pred_fallthru
          _
        // Predicated region
        $region65: #{tpu_custom_call.1} parent=11 // pred_check
          %p823 = pneg %p436
        $region66: #{tpu_custom_call.1} parent=11 // pred_check_branch
          %825 = sbr.rel (%p823) target = $region68
        $region67: #{tpu_custom_call.1} parent=11 // pred_region
          _
        $region68: #{tpu_custom_call.1} parent=11 // pred_fallthru
          _
        // Predicated region
        $region69: #{tpu_custom_call.1} parent=11 // pred_check
          %p826 = pneg %p457
        $region70: #{tpu_custom_call.1} parent=11 // pred_check_branch
          %828 = sbr.rel (%p826) target = $region72
        $region71: #{tpu_custom_call.1} parent=11 // pred_region
          _
        $region72: #{tpu_custom_call.1} parent=11 // pred_fallthru
          _
        // Predicated region
        $region73: #{tpu_custom_call.1} parent=11 // pred_check
          %p829 = pneg %p478
        $region74: #{tpu_custom_call.1} parent=11 // pred_check_branch
          %831 = sbr.rel (%p829) target = $region76
        $region75: #{tpu_custom_call.1} parent=11 // pred_region
          _
        $region76: #{tpu_custom_call.1} parent=11 // pred_fallthru
          _
        // Predicated region
        $region77: #{tpu_custom_call.1} parent=11 // pred_check
          %p832 = pneg %p499
        $region78: #{tpu_custom_call.1} parent=11 // pred_check_branch
          %834 = sbr.rel (%p832) target = $region80
        $region79: #{tpu_custom_call.1} parent=11 // pred_region
          _
        $region80: #{tpu_custom_call.1} parent=11 // pred_fallthru
          _
        // Predicated region
        $region81: #{tpu_custom_call.1} parent=11 // pred_check
          %p835 = pneg %p520
        $region82: #{tpu_custom_call.1} parent=11 // pred_check_branch
          %837 = sbr.rel (%p835) target = $region84
        $region83: #{tpu_custom_call.1} parent=11 // pred_region
          _
        $region84: #{tpu_custom_call.1} parent=11 // pred_fallthru
          _
        // Predicated region
        $region85: #{tpu_custom_call.1} parent=11 // pred_check
          %p838 = pneg %p541
        $region86: #{tpu_custom_call.1} parent=11 // pred_check_branch
          %840 = sbr.rel (%p838) target = $region88
        $region87: #{tpu_custom_call.1} parent=11 // pred_region
          _
        $region88: #{tpu_custom_call.1} parent=11 // pred_fallthru
          _
        // Predicated region
        $region89: #{tpu_custom_call.1} parent=11 // pred_check
          %p841 = pneg %p562
        $region90: #{tpu_custom_call.1} parent=11 // pred_check_branch
          %843 = sbr.rel (%p841) target = $region92
        $region91: #{tpu_custom_call.1} parent=11 // pred_region
          _
        $region92: #{tpu_custom_call.1} parent=11 // pred_fallthru
          _
        // Predicated region
        $region93: #{tpu_custom_call.1} parent=11 // pred_check
          %p844 = pneg %p583
        $region94: #{tpu_custom_call.1} parent=11 // pred_check_branch
          %846 = sbr.rel (%p844) target = $region96
        $region95: #{tpu_custom_call.1} parent=11 // pred_region
          _
        $region96: #{tpu_custom_call.1} parent=11 // pred_fallthru
          _
        // Predicated region
        $region97: #{tpu_custom_call.1} parent=11 // pred_check
          %p847 = pneg %p604
        $region98: #{tpu_custom_call.1} parent=11 // pred_check_branch
          %849 = sbr.rel (%p847) target = $region100
        $region99: #{tpu_custom_call.1} parent=11 // pred_region
          _
        $region100: #{tpu_custom_call.1} parent=11 // pred_fallthru
          _
        // Predicated region
        $region101: #{tpu_custom_call.1} parent=11 // pred_check
          %p850 = pneg %p625
        $region102: #{tpu_custom_call.1} parent=11 // pred_check_branch
          %852 = sbr.rel (%p850) target = $region104
        $region103: #{tpu_custom_call.1} parent=11 // pred_region
          _
        $region104: #{tpu_custom_call.1} parent=11 // pred_fallthru
          _
        // Predicated region
        $region105: #{tpu_custom_call.1} parent=11 // pred_check
          %p853 = pneg %p646
        $region106: #{tpu_custom_call.1} parent=11 // pred_check_branch
          %855 = sbr.rel (%p853) target = $region108
        $region107: #{tpu_custom_call.1} parent=11 // pred_region
          _
        $region108: #{tpu_custom_call.1} parent=11 // pred_fallthru
          _
        // Predicated region
        $region109: #{tpu_custom_call.1} parent=11 // pred_check
          %p856 = pneg %p667
        $region110: #{tpu_custom_call.1} parent=11 // pred_check_branch
          %858 = sbr.rel (%p856) target = $region112
        $region111: #{tpu_custom_call.1} parent=11 // pred_region
          _
        $region112: #{tpu_custom_call.1} parent=11 // pred_fallthru
          _
        // Predicated region
        $region113: #{tpu_custom_call.1} parent=11 // pred_check
          %p859 = pneg %p688
        $region114: #{tpu_custom_call.1} parent=11 // pred_check_branch
          %861 = sbr.rel (%p859) target = $region116
        $region115: #{tpu_custom_call.1} parent=11 // pred_region
          _
        $region116: #{tpu_custom_call.1} parent=11 // pred_fallthru
          _
        // Predicated region
        $region117: #{tpu_custom_call.1} parent=11 // pred_check
          %p862 = pneg %p709
        $region118: #{tpu_custom_call.1} parent=11 // pred_check_branch
          %864 = sbr.rel (%p862) target = $region120
        $region119: #{tpu_custom_call.1} parent=11 // pred_region
          _
        $region120: #{tpu_custom_call.1} parent=11 // pred_fallthru
          _
      $region12: #{tpu_custom_call.1} parent=5 // pred_fallthru
        _
      %p865 = scmp.lt.s32.totalorder %s71, 2
      // Predicated region
      $region121: #{tpu_custom_call.1} parent=5 // pred_check
        %p866 = pneg %p865
      $region122: #{tpu_custom_call.1} parent=5 // pred_check_branch
        %868 = sbr.rel (%p866) target = $region124
      $region123: #{tpu_custom_call.1} parent=5 // pred_region
        // Predicated region
        $region125: #{tpu_custom_call.1} parent=123 // pred_check
          %p869 = pneg %p103
        $region126: #{tpu_custom_call.1} parent=123 // pred_check_branch
          %871 = sbr.rel (%p869) target = $region128
        $region127: #{tpu_custom_call.1} parent=123 // pred_region
          %p872 = scmp.lt.s32.totalorder %s78, 1
          %s873 = scalar_select %p872, %s78, 1
          %s874 = smul.addr %s873, 8
          %s875 = scalar_lea.vmem %s1, %s874
        $region128: #{tpu_custom_call.1} parent=123 // pred_fallthru
          _
        // Predicated region
        $region129: #{tpu_custom_call.1} parent=123 // pred_check
          %p876 = pneg %p131
        $region130: #{tpu_custom_call.1} parent=123 // pred_check_branch
          %878 = sbr.rel (%p876) target = $region132
        $region131: #{tpu_custom_call.1} parent=123 // pred_region
          %p879 = scmp.lt.s32.totalorder %s78, 1
          %s880 = scalar_select %p879, %s78, 1
          %p881 = scmp.lt.s32.totalorder %s79, 0
          %s882 = scalar_select %p881, %s79, 0
          %s883 = smul.addr %s880, 4
          %s884 = sadd.s32 %s882, %s883
          %s885 = smul.addr %s884, 4
          %s886 = scalar_lea.vmem %s3, %s885
        $region132: #{tpu_custom_call.1} parent=123 // pred_fallthru
          _
      $region124: #{tpu_custom_call.1} parent=5 // pred_fallthru
        _
      %p887 = scmp.le.s32.totalorder 1, %s71
      %p888 = scmp.lt.s32.totalorder %s71, 3
      %p889 = pnand %p887, %p888
      %p890 = pneg %p889
      // Predicated region
      $region133: #{tpu_custom_call.1} parent=5 // pred_check
        _
      $region134: #{tpu_custom_call.1} parent=5 // pred_check_branch
        %892 = sbr.rel (%p889) target = $region136
      $region135: #{tpu_custom_call.1} parent=5 // pred_region
        %s893 = ssub.s32 %s71, 1
        // Predicated region
        $region137: #{tpu_custom_call.1} parent=135 // pred_check
          %p894 = pneg %p163
        $region138: #{tpu_custom_call.1} parent=135 // pred_check_branch
          %896 = sbr.rel (%p894) target = $region140
        $region139: #{tpu_custom_call.1} parent=135 // pred_region
          %897 = dma.done [#allocation8], 128
        $region140: #{tpu_custom_call.1} parent=135 // pred_fallthru
          _
        // Predicated region
        $region141: #{tpu_custom_call.1} parent=135 // pred_check
          %p898 = pneg %p247
        $region142: #{tpu_custom_call.1} parent=135 // pred_check_branch
          %900 = sbr.rel (%p898) target = $region144
        $region143: #{tpu_custom_call.1} parent=135 // pred_region
          %901 = dma.done [#allocation11], 16
        $region144: #{tpu_custom_call.1} parent=135 // pred_fallthru
          _
        // Predicated region
        $region145: #{tpu_custom_call.1} parent=135 // pred_check
          %p902 = pneg %p268
        $region146: #{tpu_custom_call.1} parent=135 // pred_check_branch
          %904 = sbr.rel (%p902) target = $region148
        $region147: #{tpu_custom_call.1} parent=135 // pred_region
          %905 = dma.done [#allocation11], 16
        $region148: #{tpu_custom_call.1} parent=135 // pred_fallthru
          _
        // Predicated region
        $region149: #{tpu_custom_call.1} parent=135 // pred_check
          %p906 = pneg %p289
        $region150: #{tpu_custom_call.1} parent=135 // pred_check_branch
          %908 = sbr.rel (%p906) target = $region152
        $region151: #{tpu_custom_call.1} parent=135 // pred_region
          %909 = dma.done [#allocation14], 16
        $region152: #{tpu_custom_call.1} parent=135 // pred_fallthru
          _
        %p910 = scmp.lt.s32.totalorder %s80, 1
        %s911 = scalar_select %p910, %s80, 1
        %s912 = smul.addr %s911, 8
        %s913 = scalar_lea.vmem %s1, %s912
        %p914 = pneg %p109
        %p915 = pneg %p106
        %p916 = scmp.lt.s32.totalorder %s80, 1
        %s917 = scalar_select %p916, %s80, 1
        %p918 = scmp.lt.s32.totalorder %s81, 0
        %s919 = scalar_select %p918, %s81, 0
        %s920 = smul.addr %s917, 4
        %s921 = sadd.s32 %s919, %s920
        %s922 = smul.addr %s921, 4
        %s923 = scalar_lea.vmem %s3, %s922
        %p924 = pneg %p137
        %p925 = pneg %p134
        %p926 = pneg %p163
        %p927 = pneg %p160
        %p928 = pneg %p184
        %p929 = pneg %p181
        %p930 = pneg %p205
        %p931 = pneg %p202
        %p932 = pneg %p226
        %p933 = pneg %p223
        %p934 = pneg %p247
        %p935 = pneg %p244
        %p936 = pneg %p268
        %p937 = pneg %p265
        %p938 = pneg %p289
        %p939 = pneg %p286
        %p940 = pneg %p310
        %p941 = pneg %p307
        %p942 = pneg %p331
        %p943 = pneg %p328
        %p944 = pneg %p352
        %p945 = pneg %p349
        %p946 = pneg %p373
        %p947 = pneg %p370
        %p948 = pneg %p394
        %p949 = pneg %p391
        %p950 = pneg %p415
        %p951 = pneg %p412
        %p952 = pneg %p436
        %p953 = pneg %p433
        %p954 = pneg %p457
        %p955 = pneg %p454
        %p956 = pneg %p478
        %p957 = pneg %p475
        %p958 = pneg %p499
        %p959 = pneg %p496
        %p960 = pneg %p520
        %p961 = pneg %p517
        %p962 = pneg %p541
        %p963 = pneg %p538
        %p964 = pneg %p562
        %p965 = pneg %p559
        %p966 = pneg %p583
        %p967 = pneg %p580
        %p968 = pneg %p604
        %p969 = pneg %p601
        %p970 = pneg %p625
        %p971 = pneg %p622
        %p972 = pneg %p646
        %p973 = pneg %p643
        %p974 = pneg %p667
        %p975 = pneg %p664
        %p976 = pneg %p688
        %p977 = pneg %p685
        %p978 = pneg %p709
        %p979 = pneg %p706
        %p980 = pneg %p735
        %p981 = pneg %p732
        %s982 = sand.u32 %s722, 1
        %s983 = scalar_lea.sflag [#allocation9], %s982
        %s984 = sand.u32 %s722, 1
        %s985 = smul.addr %s984, 8
        %s986 = scalar_lea.vmem [#allocation15], %s985
        %p987 = scmp.lt.s32.totalorder %s80, 1
        %s988 = scalar_select %p987, %s80, 1
        %s989 = smul.addr %s988, 8
        %s990 = scalar_lea.vmem %s1, %s989
        %p991 = scmp.lt.s32.totalorder %s80, 1
        %s992 = scalar_select %p991, %s80, 1
        %p993 = scmp.lt.s32.totalorder %s81, 0
        %s994 = scalar_select %p993, %s81, 0
        %s995 = smul.addr %s992, 4
        %s996 = sadd.s32 %s994, %s995
        %s997 = smul.addr %s996, 4
        %s998 = scalar_lea.vmem %s3, %s997
        %p1000 = scmp.eq.s32.totalorder %s81, 0
        // Predicated region
        $region153: #{tpu_custom_call.1} parent=135 // pred_check
          %p1001 = pneg %p1000
        $region154: #{tpu_custom_call.1} parent=135 // pred_check_branch
          %1003 = sbr.rel (%p1001) target = $region156
        $region155: #{tpu_custom_call.1} parent=135 // pred_region
          %v1004 = vld [vmem:[%s990] sm:$0xff]
          %v1005 = vpack.c.bf16 %v1004, %v1004
          %v1006 = vld [vmem:[%s7] sm:$0xf]
          %v1007 = vld [vmem:[%s7 + $0x4] sm:$0xf]
          %v1008 = vld [vmem:[%s7 + $0x8] sm:$0xf]
          %v1009 = vld [vmem:[%s7 + $0xc] sm:$0xf]
          %v1010 = vld [vmem:[#allocation10] sm:$0x1]
          %v1012 = vlaneseq
          %v1013 = vshrl.u32 %v1012, 7
          %v1014 = vsub.s32 0, %v1013
          %v1015 = vrot.slane %v1010, %v1014
          %v1021 = vunpack.c.l.b16 %v1006
          %v1022 = vunpack.c.l.b16 %v1007
          %v1023 = vunpack.c.l.b16 %v1008
          %v1024 = vunpack.c.l.b16 %v1009
          %v1025 = vpack.c.b16 %v1022, %v1021
          %v1026 = vpack.c.b16 %v1024, %v1023
          %vm1029 = vcmask 261120
          %v1031 = vsel %vm1029, %v1005, 0
          %1033 = vmatprep.subr.bf16.mxu0 0
          %1034 = vmatpush1.bf16.msra.mxu0 0
          %1035 = vmatprep.subr.bf16.mxu0 0
          %1036 = vmatpush1.bf16.msra.mxu0 0
          %1037 = vmatprep.subr.bf16.mxu0 0
          %1038 = vmatpush1.bf16.msra.mxu0 0
          %1039 = vmatprep.subr.bf16.mxu0 0
          %1040 = vmatpush1.bf16.msra.mxu0 0
          %1041 = vmatprep.subr.bf16.mxu0 0
          %1042 = vmatpush1.bf16.msra.mxu0 0
          %1043 = vmatprep.subr.bf16.mxu0 0
          %1044 = vmatpush1.bf16.msra.mxu0 0
          %1045 = vmatprep.subr.bf16.mxu0 0
          %1046 = vmatpush1.bf16.msra.mxu0 %v1026
          %1047 = vmatprep.subr.bf16.mxu0 0
          %1048 = vmatpush1.bf16.msra.mxu0 %v1025
          %1049 = vmatprep.subr.bf16.mxu0 0
          %1050 = vmatpush2.bf16.msra.mxu0 0
          %1051 = vmatprep.subr.bf16.mxu0 0
          %1052 = vmatpush2.bf16.msra.mxu0 0
          %1053 = vmatprep.subr.bf16.mxu0 0
          %1054 = vmatpush2.bf16.msra.mxu0 0
          %1055 = vmatprep.subr.bf16.mxu0 0
          %1056 = vmatpush2.bf16.msra.mxu0 0
          %1057 = vmatprep.subr.bf16.mxu0 0
          %1058 = vmatpush2.bf16.msra.mxu0 0
          %1059 = vmatprep.subr.bf16.mxu0 0
          %1060 = vmatpush2.bf16.msra.mxu0 0
          %1061 = vmatprep.subr.bf16.mxu0 0
          %1062 = vmatpush2.bf16.msra.mxu0 0
          %1063 = vmatprep.subr.bf16.mxu0 0
          %1064 = vmatpush2.bf16.msra.mxu0 0
          %1065 = vmatprep.mubr.bf16.mxu0 0
          %1066 = vmatmul.mubr.bf16.gmra.mxu0 %v1031
          %v1067 = vpop.f32.mrf.mxu0
          %v1068 = vadd.f32 %v1015, %v1067
          %v1069 = vpop.f32.mrf.mxu0
          %v1070 = vpop.f32.mrf.mxu0
          %v1071 = vpop.f32.mrf.mxu0
          %1072 = vdwg.mxu0
          %v1073 = vmul.f32 %v1068, 0.35355338
          %v1074 = vld [vmem:[%s9] sm:$0xf]
          %v1075 = vld [vmem:[%s9 + $0x4] sm:$0xf]
          %v1076 = vld [vmem:[%s9 + $0x8] sm:$0xf]
          %v1077 = vld [vmem:[%s9 + $0xc] sm:$0xf]
          %v1078 = vld [vmem:[#allocation12] sm:$0x1]
          %v1080 = vlaneseq
          %v1081 = vshrl.u32 %v1080, 7
          %v1082 = vsub.s32 0, %v1081
          %v1083 = vrot.slane %v1078, %v1082
          %v1089 = vunpack.c.l.b16 %v1074
          %v1090 = vunpack.c.l.b16 %v1075
          %v1091 = vunpack.c.l.b16 %v1076
          %v1092 = vunpack.c.l.b16 %v1077
          %v1093 = vpack.c.b16 %v1090, %v1089
          %v1094 = vpack.c.b16 %v1092, %v1091
          %1097 = vmatprep.subr.bf16.mxu0 0
          %1098 = vmatpush1.bf16.msra.mxu0 0
          %1099 = vmatprep.subr.bf16.mxu0 0
          %1100 = vmatpush1.bf16.msra.mxu0 0
          %1101 = vmatprep.subr.bf16.mxu0 0
          %1102 = vmatpush1.bf16.msra.mxu0 0
          %1103 = vmatprep.subr.bf16.mxu0 0
          %1104 = vmatpush1.bf16.msra.mxu0 0
          %1105 = vmatprep.subr.bf16.mxu0 0
          %1106 = vmatpush1.bf16.msra.mxu0 0
          %1107 = vmatprep.subr.bf16.mxu0 0
          %1108 = vmatpush1.bf16.msra.mxu0 0
          %1109 = vmatprep.subr.bf16.mxu0 0
          %1110 = vmatpush1.bf16.msra.mxu0 %v1094
          %1111 = vmatprep.subr.bf16.mxu0 0
          %1112 = vmatpush1.bf16.msra.mxu0 %v1093
          %1113 = vmatprep.subr.bf16.mxu0 0
          %1114 = vmatpush2.bf16.msra.mxu0 0
          %1115 = vmatprep.subr.bf16.mxu0 0
          %1116 = vmatpush2.bf16.msra.mxu0 0
          %1117 = vmatprep.subr.bf16.mxu0 0
          %1118 = vmatpush2.bf16.msra.mxu0 0
          %1119 = vmatprep.subr.bf16.mxu0 0
          %1120 = vmatpush2.bf16.msra.mxu0 0
          %1121 = vmatprep.subr.bf16.mxu0 0
          %1122 = vmatpush2.bf16.msra.mxu0 0
          %1123 = vmatprep.subr.bf16.mxu0 0
          %1124 = vmatpush2.bf16.msra.mxu0 0
          %1125 = vmatprep.subr.bf16.mxu0 0
          %1126 = vmatpush2.bf16.msra.mxu0 0
          %1127 = vmatprep.subr.bf16.mxu0 0
          %1128 = vmatpush2.bf16.msra.mxu0 0
          %1129 = vmatprep.mubr.bf16.mxu0 0
          %1130 = vmatmul.mubr.bf16.gmra.mxu0 %v1031
          %v1131 = vpop.f32.mrf.mxu0
          %v1132 = vadd.f32 %v1083, %v1131
          %v1133 = vpop.f32.mrf.mxu0
          %v1134 = vpop.f32.mrf.mxu0
          %v1135 = vpop.f32.mrf.mxu0
          %1136 = vdwg.mxu0
          %v1137 = vld [vmem:[%s11] sm:$0xf]
          %v1138 = vld [vmem:[%s11 + $0x4] sm:$0xf]
          %v1139 = vld [vmem:[%s11 + $0x8] sm:$0xf]
          %v1140 = vld [vmem:[%s11 + $0xc] sm:$0xf]
          %v1141 = vld [vmem:[#allocation13] sm:$0x1]
          %v1143 = vlaneseq
          %v1144 = vshrl.u32 %v1143, 7
          %v1145 = vsub.s32 0, %v1144
          %v1146 = vrot.slane %v1141, %v1145
          %v1152 = vunpack.c.l.b16 %v1137
          %v1153 = vunpack.c.l.b16 %v1138
          %v1154 = vunpack.c.l.b16 %v1139
          %v1155 = vunpack.c.l.b16 %v1140
          %v1156 = vpack.c.b16 %v1153, %v1152
          %v1157 = vpack.c.b16 %v1155, %v1154
          %1160 = vmatprep.subr.bf16.mxu0 0
          %1161 = vmatpush1.bf16.msra.mxu0 0
          %1162 = vmatprep.subr.bf16.mxu0 0
          %1163 = vmatpush1.bf16.msra.mxu0 0
          %1164 = vmatprep.subr.bf16.mxu0 0
          %1165 = vmatpush1.bf16.msra.mxu0 0
          %1166 = vmatprep.subr.bf16.mxu0 0
          %1167 = vmatpush1.bf16.msra.mxu0 0
          %1168 = vmatprep.subr.bf16.mxu0 0
          %1169 = vmatpush1.bf16.msra.mxu0 0
          %1170 = vmatprep.subr.bf16.mxu0 0
          %1171 = vmatpush1.bf16.msra.mxu0 0
          %1172 = vmatprep.subr.bf16.mxu0 0
          %1173 = vmatpush1.bf16.msra.mxu0 %v1157
          %1174 = vmatprep.subr.bf16.mxu0 0
          %1175 = vmatpush1.bf16.msra.mxu0 %v1156
          %1176 = vmatprep.subr.bf16.mxu0 0
          %1177 = vmatpush2.bf16.msra.mxu0 0
          %1178 = vmatprep.subr.bf16.mxu0 0
          %1179 = vmatpush2.bf16.msra.mxu0 0
          %1180 = vmatprep.subr.bf16.mxu0 0
          %1181 = vmatpush2.bf16.msra.mxu0 0
          %1182 = vmatprep.subr.bf16.mxu0 0
          %1183 = vmatpush2.bf16.msra.mxu0 0
          %1184 = vmatprep.subr.bf16.mxu0 0
          %1185 = vmatpush2.bf16.msra.mxu0 0
          %1186 = vmatprep.subr.bf16.mxu0 0
          %1187 = vmatpush2.bf16.msra.mxu0 0
          %1188 = vmatprep.subr.bf16.mxu0 0
          %1189 = vmatpush2.bf16.msra.mxu0 0
          %1190 = vmatprep.subr.bf16.mxu0 0
          %1191 = vmatpush2.bf16.msra.mxu0 0
          %1192 = vmatprep.mubr.bf16.mxu0 0
          %1193 = vmatmul.mubr.bf16.gmra.mxu0 %v1031
          %v1194 = vpop.f32.mrf.mxu0
          %v1195 = vadd.f32 %v1146, %v1194
          %v1196 = vpop.f32.mrf.mxu0
          %v1197 = vpop.f32.mrf.mxu0
          %v1198 = vpop.f32.mrf.mxu0
          %1199 = vdwg.mxu0
          %v1200 = vpack.c.bf16 %v1073, %v1073
          %v1201 = vpack.c.bf16 %v1132, %v1132
          %vm1202 = vcmask 64512
          %v1204 = vsel %vm1202, %v1200, 0
          %v1207 = vsel %vm1202, %v1201, 0
          %1209 = vmatprep.subr.bf16.mxu0 0
          %1210 = vmatpush1.bf16.xpose.msra.mxu0 0
          %1211 = vmatprep.subr.bf16.mxu0 0
          %1212 = vmatpush1.bf16.xpose.msra.mxu0 0
          %1213 = vmatprep.subr.bf16.mxu0 0
          %1214 = vmatpush1.bf16.xpose.msra.mxu0 0
          %1215 = vmatprep.subr.bf16.mxu0 0
          %1216 = vmatpush1.bf16.xpose.msra.mxu0 0
          %1217 = vmatprep.subr.bf16.mxu0 0
          %1218 = vmatpush1.bf16.xpose.msra.mxu0 0
          %1219 = vmatprep.subr.bf16.mxu0 0
          %1220 = vmatpush1.bf16.xpose.msra.mxu0 0
          %1221 = vmatprep.subr.bf16.mxu0 0
          %1222 = vmatpush1.bf16.xpose.msra.mxu0 0
          %1223 = vmatprep.subr.bf16.mxu0 0
          %1224 = vmatpush1.bf16.xpose.msra.mxu0 %v1207
          %1225 = vmatprep.subr.bf16.mxu0 0
          %1226 = vmatpush2.bf16.xpose.msra.mxu0 0
          %1227 = vmatprep.subr.bf16.mxu0 0
          %1228 = vmatpush2.bf16.xpose.msra.mxu0 0
          %1229 = vmatprep.subr.bf16.mxu0 0
          %1230 = vmatpush2.bf16.xpose.msra.mxu0 0
          %1231 = vmatprep.subr.bf16.mxu0 0
          %1232 = vmatpush2.bf16.xpose.msra.mxu0 0
          %1233 = vmatprep.subr.bf16.mxu0 0
          %1234 = vmatpush2.bf16.xpose.msra.mxu0 0
          %1235 = vmatprep.subr.bf16.mxu0 0
          %1236 = vmatpush2.bf16.xpose.msra.mxu0 0
          %1237 = vmatprep.subr.bf16.mxu0 0
          %1238 = vmatpush2.bf16.xpose.msra.mxu0 0
          %1239 = vmatprep.subr.bf16.mxu0 0
          %1240 = vmatpush2.bf16.xpose.msra.mxu0 0
          %1241 = vmatprep.mubr.bf16.mxu0 0
          %1242 = vmatmul.mubr.bf16.gmra.mxu0 %v1204
          %v1243 = vpop.f32.mrf.mxu0
          %v1244 = vadd.f32 0.0, %v1243
          %v1245 = vpop.f32.mrf.mxu0
          %v1246 = vpop.f32.mrf.mxu0
          %v1247 = vpop.f32.mrf.mxu0
          %1248 = vdwg.mxu0
          %v1249 = vsel %vm1202, %v1244, -inf
          %1250 = vmax.xlane.f32.xlu0 %v1249
          %v1251 = vpop.xlane.xlu0 %1250
          %v1252 = vsub.f32 %v1244, %v1251
          %v1253 = vmul.f32 %v1252, 1.442695
          %v1254 = vpow.pop %v1253
          %v1255 = vsel %vm1202, %v1254, 0.0
          %1256 = vadd.xlane.f32.xlu0 %v1255
          %v1257 = vpop.xlane.xlu0 %1256
          %v1258 = vrcp.pop %v1257
          %v1259 = vmul.f32 %v1254, %v1258
          %v1260 = vpack.c.bf16 %v1259, %v1259
          %v1261 = vpack.c.bf16 %v1195, %v1195
          %v1263 = vsel %vm1202, %v1260, 0
          %vm1265 = vcmask 1043456
          %v1267 = vsel %vm1265, %v1261, 0
          %1269 = vmatprep.subr.bf16.mxu0 0
          %1270 = vmatpush1.bf16.msra.mxu0 0
          %1271 = vmatprep.subr.bf16.mxu0 0
          %1272 = vmatpush1.bf16.msra.mxu0 0
          %1273 = vmatprep.subr.bf16.mxu0 0
          %1274 = vmatpush1.bf16.msra.mxu0 0
          %1275 = vmatprep.subr.bf16.mxu0 0
          %1276 = vmatpush1.bf16.msra.mxu0 0
          %1277 = vmatprep.subr.bf16.mxu0 0
          %1278 = vmatpush1.bf16.msra.mxu0 0
          %1279 = vmatprep.subr.bf16.mxu0 0
          %1280 = vmatpush1.bf16.msra.mxu0 0
          %1281 = vmatprep.subr.bf16.mxu0 0
          %1282 = vmatpush1.bf16.msra.mxu0 0
          %1283 = vmatprep.subr.bf16.mxu0 0
          %1284 = vmatpush1.bf16.msra.mxu0 %v1267
          %1285 = vmatprep.subr.bf16.mxu0 0
          %1286 = vmatpush2.bf16.msra.mxu0 0
          %1287 = vmatprep.subr.bf16.mxu0 0
          %1288 = vmatpush2.bf16.msra.mxu0 0
          %1289 = vmatprep.subr.bf16.mxu0 0
          %1290 = vmatpush2.bf16.msra.mxu0 0
          %1291 = vmatprep.subr.bf16.mxu0 0
          %1292 = vmatpush2.bf16.msra.mxu0 0
          %1293 = vmatprep.subr.bf16.mxu0 0
          %1294 = vmatpush2.bf16.msra.mxu0 0
          %1295 = vmatprep.subr.bf16.mxu0 0
          %1296 = vmatpush2.bf16.msra.mxu0 0
          %1297 = vmatprep.subr.bf16.mxu0 0
          %1298 = vmatpush2.bf16.msra.mxu0 0
          %1299 = vmatprep.subr.bf16.mxu0 0
          %1300 = vmatpush2.bf16.msra.mxu0 0
          %1301 = vmatprep.mubr.bf16.mxu0 0
          %1302 = vmatmul.mubr.bf16.gmra.mxu0 %v1263
          %v1303 = vpop.f32.mrf.mxu0
          %v1304 = vadd.f32 0.0, %v1303
          %v1305 = vpop.f32.mrf.mxu0
          %v1306 = vpop.f32.mrf.mxu0
          %v1307 = vpop.f32.mrf.mxu0
          %1308 = vdwg.mxu0
          %1310 = vrot.lane.b32.xlu0 %v1200, 120
          %v1311 = vpop.permute.xlu0 %1310
          %1313 = vrot.lane.b32.xlu0 %v1201, 120
          %v1314 = vpop.permute.xlu0 %1313
          %v1316 = vsel %vm1202, %v1311, 0
          %v1319 = vsel %vm1202, %v1314, 0
          %1321 = vmatprep.subr.bf16.mxu0 0
          %1322 = vmatpush1.bf16.xpose.msra.mxu0 0
          %1323 = vmatprep.subr.bf16.mxu0 0
          %1324 = vmatpush1.bf16.xpose.msra.mxu0 0
          %1325 = vmatprep.subr.bf16.mxu0 0
          %1326 = vmatpush1.bf16.xpose.msra.mxu0 0
          %1327 = vmatprep.subr.bf16.mxu0 0
          %1328 = vmatpush1.bf16.xpose.msra.mxu0 0
          %1329 = vmatprep.subr.bf16.mxu0 0
          %1330 = vmatpush1.bf16.xpose.msra.mxu0 0
          %1331 = vmatprep.subr.bf16.mxu0 0
          %1332 = vmatpush1.bf16.xpose.msra.mxu0 0
          %1333 = vmatprep.subr.bf16.mxu0 0
          %1334 = vmatpush1.bf16.xpose.msra.mxu0 0
          %1335 = vmatprep.subr.bf16.mxu0 0
          %1336 = vmatpush1.bf16.xpose.msra.mxu0 %v1319
          %1337 = vmatprep.subr.bf16.mxu0 0
          %1338 = vmatpush2.bf16.xpose.msra.mxu0 0
          %1339 = vmatprep.subr.bf16.mxu0 0
          %1340 = vmatpush2.bf16.xpose.msra.mxu0 0
          %1341 = vmatprep.subr.bf16.mxu0 0
          %1342 = vmatpush2.bf16.xpose.msra.mxu0 0
          %1343 = vmatprep.subr.bf16.mxu0 0
          %1344 = vmatpush2.bf16.xpose.msra.mxu0 0
          %1345 = vmatprep.subr.bf16.mxu0 0
          %1346 = vmatpush2.bf16.xpose.msra.mxu0 0
          %1347 = vmatprep.subr.bf16.mxu0 0
          %1348 = vmatpush2.bf16.xpose.msra.mxu0 0
          %1349 = vmatprep.subr.bf16.mxu0 0
          %1350 = vmatpush2.bf16.xpose.msra.mxu0 0
          %1351 = vmatprep.subr.bf16.mxu0 0
          %1352 = vmatpush2.bf16.xpose.msra.mxu0 0
          %1353 = vmatprep.mubr.bf16.mxu0 0
          %1354 = vmatmul.mubr.bf16.gmra.mxu0 %v1316
          %v1355 = vpop.f32.mrf.mxu0
          %v1356 = vadd.f32 0.0, %v1355
          %v1357 = vpop.f32.mrf.mxu0
          %v1358 = vpop.f32.mrf.mxu0
          %v1359 = vpop.f32.mrf.mxu0
          %1360 = vdwg.mxu0
          %v1361 = vsel %vm1202, %v1356, -inf
          %1362 = vmax.xlane.f32.xlu0 %v1361
          %v1363 = vpop.xlane.xlu0 %1362
          %v1364 = vsub.f32 %v1356, %v1363
          %v1365 = vmul.f32 %v1364, 1.442695
          %v1366 = vpow.pop %v1365
          %v1367 = vsel %vm1202, %v1366, 0.0
          %1368 = vadd.xlane.f32.xlu0 %v1367
          %v1369 = vpop.xlane.xlu0 %1368
          %v1370 = vrcp.pop %v1369
          %v1371 = vmul.f32 %v1366, %v1370
          %v1372 = vpack.c.bf16 %v1371, %v1371
          %1374 = vrot.lane.b32.xlu0 %v1261, 120
          %v1375 = vpop.permute.xlu0 %1374
          %v1377 = vsel %vm1202, %v1372, 0
          %v1380 = vsel %vm1265, %v1375, 0
          %1382 = vmatprep.subr.bf16.mxu0 0
          %1383 = vmatpush1.bf16.msra.mxu0 0
          %1384 = vmatprep.subr.bf16.mxu0 0
          %1385 = vmatpush1.bf16.msra.mxu0 0
          %1386 = vmatprep.subr.bf16.mxu0 0
          %1387 = vmatpush1.bf16.msra.mxu0 0
          %1388 = vmatprep.subr.bf16.mxu0 0
          %1389 = vmatpush1.bf16.msra.mxu0 0
          %1390 = vmatprep.subr.bf16.mxu0 0
          %1391 = vmatpush1.bf16.msra.mxu0 0
          %1392 = vmatprep.subr.bf16.mxu0 0
          %1393 = vmatpush1.bf16.msra.mxu0 0
          %1394 = vmatprep.subr.bf16.mxu0 0
          %1395 = vmatpush1.bf16.msra.mxu0 0
          %1396 = vmatprep.subr.bf16.mxu0 0
          %1397 = vmatpush1.bf16.msra.mxu0 %v1380
          %1398 = vmatprep.subr.bf16.mxu0 0
          %1399 = vmatpush2.bf16.msra.mxu0 0
          %1400 = vmatprep.subr.bf16.mxu0 0
          %1401 = vmatpush2.bf16.msra.mxu0 0
          %1402 = vmatprep.subr.bf16.mxu0 0
          %1403 = vmatpush2.bf16.msra.mxu0 0
          %1404 = vmatprep.subr.bf16.mxu0 0
          %1405 = vmatpush2.bf16.msra.mxu0 0
          %1406 = vmatprep.subr.bf16.mxu0 0
          %1407 = vmatpush2.bf16.msra.mxu0 0
          %1408 = vmatprep.subr.bf16.mxu0 0
          %1409 = vmatpush2.bf16.msra.mxu0 0
          %1410 = vmatprep.subr.bf16.mxu0 0
          %1411 = vmatpush2.bf16.msra.mxu0 0
          %1412 = vmatprep.subr.bf16.mxu0 0
          %1413 = vmatpush2.bf16.msra.mxu0 0
          %1414 = vmatprep.mubr.bf16.mxu0 0
          %1415 = vmatmul.mubr.bf16.gmra.mxu0 %v1377
          %v1416 = vpop.f32.mrf.mxu0
          %v1417 = vadd.f32 0.0, %v1416
          %v1418 = vpop.f32.mrf.mxu0
          %v1419 = vpop.f32.mrf.mxu0
          %v1420 = vpop.f32.mrf.mxu0
          %1421 = vdwg.mxu0
          %1422 = vrot.lane.b32.xlu0 %v1200, 112
          %v1423 = vpop.permute.xlu0 %1422
          %1424 = vrot.lane.b32.xlu0 %v1201, 112
          %v1425 = vpop.permute.xlu0 %1424
          %v1427 = vsel %vm1202, %v1423, 0
          %v1430 = vsel %vm1202, %v1425, 0
          %1432 = vmatprep.subr.bf16.mxu0 0
          %1433 = vmatpush1.bf16.xpose.msra.mxu0 0
          %1434 = vmatprep.subr.bf16.mxu0 0
          %1435 = vmatpush1.bf16.xpose.msra.mxu0 0
          %1436 = vmatprep.subr.bf16.mxu0 0
          %1437 = vmatpush1.bf16.xpose.msra.mxu0 0
          %1438 = vmatprep.subr.bf16.mxu0 0
          %1439 = vmatpush1.bf16.xpose.msra.mxu0 0
          %1440 = vmatprep.subr.bf16.mxu0 0
          %1441 = vmatpush1.bf16.xpose.msra.mxu0 0
          %1442 = vmatprep.subr.bf16.mxu0 0
          %1443 = vmatpush1.bf16.xpose.msra.mxu0 0
          %1444 = vmatprep.subr.bf16.mxu0 0
          %1445 = vmatpush1.bf16.xpose.msra.mxu0 0
          %1446 = vmatprep.subr.bf16.mxu0 0
          %1447 = vmatpush1.bf16.xpose.msra.mxu0 %v1430
          %1448 = vmatprep.subr.bf16.mxu0 0
          %1449 = vmatpush2.bf16.xpose.msra.mxu0 0
          %1450 = vmatprep.subr.bf16.mxu0 0
          %1451 = vmatpush2.bf16.xpose.msra.mxu0 0
          %1452 = vmatprep.subr.bf16.mxu0 0
          %1453 = vmatpush2.bf16.xpose.msra.mxu0 0
          %1454 = vmatprep.subr.bf16.mxu0 0
          %1455 = vmatpush2.bf16.xpose.msra.mxu0 0
          %1456 = vmatprep.subr.bf16.mxu0 0
          %1457 = vmatpush2.bf16.xpose.msra.mxu0 0
          %1458 = vmatprep.subr.bf16.mxu0 0
          %1459 = vmatpush2.bf16.xpose.msra.mxu0 0
          %1460 = vmatprep.subr.bf16.mxu0 0
          %1461 = vmatpush2.bf16.xpose.msra.mxu0 0
          %1462 = vmatprep.subr.bf16.mxu0 0
          %1463 = vmatpush2.bf16.xpose.msra.mxu0 0
          %1464 = vmatprep.mubr.bf16.mxu0 0
          %1465 = vmatmul.mubr.bf16.gmra.mxu0 %v1427
          %v1466 = vpop.f32.mrf.mxu0
          %v1467 = vadd.f32 0.0, %v1466
          %v1468 = vpop.f32.mrf.mxu0
          %v1469 = vpop.f32.mrf.mxu0
          %v1470 = vpop.f32.mrf.mxu0
          %1471 = vdwg.mxu0
          %v1472 = vsel %vm1202, %v1467, -inf
          %1473 = vmax.xlane.f32.xlu0 %v1472
          %v1474 = vpop.xlane.xlu0 %1473
          %v1475 = vsub.f32 %v1467, %v1474
          %v1476 = vmul.f32 %v1475, 1.442695
          %v1477 = vpow.pop %v1476
          %v1478 = vsel %vm1202, %v1477, 0.0
          %1479 = vadd.xlane.f32.xlu0 %v1478
          %v1480 = vpop.xlane.xlu0 %1479
          %v1481 = vrcp.pop %v1480
          %v1482 = vmul.f32 %v1477, %v1481
          %v1483 = vpack.c.bf16 %v1482, %v1482
          %1484 = vrot.lane.b32.xlu0 %v1261, 112
          %v1485 = vpop.permute.xlu0 %1484
          %v1487 = vsel %vm1202, %v1483, 0
          %v1490 = vsel %vm1265, %v1485, 0
          %1492 = vmatprep.subr.bf16.mxu0 0
          %1493 = vmatpush1.bf16.msra.mxu0 0
          %1494 = vmatprep.subr.bf16.mxu0 0
          %1495 = vmatpush1.bf16.msra.mxu0 0
          %1496 = vmatprep.subr.bf16.mxu0 0
          %1497 = vmatpush1.bf16.msra.mxu0 0
          %1498 = vmatprep.subr.bf16.mxu0 0
          %1499 = vmatpush1.bf16.msra.mxu0 0
          %1500 = vmatprep.subr.bf16.mxu0 0
          %1501 = vmatpush1.bf16.msra.mxu0 0
          %1502 = vmatprep.subr.bf16.mxu0 0
          %1503 = vmatpush1.bf16.msra.mxu0 0
          %1504 = vmatprep.subr.bf16.mxu0 0
          %1505 = vmatpush1.bf16.msra.mxu0 0
          %1506 = vmatprep.subr.bf16.mxu0 0
          %1507 = vmatpush1.bf16.msra.mxu0 %v1490
          %1508 = vmatprep.subr.bf16.mxu0 0
          %1509 = vmatpush2.bf16.msra.mxu0 0
          %1510 = vmatprep.subr.bf16.mxu0 0
          %1511 = vmatpush2.bf16.msra.mxu0 0
          %1512 = vmatprep.subr.bf16.mxu0 0
          %1513 = vmatpush2.bf16.msra.mxu0 0
          %1514 = vmatprep.subr.bf16.mxu0 0
          %1515 = vmatpush2.bf16.msra.mxu0 0
          %1516 = vmatprep.subr.bf16.mxu0 0
          %1517 = vmatpush2.bf16.msra.mxu0 0
          %1518 = vmatprep.subr.bf16.mxu0 0
          %1519 = vmatpush2.bf16.msra.mxu0 0
          %1520 = vmatprep.subr.bf16.mxu0 0
          %1521 = vmatpush2.bf16.msra.mxu0 0
          %1522 = vmatprep.subr.bf16.mxu0 0
          %1523 = vmatpush2.bf16.msra.mxu0 0
          %1524 = vmatprep.mubr.bf16.mxu0 0
          %1525 = vmatmul.mubr.bf16.gmra.mxu0 %v1487
          %v1526 = vpop.f32.mrf.mxu0
          %v1527 = vadd.f32 0.0, %v1526
          %v1528 = vpop.f32.mrf.mxu0
          %v1529 = vpop.f32.mrf.mxu0
          %v1530 = vpop.f32.mrf.mxu0
          %1531 = vdwg.mxu0
          %1532 = vrot.lane.b32.xlu0 %v1200, 104
          %v1533 = vpop.permute.xlu0 %1532
          %1534 = vrot.lane.b32.xlu0 %v1201, 104
          %v1535 = vpop.permute.xlu0 %1534
          %v1537 = vsel %vm1202, %v1533, 0
          %v1540 = vsel %vm1202, %v1535, 0
          %1542 = vmatprep.subr.bf16.mxu0 0
          %1543 = vmatpush1.bf16.xpose.msra.mxu0 0
          %1544 = vmatprep.subr.bf16.mxu0 0
          %1545 = vmatpush1.bf16.xpose.msra.mxu0 0
          %1546 = vmatprep.subr.bf16.mxu0 0
          %1547 = vmatpush1.bf16.xpose.msra.mxu0 0
          %1548 = vmatprep.subr.bf16.mxu0 0
          %1549 = vmatpush1.bf16.xpose.msra.mxu0 0
          %1550 = vmatprep.subr.bf16.mxu0 0
          %1551 = vmatpush1.bf16.xpose.msra.mxu0 0
          %1552 = vmatprep.subr.bf16.mxu0 0
          %1553 = vmatpush1.bf16.xpose.msra.mxu0 0
          %1554 = vmatprep.subr.bf16.mxu0 0
          %1555 = vmatpush1.bf16.xpose.msra.mxu0 0
          %1556 = vmatprep.subr.bf16.mxu0 0
          %1557 = vmatpush1.bf16.xpose.msra.mxu0 %v1540
          %1558 = vmatprep.subr.bf16.mxu0 0
          %1559 = vmatpush2.bf16.xpose.msra.mxu0 0
          %1560 = vmatprep.subr.bf16.mxu0 0
          %1561 = vmatpush2.bf16.xpose.msra.mxu0 0
          %1562 = vmatprep.subr.bf16.mxu0 0
          %1563 = vmatpush2.bf16.xpose.msra.mxu0 0
          %1564 = vmatprep.subr.bf16.mxu0 0
          %1565 = vmatpush2.bf16.xpose.msra.mxu0 0
          %1566 = vmatprep.subr.bf16.mxu0 0
          %1567 = vmatpush2.bf16.xpose.msra.mxu0 0
          %1568 = vmatprep.subr.bf16.mxu0 0
          %1569 = vmatpush2.bf16.xpose.msra.mxu0 0
          %1570 = vmatprep.subr.bf16.mxu0 0
          %1571 = vmatpush2.bf16.xpose.msra.mxu0 0
          %1572 = vmatprep.subr.bf16.mxu0 0
          %1573 = vmatpush2.bf16.xpose.msra.mxu0 0
          %1574 = vmatprep.mubr.bf16.mxu0 0
          %1575 = vmatmul.mubr.bf16.gmra.mxu0 %v1537
          %v1576 = vpop.f32.mrf.mxu0
          %v1577 = vadd.f32 0.0, %v1576
          %v1578 = vpop.f32.mrf.mxu0
          %v1579 = vpop.f32.mrf.mxu0
          %v1580 = vpop.f32.mrf.mxu0
          %1581 = vdwg.mxu0
          %v1582 = vsel %vm1202, %v1577, -inf
          %1583 = vmax.xlane.f32.xlu0 %v1582
          %v1584 = vpop.xlane.xlu0 %1583
          %v1585 = vsub.f32 %v1577, %v1584
          %v1586 = vmul.f32 %v1585, 1.442695
          %v1587 = vpow.pop %v1586
          %v1588 = vsel %vm1202, %v1587, 0.0
          %1589 = vadd.xlane.f32.xlu0 %v1588
          %v1590 = vpop.xlane.xlu0 %1589
          %v1591 = vrcp.pop %v1590
          %v1592 = vmul.f32 %v1587, %v1591
          %v1593 = vpack.c.bf16 %v1592, %v1592
          %1594 = vrot.lane.b32.xlu0 %v1261, 104
          %v1595 = vpop.permute.xlu0 %1594
          %v1597 = vsel %vm1202, %v1593, 0
          %v1600 = vsel %vm1265, %v1595, 0
          %1602 = vmatprep.subr.bf16.mxu0 0
          %1603 = vmatpush1.bf16.msra.mxu0 0
          %1604 = vmatprep.subr.bf16.mxu0 0
          %1605 = vmatpush1.bf16.msra.mxu0 0
          %1606 = vmatprep.subr.bf16.mxu0 0
          %1607 = vmatpush1.bf16.msra.mxu0 0
          %1608 = vmatprep.subr.bf16.mxu0 0
          %1609 = vmatpush1.bf16.msra.mxu0 0
          %1610 = vmatprep.subr.bf16.mxu0 0
          %1611 = vmatpush1.bf16.msra.mxu0 0
          %1612 = vmatprep.subr.bf16.mxu0 0
          %1613 = vmatpush1.bf16.msra.mxu0 0
          %1614 = vmatprep.subr.bf16.mxu0 0
          %1615 = vmatpush1.bf16.msra.mxu0 0
          %1616 = vmatprep.subr.bf16.mxu0 0
          %1617 = vmatpush1.bf16.msra.mxu0 %v1600
          %1618 = vmatprep.subr.bf16.mxu0 0
          %1619 = vmatpush2.bf16.msra.mxu0 0
          %1620 = vmatprep.subr.bf16.mxu0 0
          %1621 = vmatpush2.bf16.msra.mxu0 0
          %1622 = vmatprep.subr.bf16.mxu0 0
          %1623 = vmatpush2.bf16.msra.mxu0 0
          %1624 = vmatprep.subr.bf16.mxu0 0
          %1625 = vmatpush2.bf16.msra.mxu0 0
          %1626 = vmatprep.subr.bf16.mxu0 0
          %1627 = vmatpush2.bf16.msra.mxu0 0
          %1628 = vmatprep.subr.bf16.mxu0 0
          %1629 = vmatpush2.bf16.msra.mxu0 0
          %1630 = vmatprep.subr.bf16.mxu0 0
          %1631 = vmatpush2.bf16.msra.mxu0 0
          %1632 = vmatprep.subr.bf16.mxu0 0
          %1633 = vmatpush2.bf16.msra.mxu0 0
          %1634 = vmatprep.mubr.bf16.mxu0 0
          %1635 = vmatmul.mubr.bf16.gmra.mxu0 %v1597
          %v1636 = vpop.f32.mrf.mxu0
          %v1637 = vadd.f32 0.0, %v1636
          %v1638 = vpop.f32.mrf.mxu0
          %v1639 = vpop.f32.mrf.mxu0
          %v1640 = vpop.f32.mrf.mxu0
          %1641 = vdwg.mxu0
          %1643 = vrot.lane.b32.xlu0 %v1417, 8
          %v1644 = vpop.permute.xlu0 %1643
          %1647 = vrot.lane.b32.xlu0 %v1527, 16
          %v1648 = vpop.permute.xlu0 %1647
          %1651 = vrot.lane.b32.xlu0 %v1637, 24
          %v1652 = vpop.permute.xlu0 %1651
          %v1654 = vsel %vm1202, %v1304, %v1644
          %vm1655 = vcmask 130048
          %v1656 = vsel %vm1655, %v1654, %v1648
          %vm1657 = vcmask 195584
          %v1658 = vsel %vm1657, %v1656, %v1652
          %v1659 = vpack.c.bf16 %v1658, %v1658
          %v1660 = vld [vmem:[%s19] sm:$0xf]
          %v1661 = vld [vmem:[%s19 + $0x4] sm:$0xf]
          %v1662 = vld [vmem:[%s19 + $0x8] sm:$0xf]
          %v1663 = vld [vmem:[%s19 + $0xc] sm:$0xf]
          %v1664 = vld [vmem:[%s21] sm:$0x1]
          %v1666 = vlaneseq
          %v1667 = vshrl.u32 %v1666, 7
          %v1668 = vsub.s32 0, %v1667
          %v1669 = vrot.slane %v1664, %v1668
          %v1675 = vunpack.c.l.b16 %v1660
          %v1676 = vunpack.c.l.b16 %v1661
          %v1677 = vunpack.c.l.b16 %v1662
          %v1678 = vunpack.c.l.b16 %v1663
          %v1679 = vpack.c.b16 %v1676, %v1675
          %v1680 = vpack.c.b16 %v1678, %v1677
          %v1684 = vsel %vm1029, %v1659, 0
          %1686 = vmatprep.subr.bf16.mxu0 0
          %1687 = vmatpush1.bf16.msra.mxu0 0
          %1688 = vmatprep.subr.bf16.mxu0 0
          %1689 = vmatpush1.bf16.msra.mxu0 0
          %1690 = vmatprep.subr.bf16.mxu0 0
          %1691 = vmatpush1.bf16.msra.mxu0 0
          %1692 = vmatprep.subr.bf16.mxu0 0
          %1693 = vmatpush1.bf16.msra.mxu0 0
          %1694 = vmatprep.subr.bf16.mxu0 0
          %1695 = vmatpush1.bf16.msra.mxu0 0
          %1696 = vmatprep.subr.bf16.mxu0 0
          %1697 = vmatpush1.bf16.msra.mxu0 0
          %1698 = vmatprep.subr.bf16.mxu0 0
          %1699 = vmatpush1.bf16.msra.mxu0 %v1680
          %1700 = vmatprep.subr.bf16.mxu0 0
          %1701 = vmatpush1.bf16.msra.mxu0 %v1679
          %1702 = vmatprep.subr.bf16.mxu0 0
          %1703 = vmatpush2.bf16.msra.mxu0 0
          %1704 = vmatprep.subr.bf16.mxu0 0
          %1705 = vmatpush2.bf16.msra.mxu0 0
          %1706 = vmatprep.subr.bf16.mxu0 0
          %1707 = vmatpush2.bf16.msra.mxu0 0
          %1708 = vmatprep.subr.bf16.mxu0 0
          %1709 = vmatpush2.bf16.msra.mxu0 0
          %1710 = vmatprep.subr.bf16.mxu0 0
          %1711 = vmatpush2.bf16.msra.mxu0 0
          %1712 = vmatprep.subr.bf16.mxu0 0
          %1713 = vmatpush2.bf16.msra.mxu0 0
          %1714 = vmatprep.subr.bf16.mxu0 0
          %1715 = vmatpush2.bf16.msra.mxu0 0
          %1716 = vmatprep.subr.bf16.mxu0 0
          %1717 = vmatpush2.bf16.msra.mxu0 0
          %1718 = vmatprep.mubr.bf16.mxu0 0
          %1719 = vmatmul.mubr.bf16.gmra.mxu0 %v1684
          %v1720 = vpop.f32.mrf.mxu0
          %v1721 = vadd.f32 %v1669, %v1720
          %v1722 = vpop.f32.mrf.mxu0
          %v1723 = vpop.f32.mrf.mxu0
          %v1724 = vpop.f32.mrf.mxu0
          %1725 = vdwg.mxu0
          %v1726 = vadd.f32 %v1004, %v1721
          %v1727 = vld [vmem:[%s23] sm:$0x1]
          %v1728 = vld [vmem:[%s25] sm:$0x1]
          %v1729 = vsel %vm1029, %v1726, 0.0
          %1730 = vadd.xlane.f32.xlu0 %v1729
          %v1731 = vpop.xlane.xlu0 %1730
          %v1732 = vrcp.pop 32.0
          %v1733 = vmul.f32 %v1731, %v1732
          %v1734 = vsub.f32 %v1726, %v1733
          %v1735 = vmul.f32 %v1734, %v1734
          %v1736 = vsel %vm1029, %v1735, 0.0
          %1737 = vadd.xlane.f32.xlu0 %v1736
          %v1738 = vpop.xlane.xlu0 %1737
          %v1739 = vmul.f32 %v1738, %v1732
          %v1740 = vadd.f32 %v1739, 1e-05
          %v1741 = vrsqrt.pop %v1740
          %v1742 = vmul.f32 %v1734, %v1741
          %v1744 = vlaneseq
          %v1745 = vshrl.u32 %v1744, 7
          %v1746 = vsub.s32 0, %v1745
          %v1747 = vrot.slane %v1727, %v1746
          %v1749 = vmul.f32 %v1742, %v1747
          %v1751 = vlaneseq
          %v1752 = vshrl.u32 %v1751, 7
          %v1753 = vsub.s32 0, %v1752
          %v1754 = vrot.slane %v1728, %v1753
          %v1756 = vadd.f32 %v1749, %v1754
          %1757 = vst.msk [vmem:[#allocation2] sm:$0xff] %vm1029, %v1756
          %v1758 = vpack.c.bf16 %v1756, %v1756
          %v1759 = vld [vmem:[%s27] sm:$0xf]
          %v1760 = vld [vmem:[%s27 + $0x4] sm:$0xf]
          %v1761 = vld [vmem:[%s27 + $0x8] sm:$0xf]
          %v1762 = vld [vmem:[%s27 + $0xc] sm:$0xf]
          %v1763 = vld [vmem:[%s33] sm:$0x1]
          %v1765 = vlaneseq
          %v1766 = vshrl.u32 %v1765, 7
          %v1767 = vsub.s32 0, %v1766
          %v1768 = vrot.slane %v1763, %v1767
          %v1774 = vunpack.c.l.b16 %v1759
          %v1775 = vunpack.c.l.b16 %v1760
          %v1776 = vunpack.c.l.b16 %v1761
          %v1777 = vunpack.c.l.b16 %v1762
          %v1778 = vpack.c.b16 %v1775, %v1774
          %v1779 = vpack.c.b16 %v1777, %v1776
          %v1783 = vsel %vm1029, %v1758, 0
          %1785 = vmatprep.subr.bf16.mxu0 0
          %1786 = vmatpush1.bf16.msra.mxu0 0
          %1787 = vmatprep.subr.bf16.mxu0 0
          %1788 = vmatpush1.bf16.msra.mxu0 0
          %1789 = vmatprep.subr.bf16.mxu0 0
          %1790 = vmatpush1.bf16.msra.mxu0 0
          %1791 = vmatprep.subr.bf16.mxu0 0
          %1792 = vmatpush1.bf16.msra.mxu0 0
          %1793 = vmatprep.subr.bf16.mxu0 0
          %1794 = vmatpush1.bf16.msra.mxu0 0
          %1795 = vmatprep.subr.bf16.mxu0 0
          %1796 = vmatpush1.bf16.msra.mxu0 0
          %1797 = vmatprep.subr.bf16.mxu0 0
          %1798 = vmatpush1.bf16.msra.mxu0 %v1779
          %1799 = vmatprep.subr.bf16.mxu0 0
          %1800 = vmatpush1.bf16.msra.mxu0 %v1778
          %1801 = vmatprep.subr.bf16.mxu0 0
          %1802 = vmatpush2.bf16.msra.mxu0 0
          %1803 = vmatprep.subr.bf16.mxu0 0
          %1804 = vmatpush2.bf16.msra.mxu0 0
          %1805 = vmatprep.subr.bf16.mxu0 0
          %1806 = vmatpush2.bf16.msra.mxu0 0
          %1807 = vmatprep.subr.bf16.mxu0 0
          %1808 = vmatpush2.bf16.msra.mxu0 0
          %1809 = vmatprep.subr.bf16.mxu0 0
          %1810 = vmatpush2.bf16.msra.mxu0 0
          %1811 = vmatprep.subr.bf16.mxu0 0
          %1812 = vmatpush2.bf16.msra.mxu0 0
          %1813 = vmatprep.subr.bf16.mxu0 0
          %1814 = vmatpush2.bf16.msra.mxu0 0
          %1815 = vmatprep.subr.bf16.mxu0 0
          %1816 = vmatpush2.bf16.msra.mxu0 0
          %1817 = vmatprep.mubr.bf16.mxu0 0
          %1818 = vmatmul.mubr.bf16.gmra.mxu0 %v1783
          %v1819 = vpop.f32.mrf.mxu0
          %v1820 = vadd.f32 %v1768, %v1819
          %v1821 = vpop.f32.mrf.mxu0
          %v1822 = vpop.f32.mrf.mxu0
          %v1823 = vpop.f32.mrf.mxu0
          %1824 = vdwg.mxu0
          %v1825 = vmul.f32 %v1820, 0.35355338
          %1826 = vst.msk [vmem:[#allocation3] sm:$0xff] %vm1029, %v1825
          %vm1827 = vcmask 7168
          %1828 = vst.msk [vmem:[#allocation4] sm:$0xff] %vm1827, -inf
          %1829 = vst.msk [vmem:[#allocation4 + $0x8] sm:$0xff] %vm1827, -inf
          %1830 = vst.msk [vmem:[#allocation4 + $0x10] sm:$0xff] %vm1827, -inf
          %1831 = vst.msk [vmem:[#allocation4 + $0x18] sm:$0xff] %vm1827, -inf
          %1832 = vst.msk [vmem:[#allocation5] sm:$0xff] %vm1827, 0.0
          %1833 = vst.msk [vmem:[#allocation5 + $0x8] sm:$0xff] %vm1827, 0.0
          %1834 = vst.msk [vmem:[#allocation5 + $0x10] sm:$0xff] %vm1827, 0.0
          %1835 = vst.msk [vmem:[#allocation5 + $0x18] sm:$0xff] %vm1827, 0.0
          %1836 = vst.msk [vmem:[#allocation6] sm:$0xff] %vm1202, 0.0
          %1837 = vst.msk [vmem:[#allocation6 + $0x8] sm:$0xff] %vm1202, 0.0
          %1838 = vst.msk [vmem:[#allocation6 + $0x10] sm:$0xff] %vm1202, 0.0
          %1839 = vst.msk [vmem:[#allocation6 + $0x18] sm:$0xff] %vm1202, 0.0
        $region156: #{tpu_custom_call.1} parent=135 // pred_fallthru
          _
        %v1840 = vld [vmem:[%s998] sm:$0xf]
        %v1841 = vld [vmem:[%s998 + $0x4] sm:$0xf]
        %v1842 = vld [vmem:[%s998 + $0x8] sm:$0xf]
        %v1843 = vld [vmem:[%s998 + $0xc] sm:$0xf]
        %v1844 = vld [vmem:[%s29] sm:$0xf]
        %v1845 = vld [vmem:[%s29 + $0x4] sm:$0xf]
        %v1846 = vld [vmem:[%s29 + $0x8] sm:$0xf]
        %v1847 = vld [vmem:[%s29 + $0xc] sm:$0xf]
        %v1848 = vld [vmem:[%s35] sm:$0xff]
        %v1849 = vld [vmem:[%s35 + $0x8] sm:$0xff]
        %v1850 = vld [vmem:[%s35 + $0x10] sm:$0xff]
        %v1851 = vld [vmem:[%s35 + $0x18] sm:$0xff]
        %1853 = vset.pattern.permute.xlu0 0
        %1854 = vperm.xlu0 %1853, %v1848
        %v1855 = vpop.permute.xlu0 %1854
        %1858 = vset.pattern.permute.xlu0 0
        %1859 = vperm.xlu0 %1858, %v1849
        %v1860 = vpop.permute.xlu0 %1859
        %1863 = vset.pattern.permute.xlu0 0
        %1864 = vperm.xlu0 %1863, %v1850
        %v1865 = vpop.permute.xlu0 %1864
        %1868 = vset.pattern.permute.xlu0 0
        %1869 = vperm.xlu0 %1868, %v1851
        %v1870 = vpop.permute.xlu0 %1869
        %v1876 = vunpack.c.l.b16 %v1844
        %v1877 = vunpack.c.l.b16 %v1845
        %v1878 = vunpack.c.l.b16 %v1846
        %v1879 = vunpack.c.l.b16 %v1847
        %v1880 = vpack.c.b16 %v1877, %v1876
        %v1881 = vpack.c.b16 %v1879, %v1878
        %v1886 = vunpack.c.l.b16 %v1840
        %v1887 = vunpack.c.l.b16 %v1841
        %v1888 = vunpack.c.l.b16 %v1842
        %v1889 = vunpack.c.l.b16 %v1843
        %v1890 = vpack.c.b16 %v1887, %v1886
        %v1891 = vpack.c.b16 %v1889, %v1888
        %vm1894 = vcmask 261120
        %v1896 = vsel %vm1894, %v1880, 0
        %v1899 = vsel %vm1894, %v1881, 0
        %1901 = vmatprep.subr.bf16.mxu0 0
        %1902 = vmatpush1.bf16.msra.mxu0 0
        %1903 = vmatprep.subr.bf16.mxu0 0
        %1904 = vmatpush1.bf16.msra.mxu0 0
        %1905 = vmatprep.subr.bf16.mxu0 0
        %1906 = vmatpush1.bf16.msra.mxu0 0
        %1907 = vmatprep.subr.bf16.mxu0 0
        %1908 = vmatpush1.bf16.msra.mxu0 0
        %1909 = vmatprep.subr.bf16.mxu0 0
        %1910 = vmatpush1.bf16.msra.mxu0 0
        %1911 = vmatprep.subr.bf16.mxu0 0
        %1912 = vmatpush1.bf16.msra.mxu0 0
        %1913 = vmatprep.subr.bf16.mxu0 0
        %1914 = vmatpush1.bf16.msra.mxu0 %v1891
        %1915 = vmatprep.subr.bf16.mxu0 0
        %1916 = vmatpush1.bf16.msra.mxu0 %v1890
        %1917 = vmatprep.subr.bf16.mxu0 0
        %1918 = vmatpush2.bf16.msra.mxu0 0
        %1919 = vmatprep.subr.bf16.mxu0 0
        %1920 = vmatpush2.bf16.msra.mxu0 0
        %1921 = vmatprep.subr.bf16.mxu0 0
        %1922 = vmatpush2.bf16.msra.mxu0 0
        %1923 = vmatprep.subr.bf16.mxu0 0
        %1924 = vmatpush2.bf16.msra.mxu0 0
        %1925 = vmatprep.subr.bf16.mxu0 0
        %1926 = vmatpush2.bf16.msra.mxu0 0
        %1927 = vmatprep.subr.bf16.mxu0 0
        %1928 = vmatpush2.bf16.msra.mxu0 0
        %1929 = vmatprep.subr.bf16.mxu0 0
        %1930 = vmatpush2.bf16.msra.mxu0 0
        %1931 = vmatprep.subr.bf16.mxu0 0
        %1932 = vmatpush2.bf16.msra.mxu0 0
        %1933 = vmatprep.mubr.bf16.mxu0 0
        %1934 = vmatmul.mubr.bf16.gmra.mxu0 %v1896
        %v1935 = vpop.f32.mrf.mxu0
        %v1936 = vadd.f32 %v1855, %v1935
        %v1937 = vpop.f32.mrf.mxu0
        %v1938 = vpop.f32.mrf.mxu0
        %v1939 = vadd.f32 %v1860, %v1938
        %v1940 = vpop.f32.mrf.mxu0
        %1941 = vmatprep.mubr.bf16.mxu0 0
        %1942 = vmatmul.mubr.bf16.gmra.mxu0 %v1899
        %v1943 = vpop.f32.mrf.mxu0
        %v1944 = vadd.f32 %v1865, %v1943
        %v1945 = vpop.f32.mrf.mxu0
        %v1946 = vpop.f32.mrf.mxu0
        %v1947 = vadd.f32 %v1870, %v1946
        %v1948 = vpop.f32.mrf.mxu0
        %1949 = vdwg.mxu0
        %v1950 = vld [vmem:[%s31] sm:$0xf]
        %v1951 = vld [vmem:[%s31 + $0x4] sm:$0xf]
        %v1952 = vld [vmem:[%s31 + $0x8] sm:$0xf]
        %v1953 = vld [vmem:[%s31 + $0xc] sm:$0xf]
        %v1954 = vld [vmem:[%s37] sm:$0xff]
        %v1955 = vld [vmem:[%s37 + $0x8] sm:$0xff]
        %v1956 = vld [vmem:[%s37 + $0x10] sm:$0xff]
        %v1957 = vld [vmem:[%s37 + $0x18] sm:$0xff]
        %1959 = vset.pattern.permute.xlu0 0
        %1960 = vperm.xlu0 %1959, %v1954
        %v1961 = vpop.permute.xlu0 %1960
        %1964 = vset.pattern.permute.xlu0 0
        %1965 = vperm.xlu0 %1964, %v1955
        %v1966 = vpop.permute.xlu0 %1965
        %1969 = vset.pattern.permute.xlu0 0
        %1970 = vperm.xlu0 %1969, %v1956
        %v1971 = vpop.permute.xlu0 %1970
        %1974 = vset.pattern.permute.xlu0 0
        %1975 = vperm.xlu0 %1974, %v1957
        %v1976 = vpop.permute.xlu0 %1975
        %v1982 = vunpack.c.l.b16 %v1950
        %v1983 = vunpack.c.l.b16 %v1951
        %v1984 = vunpack.c.l.b16 %v1952
        %v1985 = vunpack.c.l.b16 %v1953
        %v1986 = vpack.c.b16 %v1983, %v1982
        %v1987 = vpack.c.b16 %v1985, %v1984
        %v1989 = vsel %vm1894, %v1986, 0
        %v1992 = vsel %vm1894, %v1987, 0
        %1994 = vmatprep.subr.bf16.mxu0 0
        %1995 = vmatpush1.bf16.msra.mxu0 0
        %1996 = vmatprep.subr.bf16.mxu0 0
        %1997 = vmatpush1.bf16.msra.mxu0 0
        %1998 = vmatprep.subr.bf16.mxu0 0
        %1999 = vmatpush1.bf16.msra.mxu0 0
        %2000 = vmatprep.subr.bf16.mxu0 0
        %2001 = vmatpush1.bf16.msra.mxu0 0
        %2002 = vmatprep.subr.bf16.mxu0 0
        %2003 = vmatpush1.bf16.msra.mxu0 0
        %2004 = vmatprep.subr.bf16.mxu0 0
        %2005 = vmatpush1.bf16.msra.mxu0 0
        %2006 = vmatprep.subr.bf16.mxu0 0
        %2007 = vmatpush1.bf16.msra.mxu0 %v1891
        %2008 = vmatprep.subr.bf16.mxu0 0
        %2009 = vmatpush1.bf16.msra.mxu0 %v1890
        %2010 = vmatprep.subr.bf16.mxu0 0
        %2011 = vmatpush2.bf16.msra.mxu0 0
        %2012 = vmatprep.subr.bf16.mxu0 0
        %2013 = vmatpush2.bf16.msra.mxu0 0
        %2014 = vmatprep.subr.bf16.mxu0 0
        %2015 = vmatpush2.bf16.msra.mxu0 0
        %2016 = vmatprep.subr.bf16.mxu0 0
        %2017 = vmatpush2.bf16.msra.mxu0 0
        %2018 = vmatprep.subr.bf16.mxu0 0
        %2019 = vmatpush2.bf16.msra.mxu0 0
        %2020 = vmatprep.subr.bf16.mxu0 0
        %2021 = vmatpush2.bf16.msra.mxu0 0
        %2022 = vmatprep.subr.bf16.mxu0 0
        %2023 = vmatpush2.bf16.msra.mxu0 0
        %2024 = vmatprep.subr.bf16.mxu0 0
        %2025 = vmatpush2.bf16.msra.mxu0 0
        %2026 = vmatprep.mubr.bf16.mxu0 0
        %2027 = vmatmul.mubr.bf16.gmra.mxu0 %v1989
        %v2028 = vpop.f32.mrf.mxu0
        %v2029 = vadd.f32 %v1961, %v2028
        %v2030 = vpop.f32.mrf.mxu0
        %v2031 = vpop.f32.mrf.mxu0
        %v2032 = vadd.f32 %v1966, %v2031
        %v2033 = vpop.f32.mrf.mxu0
        %2034 = vmatprep.mubr.bf16.mxu0 0
        %2035 = vmatmul.mubr.bf16.gmra.mxu0 %v1992
        %v2036 = vpop.f32.mrf.mxu0
        %v2037 = vadd.f32 %v1971, %v2036
        %v2038 = vpop.f32.mrf.mxu0
        %v2039 = vpop.f32.mrf.mxu0
        %v2040 = vadd.f32 %v1976, %v2039
        %v2041 = vpop.f32.mrf.mxu0
        %2042 = vdwg.mxu0
        %v2043 = vld [vmem:[#allocation3] sm:$0xff]
        %v2044 = vld [vmem:[#allocation7] sm:$0xff]
        %v2045 = vpack.c.bf16 %v2043, %v2043
        %v2046 = vpack.c.bf16 %v1936, %v1936
        %vm2047 = vcmask 64512
        %v2049 = vsel %vm2047, %v2045, 0
        %vm2051 = vcmask 1043456
        %v2053 = vsel %vm2051, %v2046, 0
        %2055 = vmatprep.subr.bf16.mxu0 0
        %2056 = vmatpush1.bf16.msra.mxu0 0
        %2057 = vmatprep.subr.bf16.mxu0 0
        %2058 = vmatpush1.bf16.msra.mxu0 0
        %2059 = vmatprep.subr.bf16.mxu0 0
        %2060 = vmatpush1.bf16.msra.mxu0 0
        %2061 = vmatprep.subr.bf16.mxu0 0
        %2062 = vmatpush1.bf16.msra.mxu0 0
        %2063 = vmatprep.subr.bf16.mxu0 0
        %2064 = vmatpush1.bf16.msra.mxu0 0
        %2065 = vmatprep.subr.bf16.mxu0 0
        %2066 = vmatpush1.bf16.msra.mxu0 0
        %2067 = vmatprep.subr.bf16.mxu0 0
        %2068 = vmatpush1.bf16.msra.mxu0 0
        %2069 = vmatprep.subr.bf16.mxu0 0
        %2070 = vmatpush1.bf16.msra.mxu0 %v2053
        %2071 = vmatprep.subr.bf16.mxu0 0
        %2072 = vmatpush2.bf16.msra.mxu0 0
        %2073 = vmatprep.subr.bf16.mxu0 0
        %2074 = vmatpush2.bf16.msra.mxu0 0
        %2075 = vmatprep.subr.bf16.mxu0 0
        %2076 = vmatpush2.bf16.msra.mxu0 0
        %2077 = vmatprep.subr.bf16.mxu0 0
        %2078 = vmatpush2.bf16.msra.mxu0 0
        %2079 = vmatprep.subr.bf16.mxu0 0
        %2080 = vmatpush2.bf16.msra.mxu0 0
        %2081 = vmatprep.subr.bf16.mxu0 0
        %2082 = vmatpush2.bf16.msra.mxu0 0
        %2083 = vmatprep.subr.bf16.mxu0 0
        %2084 = vmatpush2.bf16.msra.mxu0 0
        %2085 = vmatprep.subr.bf16.mxu0 0
        %2086 = vmatpush2.bf16.msra.mxu0 0
        %2087 = vmatprep.mubr.bf16.mxu0 0
        %2088 = vmatmul.mubr.bf16.gmra.mxu0 %v2049
        %v2089 = vpop.f32.mrf.mxu0
        %v2090 = vadd.f32 %v2044, %v2089
        %v2091 = vpop.f32.mrf.mxu0
        %v2092 = vpop.f32.mrf.mxu0
        %v2093 = vpop.f32.mrf.mxu0
        %2094 = vdwg.mxu0
        %v2095 = vld [vmem:[#allocation4] sm:$0xff]
        %vm2096 = vcmask 130048
        %v2097 = vsel %vm2096, %v2090, -inf
        %2098 = vmax.xlane.f32.xlu0 %v2097
        %v2099 = vpop.xlane.xlu0 %2098
        %v2100 = vmax.f32 %v2095, %v2099
        %v2101 = vsub.f32 %v2095, %v2100
        %v2102 = vmul.f32 %v2101, 1.442695
        %v2103 = vpow.pop %v2102
        %2105 = vset.pattern.permute.xlu0 0
        %2106 = vperm.xlu0 %2105, %v2100
        %v2107 = vpop.permute.xlu0 %2106
        %v2109 = vsub.f32 %v2090, %v2107
        %v2110 = vmul.f32 %v2109, 1.442695
        %v2111 = vpow.pop %v2110
        %v2112 = vld [vmem:[#allocation5] sm:$0xff]
        %v2113 = vmul.f32 %v2103, %v2112
        %v2114 = vsel %vm2096, %v2111, 0.0
        %2115 = vadd.xlane.f32.xlu0 %v2114
        %v2116 = vpop.xlane.xlu0 %2115
        %v2117 = vadd.f32 %v2113, %v2116
        %vm2118 = vcmask 7168
        %2119 = vst.msk [vmem:[#allocation5] sm:$0xff] %vm2118, %v2117
        %v2120 = vld [vmem:[#allocation6] sm:$0xff]
        %2122 = vset.pattern.permute.xlu0 0
        %2123 = vperm.xlu0 %2122, %v2103
        %v2124 = vpop.permute.xlu0 %2123
        %v2126 = vmul.f32 %v2124, %v2120
        %v2127 = vpack.c.bf16 %v2111, %v2111
        %v2128 = vpack.c.bf16 %v2029, %v2029
        %v2130 = vsel %vm2096, %v2127, 0
        %v2133 = vsel %vm2096, %v2128, 0
        %2135 = vmatprep.subr.bf16.mxu0 0
        %2136 = vmatpush1.bf16.xpose.msra.mxu0 0
        %2137 = vmatprep.subr.bf16.mxu0 0
        %2138 = vmatpush1.bf16.xpose.msra.mxu0 0
        %2139 = vmatprep.subr.bf16.mxu0 0
        %2140 = vmatpush1.bf16.xpose.msra.mxu0 0
        %2141 = vmatprep.subr.bf16.mxu0 0
        %2142 = vmatpush1.bf16.xpose.msra.mxu0 0
        %2143 = vmatprep.subr.bf16.mxu0 0
        %2144 = vmatpush1.bf16.xpose.msra.mxu0 0
        %2145 = vmatprep.subr.bf16.mxu0 0
        %2146 = vmatpush1.bf16.xpose.msra.mxu0 0
        %2147 = vmatprep.subr.bf16.mxu0 0
        %2148 = vmatpush1.bf16.xpose.msra.mxu0 0
        %2149 = vmatprep.subr.bf16.mxu0 0
        %2150 = vmatpush1.bf16.xpose.msra.mxu0 %v2133
        %2151 = vmatprep.subr.bf16.mxu0 0
        %2152 = vmatpush2.bf16.xpose.msra.mxu0 0
        %2153 = vmatprep.subr.bf16.mxu0 0
        %2154 = vmatpush2.bf16.xpose.msra.mxu0 0
        %2155 = vmatprep.subr.bf16.mxu0 0
        %2156 = vmatpush2.bf16.xpose.msra.mxu0 0
        %2157 = vmatprep.subr.bf16.mxu0 0
        %2158 = vmatpush2.bf16.xpose.msra.mxu0 0
        %2159 = vmatprep.subr.bf16.mxu0 0
        %2160 = vmatpush2.bf16.xpose.msra.mxu0 0
        %2161 = vmatprep.subr.bf16.mxu0 0
        %2162 = vmatpush2.bf16.xpose.msra.mxu0 0
        %2163 = vmatprep.subr.bf16.mxu0 0
        %2164 = vmatpush2.bf16.xpose.msra.mxu0 0
        %2165 = vmatprep.subr.bf16.mxu0 0
        %2166 = vmatpush2.bf16.xpose.msra.mxu0 0
        %2167 = vmatprep.mubr.bf16.mxu0 0
        %2168 = vmatmul.mubr.bf16.gmra.mxu0 %v2130
        %v2169 = vpop.f32.mrf.mxu0
        %v2170 = vadd.f32 0.0, %v2169
        %v2171 = vpop.f32.mrf.mxu0
        %v2172 = vpop.f32.mrf.mxu0
        %v2173 = vpop.f32.mrf.mxu0
        %2174 = vdwg.mxu0
        %v2175 = vadd.f32 %v2126, %v2170
        %2176 = vst.msk [vmem:[#allocation6] sm:$0xff] %vm2047, %v2175
        %2177 = vst.msk [vmem:[#allocation4] sm:$0xff] %vm2118, %v2100
        %v2178 = vpack.c.bf16 %v1939, %v1939
        %2180 = vrot.lane.b32.xlu0 %v2045, 120
        %v2181 = vpop.permute.xlu0 %2180
        %v2183 = vsel %vm2047, %v2181, 0
        %v2186 = vsel %vm2051, %v2178, 0
        %2188 = vmatprep.subr.bf16.mxu0 0
        %2189 = vmatpush1.bf16.msra.mxu0 0
        %2190 = vmatprep.subr.bf16.mxu0 0
        %2191 = vmatpush1.bf16.msra.mxu0 0
        %2192 = vmatprep.subr.bf16.mxu0 0
        %2193 = vmatpush1.bf16.msra.mxu0 0
        %2194 = vmatprep.subr.bf16.mxu0 0
        %2195 = vmatpush1.bf16.msra.mxu0 0
        %2196 = vmatprep.subr.bf16.mxu0 0
        %2197 = vmatpush1.bf16.msra.mxu0 0
        %2198 = vmatprep.subr.bf16.mxu0 0
        %2199 = vmatpush1.bf16.msra.mxu0 0
        %2200 = vmatprep.subr.bf16.mxu0 0
        %2201 = vmatpush1.bf16.msra.mxu0 0
        %2202 = vmatprep.subr.bf16.mxu0 0
        %2203 = vmatpush1.bf16.msra.mxu0 %v2186
        %2204 = vmatprep.subr.bf16.mxu0 0
        %2205 = vmatpush2.bf16.msra.mxu0 0
        %2206 = vmatprep.subr.bf16.mxu0 0
        %2207 = vmatpush2.bf16.msra.mxu0 0
        %2208 = vmatprep.subr.bf16.mxu0 0
        %2209 = vmatpush2.bf16.msra.mxu0 0
        %2210 = vmatprep.subr.bf16.mxu0 0
        %2211 = vmatpush2.bf16.msra.mxu0 0
        %2212 = vmatprep.subr.bf16.mxu0 0
        %2213 = vmatpush2.bf16.msra.mxu0 0
        %2214 = vmatprep.subr.bf16.mxu0 0
        %2215 = vmatpush2.bf16.msra.mxu0 0
        %2216 = vmatprep.subr.bf16.mxu0 0
        %2217 = vmatpush2.bf16.msra.mxu0 0
        %2218 = vmatprep.subr.bf16.mxu0 0
        %2219 = vmatpush2.bf16.msra.mxu0 0
        %2220 = vmatprep.mubr.bf16.mxu0 0
        %2221 = vmatmul.mubr.bf16.gmra.mxu0 %v2183
        %v2222 = vpop.f32.mrf.mxu0
        %v2223 = vadd.f32 %v2044, %v2222
        %v2224 = vpop.f32.mrf.mxu0
        %v2225 = vpop.f32.mrf.mxu0
        %v2226 = vpop.f32.mrf.mxu0
        %2227 = vdwg.mxu0
        %s2228 = scalar_lea.vmem [#allocation4], 8
        %v2229 = vld [vmem:[%s2228] sm:$0xff]
        %v2230 = vsel %vm2096, %v2223, -inf
        %2231 = vmax.xlane.f32.xlu0 %v2230
        %v2232 = vpop.xlane.xlu0 %2231
        %v2233 = vmax.f32 %v2229, %v2232
        %v2234 = vsub.f32 %v2229, %v2233
        %v2235 = vmul.f32 %v2234, 1.442695
        %v2236 = vpow.pop %v2235
        %2238 = vset.pattern.permute.xlu0 0
        %2239 = vperm.xlu0 %2238, %v2233
        %v2240 = vpop.permute.xlu0 %2239
        %v2242 = vsub.f32 %v2223, %v2240
        %v2243 = vmul.f32 %v2242, 1.442695
        %v2244 = vpow.pop %v2243
        %s2245 = scalar_lea.vmem [#allocation5], 8
        %v2246 = vld [vmem:[%s2245] sm:$0xff]
        %v2247 = vmul.f32 %v2236, %v2246
        %v2248 = vsel %vm2096, %v2244, 0.0
        %2249 = vadd.xlane.f32.xlu0 %v2248
        %v2250 = vpop.xlane.xlu0 %2249
        %v2251 = vadd.f32 %v2247, %v2250
        %2252 = vst.msk [vmem:[%s2245] sm:$0xff] %vm2118, %v2251
        %s2253 = scalar_lea.vmem [#allocation6], 8
        %v2254 = vld [vmem:[%s2253] sm:$0xff]
        %2256 = vset.pattern.permute.xlu0 0
        %2257 = vperm.xlu0 %2256, %v2236
        %v2258 = vpop.permute.xlu0 %2257
        %v2260 = vmul.f32 %v2258, %v2254
        %v2261 = vpack.c.bf16 %v2244, %v2244
        %v2262 = vpack.c.bf16 %v2032, %v2032
        %v2264 = vsel %vm2096, %v2261, 0
        %v2267 = vsel %vm2096, %v2262, 0
        %2269 = vmatprep.subr.bf16.mxu0 0
        %2270 = vmatpush1.bf16.xpose.msra.mxu0 0
        %2271 = vmatprep.subr.bf16.mxu0 0
        %2272 = vmatpush1.bf16.xpose.msra.mxu0 0
        %2273 = vmatprep.subr.bf16.mxu0 0
        %2274 = vmatpush1.bf16.xpose.msra.mxu0 0
        %2275 = vmatprep.subr.bf16.mxu0 0
        %2276 = vmatpush1.bf16.xpose.msra.mxu0 0
        %2277 = vmatprep.subr.bf16.mxu0 0
        %2278 = vmatpush1.bf16.xpose.msra.mxu0 0
        %2279 = vmatprep.subr.bf16.mxu0 0
        %2280 = vmatpush1.bf16.xpose.msra.mxu0 0
        %2281 = vmatprep.subr.bf16.mxu0 0
        %2282 = vmatpush1.bf16.xpose.msra.mxu0 0
        %2283 = vmatprep.subr.bf16.mxu0 0
        %2284 = vmatpush1.bf16.xpose.msra.mxu0 %v2267
        %2285 = vmatprep.subr.bf16.mxu0 0
        %2286 = vmatpush2.bf16.xpose.msra.mxu0 0
        %2287 = vmatprep.subr.bf16.mxu0 0
        %2288 = vmatpush2.bf16.xpose.msra.mxu0 0
        %2289 = vmatprep.subr.bf16.mxu0 0
        %2290 = vmatpush2.bf16.xpose.msra.mxu0 0
        %2291 = vmatprep.subr.bf16.mxu0 0
        %2292 = vmatpush2.bf16.xpose.msra.mxu0 0
        %2293 = vmatprep.subr.bf16.mxu0 0
        %2294 = vmatpush2.bf16.xpose.msra.mxu0 0
        %2295 = vmatprep.subr.bf16.mxu0 0
        %2296 = vmatpush2.bf16.xpose.msra.mxu0 0
        %2297 = vmatprep.subr.bf16.mxu0 0
        %2298 = vmatpush2.bf16.xpose.msra.mxu0 0
        %2299 = vmatprep.subr.bf16.mxu0 0
        %2300 = vmatpush2.bf16.xpose.msra.mxu0 0
        %2301 = vmatprep.mubr.bf16.mxu0 0
        %2302 = vmatmul.mubr.bf16.gmra.mxu0 %v2264
        %v2303 = vpop.f32.mrf.mxu0
        %v2304 = vadd.f32 0.0, %v2303
        %v2305 = vpop.f32.mrf.mxu0
        %v2306 = vpop.f32.mrf.mxu0
        %v2307 = vpop.f32.mrf.mxu0
        %2308 = vdwg.mxu0
        %v2309 = vadd.f32 %v2260, %v2304
        %2310 = vst.msk [vmem:[%s2253] sm:$0xff] %vm2047, %v2309
        %2311 = vst.msk [vmem:[%s2228] sm:$0xff] %vm2118, %v2233
        %v2312 = vpack.c.bf16 %v1944, %v1944
        %2313 = vrot.lane.b32.xlu0 %v2045, 112
        %v2314 = vpop.permute.xlu0 %2313
        %v2316 = vsel %vm2047, %v2314, 0
        %v2319 = vsel %vm2051, %v2312, 0
        %2321 = vmatprep.subr.bf16.mxu0 0
        %2322 = vmatpush1.bf16.msra.mxu0 0
        %2323 = vmatprep.subr.bf16.mxu0 0
        %2324 = vmatpush1.bf16.msra.mxu0 0
        %2325 = vmatprep.subr.bf16.mxu0 0
        %2326 = vmatpush1.bf16.msra.mxu0 0
        %2327 = vmatprep.subr.bf16.mxu0 0
        %2328 = vmatpush1.bf16.msra.mxu0 0
        %2329 = vmatprep.subr.bf16.mxu0 0
        %2330 = vmatpush1.bf16.msra.mxu0 0
        %2331 = vmatprep.subr.bf16.mxu0 0
        %2332 = vmatpush1.bf16.msra.mxu0 0
        %2333 = vmatprep.subr.bf16.mxu0 0
        %2334 = vmatpush1.bf16.msra.mxu0 0
        %2335 = vmatprep.subr.bf16.mxu0 0
        %2336 = vmatpush1.bf16.msra.mxu0 %v2319
        %2337 = vmatprep.subr.bf16.mxu0 0
        %2338 = vmatpush2.bf16.msra.mxu0 0
        %2339 = vmatprep.subr.bf16.mxu0 0
        %2340 = vmatpush2.bf16.msra.mxu0 0
        %2341 = vmatprep.subr.bf16.mxu0 0
        %2342 = vmatpush2.bf16.msra.mxu0 0
        %2343 = vmatprep.subr.bf16.mxu0 0
        %2344 = vmatpush2.bf16.msra.mxu0 0
        %2345 = vmatprep.subr.bf16.mxu0 0
        %2346 = vmatpush2.bf16.msra.mxu0 0
        %2347 = vmatprep.subr.bf16.mxu0 0
        %2348 = vmatpush2.bf16.msra.mxu0 0
        %2349 = vmatprep.subr.bf16.mxu0 0
        %2350 = vmatpush2.bf16.msra.mxu0 0
        %2351 = vmatprep.subr.bf16.mxu0 0
        %2352 = vmatpush2.bf16.msra.mxu0 0
        %2353 = vmatprep.mubr.bf16.mxu0 0
        %2354 = vmatmul.mubr.bf16.gmra.mxu0 %v2316
        %v2355 = vpop.f32.mrf.mxu0
        %v2356 = vadd.f32 %v2044, %v2355
        %v2357 = vpop.f32.mrf.mxu0
        %v2358 = vpop.f32.mrf.mxu0
        %v2359 = vpop.f32.mrf.mxu0
        %2360 = vdwg.mxu0
        %s2361 = scalar_lea.vmem [#allocation4], 16
        %v2362 = vld [vmem:[%s2361] sm:$0xff]
        %v2363 = vsel %vm2096, %v2356, -inf
        %2364 = vmax.xlane.f32.xlu0 %v2363
        %v2365 = vpop.xlane.xlu0 %2364
        %v2366 = vmax.f32 %v2362, %v2365
        %v2367 = vsub.f32 %v2362, %v2366
        %v2368 = vmul.f32 %v2367, 1.442695
        %v2369 = vpow.pop %v2368
        %2371 = vset.pattern.permute.xlu0 0
        %2372 = vperm.xlu0 %2371, %v2366
        %v2373 = vpop.permute.xlu0 %2372
        %v2375 = vsub.f32 %v2356, %v2373
        %v2376 = vmul.f32 %v2375, 1.442695
        %v2377 = vpow.pop %v2376
        %s2378 = scalar_lea.vmem [#allocation5], 16
        %v2379 = vld [vmem:[%s2378] sm:$0xff]
        %v2380 = vmul.f32 %v2369, %v2379
        %v2381 = vsel %vm2096, %v2377, 0.0
        %2382 = vadd.xlane.f32.xlu0 %v2381
        %v2383 = vpop.xlane.xlu0 %2382
        %v2384 = vadd.f32 %v2380, %v2383
        %2385 = vst.msk [vmem:[%s2378] sm:$0xff] %vm2118, %v2384
        %s2386 = scalar_lea.vmem [#allocation6], 16
        %v2387 = vld [vmem:[%s2386] sm:$0xff]
        %2389 = vset.pattern.permute.xlu0 0
        %2390 = vperm.xlu0 %2389, %v2369
        %v2391 = vpop.permute.xlu0 %2390
        %v2393 = vmul.f32 %v2391, %v2387
        %v2394 = vpack.c.bf16 %v2377, %v2377
        %v2395 = vpack.c.bf16 %v2037, %v2037
        %v2397 = vsel %vm2096, %v2394, 0
        %v2400 = vsel %vm2096, %v2395, 0
        %2402 = vmatprep.subr.bf16.mxu0 0
        %2403 = vmatpush1.bf16.xpose.msra.mxu0 0
        %2404 = vmatprep.subr.bf16.mxu0 0
        %2405 = vmatpush1.bf16.xpose.msra.mxu0 0
        %2406 = vmatprep.subr.bf16.mxu0 0
        %2407 = vmatpush1.bf16.xpose.msra.mxu0 0
        %2408 = vmatprep.subr.bf16.mxu0 0
        %2409 = vmatpush1.bf16.xpose.msra.mxu0 0
        %2410 = vmatprep.subr.bf16.mxu0 0
        %2411 = vmatpush1.bf16.xpose.msra.mxu0 0
        %2412 = vmatprep.subr.bf16.mxu0 0
        %2413 = vmatpush1.bf16.xpose.msra.mxu0 0
        %2414 = vmatprep.subr.bf16.mxu0 0
        %2415 = vmatpush1.bf16.xpose.msra.mxu0 0
        %2416 = vmatprep.subr.bf16.mxu0 0
        %2417 = vmatpush1.bf16.xpose.msra.mxu0 %v2400
        %2418 = vmatprep.subr.bf16.mxu0 0
        %2419 = vmatpush2.bf16.xpose.msra.mxu0 0
        %2420 = vmatprep.subr.bf16.mxu0 0
        %2421 = vmatpush2.bf16.xpose.msra.mxu0 0
        %2422 = vmatprep.subr.bf16.mxu0 0
        %2423 = vmatpush2.bf16.xpose.msra.mxu0 0
        %2424 = vmatprep.subr.bf16.mxu0 0
        %2425 = vmatpush2.bf16.xpose.msra.mxu0 0
        %2426 = vmatprep.subr.bf16.mxu0 0
        %2427 = vmatpush2.bf16.xpose.msra.mxu0 0
        %2428 = vmatprep.subr.bf16.mxu0 0
        %2429 = vmatpush2.bf16.xpose.msra.mxu0 0
        %2430 = vmatprep.subr.bf16.mxu0 0
        %2431 = vmatpush2.bf16.xpose.msra.mxu0 0
        %2432 = vmatprep.subr.bf16.mxu0 0
        %2433 = vmatpush2.bf16.xpose.msra.mxu0 0
        %2434 = vmatprep.mubr.bf16.mxu0 0
        %2435 = vmatmul.mubr.bf16.gmra.mxu0 %v2397
        %v2436 = vpop.f32.mrf.mxu0
        %v2437 = vadd.f32 0.0, %v2436
        %v2438 = vpop.f32.mrf.mxu0
        %v2439 = vpop.f32.mrf.mxu0
        %v2440 = vpop.f32.mrf.mxu0
        %2441 = vdwg.mxu0
        %v2442 = vadd.f32 %v2393, %v2437
        %2443 = vst.msk [vmem:[%s2386] sm:$0xff] %vm2047, %v2442
        %2444 = vst.msk [vmem:[%s2361] sm:$0xff] %vm2118, %v2366
        %v2445 = vpack.c.bf16 %v1947, %v1947
        %2446 = vrot.lane.b32.xlu0 %v2045, 104
        %v2447 = vpop.permute.xlu0 %2446
        %v2449 = vsel %vm2047, %v2447, 0
        %v2452 = vsel %vm2051, %v2445, 0
        %2454 = vmatprep.subr.bf16.mxu0 0
        %2455 = vmatpush1.bf16.msra.mxu0 0
        %2456 = vmatprep.subr.bf16.mxu0 0
        %2457 = vmatpush1.bf16.msra.mxu0 0
        %2458 = vmatprep.subr.bf16.mxu0 0
        %2459 = vmatpush1.bf16.msra.mxu0 0
        %2460 = vmatprep.subr.bf16.mxu0 0
        %2461 = vmatpush1.bf16.msra.mxu0 0
        %2462 = vmatprep.subr.bf16.mxu0 0
        %2463 = vmatpush1.bf16.msra.mxu0 0
        %2464 = vmatprep.subr.bf16.mxu0 0
        %2465 = vmatpush1.bf16.msra.mxu0 0
        %2466 = vmatprep.subr.bf16.mxu0 0
        %2467 = vmatpush1.bf16.msra.mxu0 0
        %2468 = vmatprep.subr.bf16.mxu0 0
        %2469 = vmatpush1.bf16.msra.mxu0 %v2452
        %2470 = vmatprep.subr.bf16.mxu0 0
        %2471 = vmatpush2.bf16.msra.mxu0 0
        %2472 = vmatprep.subr.bf16.mxu0 0
        %2473 = vmatpush2.bf16.msra.mxu0 0
        %2474 = vmatprep.subr.bf16.mxu0 0
        %2475 = vmatpush2.bf16.msra.mxu0 0
        %2476 = vmatprep.subr.bf16.mxu0 0
        %2477 = vmatpush2.bf16.msra.mxu0 0
        %2478 = vmatprep.subr.bf16.mxu0 0
        %2479 = vmatpush2.bf16.msra.mxu0 0
        %2480 = vmatprep.subr.bf16.mxu0 0
        %2481 = vmatpush2.bf16.msra.mxu0 0
        %2482 = vmatprep.subr.bf16.mxu0 0
        %2483 = vmatpush2.bf16.msra.mxu0 0
        %2484 = vmatprep.subr.bf16.mxu0 0
        %2485 = vmatpush2.bf16.msra.mxu0 0
        %2486 = vmatprep.mubr.bf16.mxu0 0
        %2487 = vmatmul.mubr.bf16.gmra.mxu0 %v2449
        %v2488 = vpop.f32.mrf.mxu0
        %v2489 = vadd.f32 %v2044, %v2488
        %v2490 = vpop.f32.mrf.mxu0
        %v2491 = vpop.f32.mrf.mxu0
        %v2492 = vpop.f32.mrf.mxu0
        %2493 = vdwg.mxu0
        %s2494 = scalar_lea.vmem [#allocation4], 24
        %v2495 = vld [vmem:[%s2494] sm:$0xff]
        %v2496 = vsel %vm2096, %v2489, -inf
        %2497 = vmax.xlane.f32.xlu0 %v2496
        %v2498 = vpop.xlane.xlu0 %2497
        %v2499 = vmax.f32 %v2495, %v2498
        %v2500 = vsub.f32 %v2495, %v2499
        %v2501 = vmul.f32 %v2500, 1.442695
        %v2502 = vpow.pop %v2501
        %2504 = vset.pattern.permute.xlu0 0
        %2505 = vperm.xlu0 %2504, %v2499
        %v2506 = vpop.permute.xlu0 %2505
        %v2508 = vsub.f32 %v2489, %v2506
        %v2509 = vmul.f32 %v2508, 1.442695
        %v2510 = vpow.pop %v2509
        %s2511 = scalar_lea.vmem [#allocation5], 24
        %v2512 = vld [vmem:[%s2511] sm:$0xff]
        %v2513 = vmul.f32 %v2502, %v2512
        %v2514 = vsel %vm2096, %v2510, 0.0
        %2515 = vadd.xlane.f32.xlu0 %v2514
        %v2516 = vpop.xlane.xlu0 %2515
        %v2517 = vadd.f32 %v2513, %v2516
        %2518 = vst.msk [vmem:[%s2511] sm:$0xff] %vm2118, %v2517
        %s2519 = scalar_lea.vmem [#allocation6], 24
        %v2520 = vld [vmem:[%s2519] sm:$0xff]
        %2522 = vset.pattern.permute.xlu0 0
        %2523 = vperm.xlu0 %2522, %v2502
        %v2524 = vpop.permute.xlu0 %2523
        %v2526 = vmul.f32 %v2524, %v2520
        %v2527 = vpack.c.bf16 %v2510, %v2510
        %v2528 = vpack.c.bf16 %v2040, %v2040
        %v2530 = vsel %vm2096, %v2527, 0
        %v2533 = vsel %vm2096, %v2528, 0
        %2535 = vmatprep.subr.bf16.mxu0 0
        %2536 = vmatpush1.bf16.xpose.msra.mxu0 0
        %2537 = vmatprep.subr.bf16.mxu0 0
        %2538 = vmatpush1.bf16.xpose.msra.mxu0 0
        %2539 = vmatprep.subr.bf16.mxu0 0
        %2540 = vmatpush1.bf16.xpose.msra.mxu0 0
        %2541 = vmatprep.subr.bf16.mxu0 0
        %2542 = vmatpush1.bf16.xpose.msra.mxu0 0
        %2543 = vmatprep.subr.bf16.mxu0 0
        %2544 = vmatpush1.bf16.xpose.msra.mxu0 0
        %2545 = vmatprep.subr.bf16.mxu0 0
        %2546 = vmatpush1.bf16.xpose.msra.mxu0 0
        %2547 = vmatprep.subr.bf16.mxu0 0
        %2548 = vmatpush1.bf16.xpose.msra.mxu0 0
        %2549 = vmatprep.subr.bf16.mxu0 0
        %2550 = vmatpush1.bf16.xpose.msra.mxu0 %v2533
        %2551 = vmatprep.subr.bf16.mxu0 0
        %2552 = vmatpush2.bf16.xpose.msra.mxu0 0
        %2553 = vmatprep.subr.bf16.mxu0 0
        %2554 = vmatpush2.bf16.xpose.msra.mxu0 0
        %2555 = vmatprep.subr.bf16.mxu0 0
        %2556 = vmatpush2.bf16.xpose.msra.mxu0 0
        %2557 = vmatprep.subr.bf16.mxu0 0
        %2558 = vmatpush2.bf16.xpose.msra.mxu0 0
        %2559 = vmatprep.subr.bf16.mxu0 0
        %2560 = vmatpush2.bf16.xpose.msra.mxu0 0
        %2561 = vmatprep.subr.bf16.mxu0 0
        %2562 = vmatpush2.bf16.xpose.msra.mxu0 0
        %2563 = vmatprep.subr.bf16.mxu0 0
        %2564 = vmatpush2.bf16.xpose.msra.mxu0 0
        %2565 = vmatprep.subr.bf16.mxu0 0
        %2566 = vmatpush2.bf16.xpose.msra.mxu0 0
        %2567 = vmatprep.mubr.bf16.mxu0 0
        %2568 = vmatmul.mubr.bf16.gmra.mxu0 %v2530
        %v2569 = vpop.f32.mrf.mxu0
        %v2570 = vadd.f32 0.0, %v2569
        %v2571 = vpop.f32.mrf.mxu0
        %v2572 = vpop.f32.mrf.mxu0
        %v2573 = vpop.f32.mrf.mxu0
        %2574 = vdwg.mxu0
        %v2575 = vadd.f32 %v2526, %v2570
        %2576 = vst.msk [vmem:[%s2519] sm:$0xff] %vm2047, %v2575
        %2577 = vst.msk [vmem:[%s2494] sm:$0xff] %vm2118, %v2499
        // Predicated region
        $region157: #{tpu_custom_call.1} parent=135 // pred_check
          %p2578 = pneg %p1000
        $region158: #{tpu_custom_call.1} parent=135 // pred_check_branch
          %2580 = sbr.rel (%p2578) target = $region160
        $region159: #{tpu_custom_call.1} parent=135 // pred_region
          %v2581 = vld [vmem:[#allocation5] sm:$0xff]
          %v2582 = vrcp.pop %v2581
          %v2583 = vld [vmem:[#allocation6] sm:$0xff]
          %2585 = vset.pattern.permute.xlu0 0
          %2586 = vperm.xlu0 %2585, %v2582
          %v2587 = vpop.permute.xlu0 %2586
          %v2589 = vmul.f32 %v2583, %v2587
          %v2590 = vld [vmem:[%s2245] sm:$0xff]
          %v2591 = vrcp.pop %v2590
          %v2592 = vld [vmem:[%s2253] sm:$0xff]
          %2594 = vset.pattern.permute.xlu0 0
          %2595 = vperm.xlu0 %2594, %v2591
          %v2596 = vpop.permute.xlu0 %2595
          %v2598 = vmul.f32 %v2592, %v2596
          %v2599 = vld [vmem:[%s2378] sm:$0xff]
          %v2600 = vrcp.pop %v2599
          %v2601 = vld [vmem:[%s2386] sm:$0xff]
          %2603 = vset.pattern.permute.xlu0 0
          %2604 = vperm.xlu0 %2603, %v2600
          %v2605 = vpop.permute.xlu0 %2604
          %v2607 = vmul.f32 %v2601, %v2605
          %v2608 = vld [vmem:[%s2511] sm:$0xff]
          %v2609 = vrcp.pop %v2608
          %v2610 = vld [vmem:[%s2519] sm:$0xff]
          %2612 = vset.pattern.permute.xlu0 0
          %2613 = vperm.xlu0 %2612, %v2609
          %v2614 = vpop.permute.xlu0 %2613
          %v2616 = vmul.f32 %v2610, %v2614
          %2618 = vrot.lane.b32.xlu0 %v2598, 8
          %v2619 = vpop.permute.xlu0 %2618
          %2622 = vrot.lane.b32.xlu0 %v2607, 16
          %v2623 = vpop.permute.xlu0 %2622
          %2626 = vrot.lane.b32.xlu0 %v2616, 24
          %v2627 = vpop.permute.xlu0 %2626
          %v2629 = vsel %vm2047, %v2589, %v2619
          %v2630 = vsel %vm2096, %v2629, %v2623
          %vm2631 = vcmask 195584
          %v2632 = vsel %vm2631, %v2630, %v2627
          %v2633 = vpack.c.bf16 %v2632, %v2632
          %v2634 = vld [vmem:[%s39] sm:$0xf]
          %v2635 = vld [vmem:[%s39 + $0x4] sm:$0xf]
          %v2636 = vld [vmem:[%s39 + $0x8] sm:$0xf]
          %v2637 = vld [vmem:[%s39 + $0xc] sm:$0xf]
          %v2638 = vld [vmem:[%s41] sm:$0x1]
          %v2640 = vlaneseq
          %v2641 = vshrl.u32 %v2640, 7
          %v2642 = vsub.s32 0, %v2641
          %v2643 = vrot.slane %v2638, %v2642
          %v2649 = vunpack.c.l.b16 %v2634
          %v2650 = vunpack.c.l.b16 %v2635
          %v2651 = vunpack.c.l.b16 %v2636
          %v2652 = vunpack.c.l.b16 %v2637
          %v2653 = vpack.c.b16 %v2650, %v2649
          %v2654 = vpack.c.b16 %v2652, %v2651
          %v2658 = vsel %vm1894, %v2633, 0
          %2660 = vmatprep.subr.bf16.mxu0 0
          %2661 = vmatpush1.bf16.msra.mxu0 0
          %2662 = vmatprep.subr.bf16.mxu0 0
          %2663 = vmatpush1.bf16.msra.mxu0 0
          %2664 = vmatprep.subr.bf16.mxu0 0
          %2665 = vmatpush1.bf16.msra.mxu0 0
          %2666 = vmatprep.subr.bf16.mxu0 0
          %2667 = vmatpush1.bf16.msra.mxu0 0
          %2668 = vmatprep.subr.bf16.mxu0 0
          %2669 = vmatpush1.bf16.msra.mxu0 0
          %2670 = vmatprep.subr.bf16.mxu0 0
          %2671 = vmatpush1.bf16.msra.mxu0 0
          %2672 = vmatprep.subr.bf16.mxu0 0
          %2673 = vmatpush1.bf16.msra.mxu0 %v2654
          %2674 = vmatprep.subr.bf16.mxu0 0
          %2675 = vmatpush1.bf16.msra.mxu0 %v2653
          %2676 = vmatprep.subr.bf16.mxu0 0
          %2677 = vmatpush2.bf16.msra.mxu0 0
          %2678 = vmatprep.subr.bf16.mxu0 0
          %2679 = vmatpush2.bf16.msra.mxu0 0
          %2680 = vmatprep.subr.bf16.mxu0 0
          %2681 = vmatpush2.bf16.msra.mxu0 0
          %2682 = vmatprep.subr.bf16.mxu0 0
          %2683 = vmatpush2.bf16.msra.mxu0 0
          %2684 = vmatprep.subr.bf16.mxu0 0
          %2685 = vmatpush2.bf16.msra.mxu0 0
          %2686 = vmatprep.subr.bf16.mxu0 0
          %2687 = vmatpush2.bf16.msra.mxu0 0
          %2688 = vmatprep.subr.bf16.mxu0 0
          %2689 = vmatpush2.bf16.msra.mxu0 0
          %2690 = vmatprep.subr.bf16.mxu0 0
          %2691 = vmatpush2.bf16.msra.mxu0 0
          %2692 = vmatprep.mubr.bf16.mxu0 0
          %2693 = vmatmul.mubr.bf16.gmra.mxu0 %v2658
          %v2694 = vpop.f32.mrf.mxu0
          %v2695 = vadd.f32 %v2643, %v2694
          %v2696 = vpop.f32.mrf.mxu0
          %v2697 = vpop.f32.mrf.mxu0
          %v2698 = vpop.f32.mrf.mxu0
          %2699 = vdwg.mxu0
          %v2700 = vld [vmem:[#allocation2] sm:$0xff]
          %v2701 = vadd.f32 %v2700, %v2695
          %v2702 = vld [vmem:[%s43] sm:$0x1]
          %v2703 = vld [vmem:[%s45] sm:$0x1]
          %v2704 = vsel %vm1894, %v2701, 0.0
          %2705 = vadd.xlane.f32.xlu0 %v2704
          %v2706 = vpop.xlane.xlu0 %2705
          %v2707 = vrcp.pop 32.0
          %v2708 = vmul.f32 %v2706, %v2707
          %v2709 = vsub.f32 %v2701, %v2708
          %v2710 = vmul.f32 %v2709, %v2709
          %v2711 = vsel %vm1894, %v2710, 0.0
          %2712 = vadd.xlane.f32.xlu0 %v2711
          %v2713 = vpop.xlane.xlu0 %2712
          %v2714 = vmul.f32 %v2713, %v2707
          %v2715 = vadd.f32 %v2714, 1e-05
          %v2716 = vrsqrt.pop %v2715
          %v2717 = vmul.f32 %v2709, %v2716
          %v2719 = vlaneseq
          %v2720 = vshrl.u32 %v2719, 7
          %v2721 = vsub.s32 0, %v2720
          %v2722 = vrot.slane %v2702, %v2721
          %v2724 = vmul.f32 %v2717, %v2722
          %v2726 = vlaneseq
          %v2727 = vshrl.u32 %v2726, 7
          %v2728 = vsub.s32 0, %v2727
          %v2729 = vrot.slane %v2703, %v2728
          %v2731 = vadd.f32 %v2724, %v2729
          %v2732 = vpack.c.bf16 %v2731, %v2731
          %v2733 = vld [vmem:[%s47] sm:$0xf]
          %v2734 = vld [vmem:[%s47 + $0x4] sm:$0xf]
          %v2735 = vld [vmem:[%s47 + $0x8] sm:$0xf]
          %v2736 = vld [vmem:[%s47 + $0xc] sm:$0xf]
          %v2737 = vld [vmem:[%s49] sm:$0x1]
          %v2739 = vlaneseq
          %v2740 = vshrl.u32 %v2739, 7
          %v2741 = vsub.s32 0, %v2740
          %v2742 = vrot.slane %v2737, %v2741
          %v2748 = vunpack.c.l.b16 %v2733
          %v2749 = vunpack.c.l.b16 %v2734
          %v2750 = vunpack.c.l.b16 %v2735
          %v2751 = vunpack.c.l.b16 %v2736
          %v2752 = vpack.c.b16 %v2749, %v2748
          %v2753 = vpack.c.b16 %v2751, %v2750
          %v2757 = vsel %vm1894, %v2732, 0
          %2759 = vmatprep.subr.bf16.mxu0 0
          %2760 = vmatpush1.bf16.msra.mxu0 0
          %2761 = vmatprep.subr.bf16.mxu0 0
          %2762 = vmatpush1.bf16.msra.mxu0 0
          %2763 = vmatprep.subr.bf16.mxu0 0
          %2764 = vmatpush1.bf16.msra.mxu0 0
          %2765 = vmatprep.subr.bf16.mxu0 0
          %2766 = vmatpush1.bf16.msra.mxu0 0
          %2767 = vmatprep.subr.bf16.mxu0 0
          %2768 = vmatpush1.bf16.msra.mxu0 0
          %2769 = vmatprep.subr.bf16.mxu0 0
          %2770 = vmatpush1.bf16.msra.mxu0 0
          %2771 = vmatprep.subr.bf16.mxu0 0
          %2772 = vmatpush1.bf16.msra.mxu0 %v2753
          %2773 = vmatprep.subr.bf16.mxu0 0
          %2774 = vmatpush1.bf16.msra.mxu0 %v2752
          %2775 = vmatprep.subr.bf16.mxu0 0
          %2776 = vmatpush2.bf16.msra.mxu0 0
          %2777 = vmatprep.subr.bf16.mxu0 0
          %2778 = vmatpush2.bf16.msra.mxu0 0
          %2779 = vmatprep.subr.bf16.mxu0 0
          %2780 = vmatpush2.bf16.msra.mxu0 0
          %2781 = vmatprep.subr.bf16.mxu0 0
          %2782 = vmatpush2.bf16.msra.mxu0 0
          %2783 = vmatprep.subr.bf16.mxu0 0
          %2784 = vmatpush2.bf16.msra.mxu0 0
          %2785 = vmatprep.subr.bf16.mxu0 0
          %2786 = vmatpush2.bf16.msra.mxu0 0
          %2787 = vmatprep.subr.bf16.mxu0 0
          %2788 = vmatpush2.bf16.msra.mxu0 0
          %2789 = vmatprep.subr.bf16.mxu0 0
          %2790 = vmatpush2.bf16.msra.mxu0 0
          %2791 = vmatprep.mubr.bf16.mxu0 0
          %2792 = vmatmul.mubr.bf16.gmra.mxu0 %v2757
          %v2793 = vpop.f32.mrf.mxu0
          %v2794 = vadd.f32 %v2742, %v2793
          %v2795 = vpop.f32.mrf.mxu0
          %v2796 = vpop.f32.mrf.mxu0
          %v2797 = vpop.f32.mrf.mxu0
          %2798 = vdwg.mxu0
          %v2799 = vmax.f32 %v2794, 0.0
          %v2800 = vpack.c.bf16 %v2799, %v2799
          %v2801 = vld [vmem:[%s51] sm:$0xf]
          %v2802 = vld [vmem:[%s51 + $0x4] sm:$0xf]
          %v2803 = vld [vmem:[%s51 + $0x8] sm:$0xf]
          %v2804 = vld [vmem:[%s51 + $0xc] sm:$0xf]
          %v2805 = vld [vmem:[%s51 + $0x10] sm:$0xf]
          %v2806 = vld [vmem:[%s51 + $0x14] sm:$0xf]
          %v2807 = vld [vmem:[%s51 + $0x18] sm:$0xf]
          %v2808 = vld [vmem:[%s51 + $0x1c] sm:$0xf]
          %v2809 = vld [vmem:[%s53] sm:$0x1]
          %v2811 = vlaneseq
          %v2812 = vshrl.u32 %v2811, 7
          %v2813 = vsub.s32 0, %v2812
          %v2814 = vrot.slane %v2809, %v2813
          %v2824 = vunpack.c.l.b16 %v2801
          %v2825 = vunpack.c.l.b16 %v2802
          %v2826 = vunpack.c.l.b16 %v2803
          %v2827 = vunpack.c.l.b16 %v2804
          %v2828 = vunpack.c.l.b16 %v2805
          %v2829 = vunpack.c.l.b16 %v2806
          %v2830 = vunpack.c.l.b16 %v2807
          %v2831 = vunpack.c.l.b16 %v2808
          %v2832 = vpack.c.b16 %v2825, %v2824
          %v2833 = vpack.c.b16 %v2827, %v2826
          %v2834 = vpack.c.b16 %v2829, %v2828
          %v2835 = vpack.c.b16 %v2831, %v2830
          %vm2840 = vcmask 523264
          %v2842 = vsel %vm2840, %v2800, 0
          %2844 = vmatprep.subr.bf16.mxu0 0
          %2845 = vmatpush1.bf16.msra.mxu0 0
          %2846 = vmatprep.subr.bf16.mxu0 0
          %2847 = vmatpush1.bf16.msra.mxu0 0
          %2848 = vmatprep.subr.bf16.mxu0 0
          %2849 = vmatpush1.bf16.msra.mxu0 0
          %2850 = vmatprep.subr.bf16.mxu0 0
          %2851 = vmatpush1.bf16.msra.mxu0 0
          %2852 = vmatprep.subr.bf16.mxu0 0
          %2853 = vmatpush1.bf16.msra.mxu0 %v2835
          %2854 = vmatprep.subr.bf16.mxu0 0
          %2855 = vmatpush1.bf16.msra.mxu0 %v2834
          %2856 = vmatprep.subr.bf16.mxu0 0
          %2857 = vmatpush1.bf16.msra.mxu0 %v2833
          %2858 = vmatprep.subr.bf16.mxu0 0
          %2859 = vmatpush1.bf16.msra.mxu0 %v2832
          %2860 = vmatprep.subr.bf16.mxu0 0
          %2861 = vmatpush2.bf16.msra.mxu0 0
          %2862 = vmatprep.subr.bf16.mxu0 0
          %2863 = vmatpush2.bf16.msra.mxu0 0
          %2864 = vmatprep.subr.bf16.mxu0 0
          %2865 = vmatpush2.bf16.msra.mxu0 0
          %2866 = vmatprep.subr.bf16.mxu0 0
          %2867 = vmatpush2.bf16.msra.mxu0 0
          %2868 = vmatprep.subr.bf16.mxu0 0
          %2869 = vmatpush2.bf16.msra.mxu0 0
          %2870 = vmatprep.subr.bf16.mxu0 0
          %2871 = vmatpush2.bf16.msra.mxu0 0
          %2872 = vmatprep.subr.bf16.mxu0 0
          %2873 = vmatpush2.bf16.msra.mxu0 0
          %2874 = vmatprep.subr.bf16.mxu0 0
          %2875 = vmatpush2.bf16.msra.mxu0 0
          %2876 = vmatprep.mubr.bf16.mxu0 0
          %2877 = vmatmul.mubr.bf16.gmra.mxu0 %v2842
          %v2878 = vpop.f32.mrf.mxu0
          %v2879 = vadd.f32 %v2814, %v2878
          %v2880 = vpop.f32.mrf.mxu0
          %v2881 = vpop.f32.mrf.mxu0
          %v2882 = vpop.f32.mrf.mxu0
          %2883 = vdwg.mxu0
          %v2884 = vadd.f32 %v2731, %v2879
          %v2885 = vld [vmem:[%s55] sm:$0x1]
          %v2886 = vld [vmem:[%s57] sm:$0x1]
          %v2887 = vsel %vm1894, %v2884, 0.0
          %2888 = vadd.xlane.f32.xlu0 %v2887
          %v2889 = vpop.xlane.xlu0 %2888
          %v2890 = vmul.f32 %v2889, %v2707
          %v2891 = vsub.f32 %v2884, %v2890
          %v2892 = vmul.f32 %v2891, %v2891
          %v2893 = vsel %vm1894, %v2892, 0.0
          %2894 = vadd.xlane.f32.xlu0 %v2893
          %v2895 = vpop.xlane.xlu0 %2894
          %v2896 = vmul.f32 %v2895, %v2707
          %v2897 = vadd.f32 %v2896, 1e-05
          %v2898 = vrsqrt.pop %v2897
          %v2899 = vmul.f32 %v2891, %v2898
          %v2901 = vlaneseq
          %v2902 = vshrl.u32 %v2901, 7
          %v2903 = vsub.s32 0, %v2902
          %v2904 = vrot.slane %v2885, %v2903
          %v2906 = vmul.f32 %v2899, %v2904
          %v2908 = vlaneseq
          %v2909 = vshrl.u32 %v2908, 7
          %v2910 = vsub.s32 0, %v2909
          %v2911 = vrot.slane %v2886, %v2910
          %v2913 = vadd.f32 %v2906, %v2911
          %2914 = vst.msk [vmem:[%s986] sm:$0xff] %vm1894, %v2913
        $region160: #{tpu_custom_call.1} parent=135 // pred_fallthru
          _
        %s2915 = sand.u32 %s722, 1
        %s2916 = scalar_lea.sflag [#allocation9], %s2915
        %s2917 = sand.u32 %s722, 1
        %s2918 = smul.addr %s2917, 8
        %s2919 = scalar_lea.vmem [#allocation15], %s2918
        // Predicated region
        $region161: #{tpu_custom_call.1} parent=135 // pred_check
          %p2920 = pneg %p732
        $region162: #{tpu_custom_call.1} parent=135 // pred_check_branch
          %2922 = sbr.rel (%p2920) target = $region164
        $region163: #{tpu_custom_call.1} parent=135 // pred_region
          %s2924 = ssub.s32 128, 128
          %2925 = vsyncadd %s2916, %s2924
          %s2926 = smul.addr %s80, 128
          %s2927 = scalar_lea.hbm %s59, %s2926
          %s2929 = sshll.u32 %s2919, 4
          %s2930 = int_to_ptr.vmem [resolvable:$true] %s2929
          %2932 = dma.vmem_to_hbm [thread:$0]  %s2930, 128, %s2927, %s2916
        $region164: #{tpu_custom_call.1} parent=135 // pred_fallthru
          _
      $region136: #{tpu_custom_call.1} parent=5 // pred_fallthru
        _
      %p2933 = scmp.le.s32.totalorder 2, %s71
      // Predicated region
      $region165: #{tpu_custom_call.1} parent=5 // pred_check
        %p2934 = pneg %p2933
      $region166: #{tpu_custom_call.1} parent=5 // pred_check_branch
        %2936 = sbr.rel (%p2934) target = $region168
      $region167: #{tpu_custom_call.1} parent=5 // pred_region
        %s2937 = ssub.s32 %s71, 2
        // Predicated region
        $region169: #{tpu_custom_call.1} parent=167 // pred_check
          %p2938 = pneg %p738
        $region170: #{tpu_custom_call.1} parent=167 // pred_check_branch
          %2940 = sbr.rel (%p2938) target = $region172
        $region171: #{tpu_custom_call.1} parent=167 // pred_region
          %s2941 = sand.u32 %s723, 1
          %s2942 = scalar_lea.sflag [#allocation9], %s2941
          %s2943 = sand.u32 %s723, 1
          %s2944 = smul.addr %s2943, 8
          %s2945 = scalar_lea.vmem [#allocation15], %s2944
          %2946 = dma.done %s2942, 128
        $region172: #{tpu_custom_call.1} parent=167 // pred_fallthru
          _
      $region168: #{tpu_custom_call.1} parent=5 // pred_fallthru
        _
    $region6: #{tpu_custom_call.1} parent=1 // loop_footer
      %s75 = sadd.s32 1, %s71
    $region7: #{tpu_custom_call.1} parent=1 // loop_footer_branch
      %70 = sbr.rel target = $region3
    $region8: #{tpu_custom_call.1} parent=1 // loop_exit
      _
    %2947 = vsyncpa [#allocation8], 1
    %s2948 = scalar_lea.sflag [#allocation8], 1
    %2949 = vsyncpa %s2948, 1
    %2950 = vsyncpa [#allocation11], 1
    %2951 = vsyncpa [#allocation14], 1
    %2952 = vsyncpa [#allocation9], 1
    %s2953 = scalar_lea.sflag [#allocation9], 1
    %2954 = vsyncpa %s2953, 1

</llo_original>
